<compile_context>
chip_gen: v7x
topology: tpu7x:2x2x1
jax: 0.10.0
libtpu: 0.0.40
codegen_flags: <defaults>
</compile_context>

<pallas_src>
import jax
import jax.numpy as jnp
from jax.experimental import pallas as pl
from jax.experimental.pallas import tpu as pltpu


# ---------------------------------------------------------------------------
# helpers
# ---------------------------------------------------------------------------
def _round_up(n, m):
    return ((n + m - 1) // m) * m


def _pad_rows(x, m_pad):
    m = x.shape[0]
    return x if m == m_pad else jnp.pad(x, ((0, m_pad - m), (0, 0)))


def _pick_tile(m, pref):
    """Row tile: multiple of 16 (bf16 sublane packing), >= 2 grid steps when
    the problem allows (v7x has 2 TensorCores), minimal whole-tile padding."""
    if m <= 16:
        return 16
    steps = max(2, -(-m // pref))          # ceil-div, at least 2
    return _round_up(-(-m // steps), 16)


# ---------------------------------------------------------------------------
# Kernel A: decoder (Conv1x1+ReLU+Dropout(id)+Conv1x1+ReLU) fused with the
#           decoder slice of the ConvTranspose weight.
# ---------------------------------------------------------------------------
def _decoder_dbranch_kernel(x_ref, w1_ref, b1_ref, w2_ref, b2_ref, wd_ref, o_ref):
    nc4 = o_ref.shape[1]
    h = jnp.dot(x_ref[...], w1_ref[...], preferred_element_type=jnp.float32)
    h = jnp.maximum(h + b1_ref[...], 0.0)
    # Dropout(0.8): identity in eval mode.
    d = jnp.dot(h.astype(jnp.bfloat16), w2_ref[...],
                preferred_element_type=jnp.float32)
    d = jnp.maximum(d + b2_ref[...], 0.0)
    yd = jnp.dot(d.astype(jnp.bfloat16), wd_ref[...],
                 preferred_element_type=jnp.float32)
    o_ref[...] = yd[:, :nc4].astype(o_ref.dtype)


def decoder_and_dbranch(x_flat, w1, b1, w2, b2, wd_pad, nc4, *, tile_m=512):
    M, C = x_flat.shape
    NP = wd_pad.shape[1]
    tm = _pick_tile(M, tile_m)
    Mp = _round_up(M, tm)
    xp = _pad_rows(x_flat, Mp)
    out = pl.pallas_call(
        _decoder_dbranch_kernel,
        out_shape=jax.ShapeDtypeStruct((Mp, nc4), jnp.bfloat16),
        grid=(Mp // tm,),
        in_specs=[
            pl.BlockSpec((tm, C), lambda i: (i, 0)),
            pl.BlockSpec((C, C), lambda i: (0, 0)),    # w1 (resident)
            pl.BlockSpec((1, C), lambda i: (0, 0)),    # b1
            pl.BlockSpec((C, C), lambda i: (0, 0)),    # w2 (resident)
            pl.BlockSpec((1, C), lambda i: (0, 0)),    # b2
            pl.BlockSpec((C, NP), lambda i: (0, 0)),   # convT decoder slice
        ],
        out_specs=pl.BlockSpec((tm, nc4), lambda i: (i, 0)),
        compiler_params=pltpu.CompilerParams(dimension_semantics=("parallel",)),
    )(xp, w1, b1, w2, b2, wd_pad)
    return out[:M]


# ---------------------------------------------------------------------------
# Kernel B: pool_4 branch partial matmul (narrow bf16 output).
# ---------------------------------------------------------------------------
def _branch_matmul_kernel(x_ref, w_ref, o_ref):
    nc4 = o_ref.shape[1]
    y = jnp.dot(x_ref[...], w_ref[...], preferred_element_type=jnp.float32)
    o_ref[...] = y[:, :nc4].astype(o_ref.dtype)


def branch_matmul(x_flat, w_pad, nc4, *, tile_m=2048):
    M, K = x_flat.shape
    NP = w_pad.shape[1]
    tm = _pick_tile(M, tile_m)
    Mp = _round_up(M, tm)
    xp = _pad_rows(x_flat, Mp)
    out = pl.pallas_call(
        _branch_matmul_kernel,
        out_shape=jax.ShapeDtypeStruct((Mp, nc4), jnp.bfloat16),
        grid=(Mp // tm,),
        in_specs=[
            pl.BlockSpec((tm, K), lambda i: (i, 0)),
            pl.BlockSpec((K, NP), lambda i: (0, 0)),   # convT pool_4 slice
        ],
        out_specs=pl.BlockSpec((tm, nc4), lambda i: (i, 0)),
        compiler_params=pltpu.CompilerParams(dimension_semantics=("parallel",)),
    )(xp, w_pad)
    return out[:M]


# ---------------------------------------------------------------------------
# Kernel C: pool_3 branch partial matmul FUSED with the upsample-add combine
#           of the decoder / pool_4 partials and the ConvTranspose bias.
# ---------------------------------------------------------------------------
def _p3_combine_kernel(p3_ref, yd_ref, yp4_ref, w_ref, b_ref, o_ref):
    # p3_ref : (th4*W4, 256) bf16      pool_3 pixels at native 4Hx4W resolution
    # yd_ref : (1, th4//4, W4, nc4)    decoder partial (W-axis pre-upsampled)
    # yp4_ref: (1, th4//2, W4, nc4)    pool_4 partial  (W-axis pre-upsampled)
    # w_ref  : (256, NP) bf16          convT pool_3 slice (lane padded)
    # b_ref  : (1, nc4) f32            convT bias (repeated per 2x2 position)
    # o_ref  : (1, th4, W4, nc4) f32   combined pre-scatter result
    _, th4, W4, nc4 = o_ref.shape
    td = yd_ref.shape[1]
    tp = yp4_ref.shape[1]

    acc = jnp.dot(p3_ref[...], w_ref[...], preferred_element_type=jnp.float32)
    y = acc[:, :nc4].reshape(th4, W4, nc4)

    # Nearest row (H-axis) upsample of the coarse partials: x4 for the decoder,
    # x2 for pool_4.  Pure leading-dim broadcast + reshape (layout free).
    yd = yd_ref[0].astype(jnp.float32)                       # (td, W4, nc4)
    yd_up = jnp.broadcast_to(yd[:, None, :, :],
                             (td, 4, W4, nc4)).reshape(th4, W4, nc4)
    yp4 = yp4_ref[0].astype(jnp.float32)                     # (tp, W4, nc4)
    yp4_up = jnp.broadcast_to(yp4[:, None, :, :],
                              (tp, 2, W4, nc4)).reshape(th4, W4, nc4)

    o_ref[0] = y + yd_up + yp4_up + b_ref[...]


def p3_combine(p3_flat, yd_w, yp4_w, w_pad, bt, H4, W4, *, target_rows=2048):
    B = yd_w.shape[0]
    K = p3_flat.shape[1]
    NP = w_pad.shape[1]
    nc4 = bt.shape[1]
    # th4: multiple of 4 that divides H4, tile of roughly target_rows pixels.
    th4 = 4
    cand = 4
    while cand <= H4:
        if H4 % cand == 0 and cand * W4 <= max(target_rows, 4 * W4):
            th4 = cand
        cand += 4
    nblk = H4 // th4
    return pl.pallas_call(
        _p3_combine_kernel,
        out_shape=jax.ShapeDtypeStruct((B, H4, W4, nc4), jnp.float32),
        grid=(B, nblk),
        in_specs=[
            pl.BlockSpec((th4 * W4, K), lambda b, i: (b * nblk + i, 0)),
            pl.BlockSpec((1, th4 // 4, W4, nc4), lambda b, i: (b, i, 0, 0)),
            pl.BlockSpec((1, th4 // 2, W4, nc4), lambda b, i: (b, i, 0, 0)),
            pl.BlockSpec((K, NP), lambda b, i: (0, 0)),     # convT pool_3 slice
            pl.BlockSpec((1, nc4), lambda b, i: (0, 0)),    # convT bias
        ],
        out_specs=pl.BlockSpec((1, th4, W4, nc4), lambda b, i: (b, i, 0, 0)),
        compiler_params=pltpu.CompilerParams(
            dimension_semantics=("parallel", "parallel")),
    )(p3_flat, yd_w, yp4_w, w_pad, bt)


# ---------------------------------------------------------------------------
# Wrapper (layout transposes, K-split combine, final 2x2 scatter + x4 bcast)
# ---------------------------------------------------------------------------
def column_decoder_forward(x, pools, params, num_classes):
    pool_3, pool_4 = pools
    B, C, H, W = x.shape
    assert C == 512
    H2, W2, H4, W4 = 2 * H, 2 * W, 4 * H, 4 * W
    nc4 = num_classes * 4
    NP = max(128, _round_up(nc4, 128))          # lane-padded rhs width

    # PyTorch-layout weights -> matmul layout.
    w1 = jnp.transpose(params["conv1_w"].reshape(512, 512)).astype(jnp.bfloat16)
    w2 = jnp.transpose(params["conv2_w"].reshape(512, 512)).astype(jnp.bfloat16)
    b1 = params["conv1_b"].astype(jnp.float32).reshape(1, 512)
    b2 = params["conv2_b"].astype(jnp.float32).reshape(1, 512)
    # ConvTranspose2d weight (in=1280, out=nc, 2, 2) -> (1280, nc*4), lane-pad,
    # split along K to the concat order [decoder(512), pool_4(512), pool_3(256)].
    wt = params["convt_w"].reshape(1280, nc4).astype(jnp.float32)
    wt_pad = jnp.pad(wt, ((0, 0), (0, NP - nc4))).astype(jnp.bfloat16)
    wd_pad, wp4_pad, wp3_pad = wt_pad[:512], wt_pad[512:1024], wt_pad[1024:1280]
    bt = jnp.repeat(params["convt_b"].astype(jnp.float32), 4).reshape(1, nc4)

    # Channels-last, pixel-flattened activations (bf16 feeds the MXU).
    xn = jnp.transpose(x, (0, 2, 3, 1)).astype(jnp.bfloat16).reshape(B * H * W, 512)
    p4n = jnp.transpose(pool_4, (0, 2, 3, 1)).astype(jnp.bfloat16).reshape(B * H2 * W2, 512)
    p3n = jnp.transpose(pool_3, (0, 2, 3, 1)).astype(jnp.bfloat16).reshape(B * H4 * W4, 256)

    # Partial ConvTranspose matmuls at each source's native resolution
    # (nearest upsampling commutes with the per-pixel linear map).
    yd = decoder_and_dbranch(xn, w1, b1, w2, b2, wd_pad, nc4).reshape(B, H, W, nc4)
    yp4 = branch_matmul(p4n, wp4_pad, nc4).reshape(B, H2, W2, nc4)

    # Tiny column (W-axis) upsample of the narrow bf16 partials in JAX; the
    # row (H-axis) upsample + adds + bias are fused into the pool_3 kernel.
    yd_w = jnp.repeat(yd, 4, axis=2)       # (B, H,  W4, nc4)
    yp4_w = jnp.repeat(yp4, 2, axis=2)     # (B, 2H, W4, nc4)

    y4 = p3_combine(p3n, yd_w, yp4_w, wp3_pad, bt, H4, W4)   # (B,H4,W4,nc4) f32

    # Final: 2x2 ConvTranspose kernel scatter + x4 nearest broadcast:
    # out[b, c, 8*i4 + 2*r + di, 8*j4 + 2*s + dj] = y4[b, i4, j4, c*4 + 2*di + dj]
    y = y4.reshape(B, H4, W4, num_classes, 2, 2)
    y = jnp.transpose(y, (0, 3, 1, 4, 2, 5))                  # (B,nc,H4,di,W4,dj)
    y = jnp.broadcast_to(y[:, :, :, None, :, :, None, :],
                         (B, num_classes, H4, 4, 2, W4, 4, 2))
    return y.reshape(B, num_classes, 8 * H4, 8 * W4)          # (B, nc, 32H, 32W)


# ---------------------------------------------------------------------------
# Pure-JAX f32 reference following the literal PyTorch dataflow.
# ---------------------------------------------------------------------------
def _nearest_up2(x_nhwc):
    return jnp.repeat(jnp.repeat(x_nhwc, 2, axis=1), 2, axis=2)


def _reference(x, pools, params, num_classes):
    pool_3, pool_4 = pools
    B, _, H, W = x.shape
    w1 = jnp.transpose(params["conv1_w"].reshape(512, 512)).astype(jnp.float32)
    w2 = jnp.transpose(params["conv2_w"].reshape(512, 512)).astype(jnp.float32)
    b1 = params["conv1_b"].astype(jnp.float32)
    b2 = params["conv2_b"].astype(jnp.float32)
    wt = params["convt_w"].reshape(1280, num_classes * 4).astype(jnp.float32)
    bt = jnp.repeat(params["convt_b"].astype(jnp.float32), 4)

    xn = jnp.transpose(x, (0, 2, 3, 1)).astype(jnp.float32)
    p4 = jnp.transpose(pool_4, (0, 2, 3, 1)).astype(jnp.float32)
    p3 = jnp.transpose(pool_3, (0, 2, 3, 1)).astype(jnp.float32)

    h = jnp.maximum(xn @ w1 + b1, 0.0)
    d = jnp.maximum(h @ w2 + b2, 0.0)
    u = _nearest_up2(d)
    cat1 = jnp.concatenate([u, p4], axis=-1)
    u2 = _nearest_up2(cat1)
    cat2 = jnp.concatenate([u2, p3], axis=-1)
    u3 = _nearest_up2(_nearest_up2(cat2))
    Hi, Wi = 16 * H, 16 * W
    y = u3.reshape(B * Hi * Wi, 1280) @ wt + bt
    y = y.reshape(B, Hi, Wi, num_classes, 2, 2)
    return jnp.transpose(y, (0, 3, 1, 4, 2, 5)).reshape(B, num_classes, 2 * Hi, 2 * Wi)


if __name__ == "__main__":
    num_classes = 2
    key = jax.random.PRNGKey(0)
    k = jax.random.split(key, 9)

    # Deterministic synthetic parameters in PyTorch layouts.
    params = {
        "conv1_w": jax.random.normal(k[0], (512, 512, 1, 1), jnp.float32) * 0.02,
        "conv1_b": jax.random.normal(k[1], (512,), jnp.float32) * 0.02,
        "conv2_w": jax.random.normal(k[2], (512, 512, 1, 1), jnp.float32) * 0.02,
        "conv2_b": jax.random.normal(k[3], (512,), jnp.float32) * 0.02,
        "convt_w": jax.random.normal(k[4], (1280, num_classes, 2, 2), jnp.float32) * 0.02,
        "convt_b": jax.random.normal(k[5], (num_classes,), jnp.float32) * 0.02,
    }

    # Small inputs: x (B,512,H,W), pool_4 (B,512,2H,2W), pool_3 (B,256,4H,4W)
    B, H, W = 2, 4, 4
    x = jax.random.normal(k[6], (B, 512, H, W), jnp.float32)
    pool_4 = jax.random.normal(k[7], (B, 512, 2 * H, 2 * W), jnp.float32)
    pool_3 = jax.random.normal(k[8], (B, 256, 4 * H, 4 * W), jnp.float32)
    pools = (pool_3, pool_4)

    fwd = jax.jit(column_decoder_forward, static_argnums=(3,))
    out = jax.block_until_ready(fwd(x, pools, params, num_classes))
    assert out.shape == (B, num_classes, 32 * H, 32 * W), out.shape

    ref = jax.block_until_ready(_reference(x, pools, params, num_classes))
    err = float(jnp.max(jnp.abs(out - ref)))
    scale = float(jnp.max(jnp.abs(ref))) + 1e-6
    # bf16 matmuls / bf16 partial stores vs f32 reference: relative check.
    assert err <= 5e-2 * scale + 1e-3, (err, scale)

    print("KERNEL_OK")
</pallas_src>

<mosaic_0001>
module attributes {stable_mosaic.version = 11 : i64} {
  func.func @_branch_matmul_kernel(%arg0: i32, %arg1: memref<64x512xbf16, #tpu.memory_space<vmem>>, %arg2: memref<512x128xbf16, #tpu.memory_space<vmem>>, %arg3: memref<64x8xbf16, #tpu.memory_space<vmem>>) attributes {dimension_semantics = [#tpu.dimension_semantics<parallel>], iteration_bounds = array<i64: 2>, scalar_prefetch = 0 : i64, scratch_operands = 0 : i64, tpu.core_type = #tpu.core_type<tc>, window_params = [{transform_indices = @transform_0, window_bounds = array<i64: 64, 512>}, {pipeline_mode = #tpu.pipeline_mode<synchronous>, transform_indices = @transform_1, window_bounds = array<i64: 512, 128>}, {transform_indices = @transform_2, window_bounds = array<i64: 64, 8>}]} {
    %c0 = arith.constant 0 : index
    %c0_0 = arith.constant 0 : index
    %0 = vector.load %arg1[%c0, %c0_0] : memref<64x512xbf16, #tpu.memory_space<vmem>>, vector<64x512xbf16>
    %c0_1 = arith.constant 0 : index
    %c0_2 = arith.constant 0 : index
    %1 = vector.load %arg2[%c0_1, %c0_2] : memref<512x128xbf16, #tpu.memory_space<vmem>>, vector<512x128xbf16>
    %cst = arith.constant dense<0.000000e+00> : vector<64x128xf32>
    %2 = tpu.matmul %0, %1, %cst {dimension_numbers = #tpu.dot_dimension_numbers<[1], [0], [0], [1], [0, 0, 1, 1], [], []>} : vector<64x512xbf16>, vector<512x128xbf16>, vector<64x128xf32> -> vector<64x128xf32>
    %3 = vector.extract_strided_slice %2 {offsets = [0, 0], sizes = [64, 8], strides = [1, 1]} : vector<64x128xf32> to vector<64x8xf32>
    %4 = arith.truncf %3 : vector<64x8xf32> to vector<64x8xbf16>
    %c0_3 = arith.constant 0 : index
    %c0_4 = arith.constant 0 : index
    %5 = vector.load %arg3[%c0_3, %c0_4] : memref<64x8xbf16, #tpu.memory_space<vmem>>, vector<64x8xbf16>
    tpu.vector_store %arg3[%c0_3, %c0_4], %4 {strides = array<i32>} : memref<64x8xbf16, #tpu.memory_space<vmem>>, vector<64x8xbf16>,
    return
  }
  func.func @transform_0(%arg0: i32) -> (i32, i32) {
    %c0_i32 = arith.constant 0 : i32
    %c0_i32_0 = arith.constant 0 : i32
    return %arg0, %c0_i32 : i32, i32
  }
  func.func @transform_1(%arg0: i32) -> (i32, i32) {
    %c0_i32 = arith.constant 0 : i32
    %c0_i32_0 = arith.constant 0 : i32
    %c0_i32_1 = arith.constant 0 : i32
    return %c0_i32, %c0_i32_0 : i32, i32
  }
  func.func @transform_2(%arg0: i32) -> (i32, i32) {
    %c0_i32 = arith.constant 0 : i32
    %c0_i32_0 = arith.constant 0 : i32
    return %arg0, %c0_i32 : i32, i32
  }
}

module attributes {stable_mosaic.version = 11 : i64} {
  func.func @_decoder_dbranch_kernel(%arg0: i32, %arg1: memref<16x512xbf16, #tpu.memory_space<vmem>>, %arg2: memref<512x512xbf16, #tpu.memory_space<vmem>>, %arg3: memref<1x512xf32, #tpu.memory_space<vmem>>, %arg4: memref<512x512xbf16, #tpu.memory_space<vmem>>, %arg5: memref<1x512xf32, #tpu.memory_space<vmem>>, %arg6: memref<512x128xbf16, #tpu.memory_space<vmem>>, %arg7: memref<16x8xbf16, #tpu.memory_space<vmem>>) attributes {dimension_semantics = [#tpu.dimension_semantics<parallel>], iteration_bounds = array<i64: 2>, scalar_prefetch = 0 : i64, scratch_operands = 0 : i64, tpu.core_type = #tpu.core_type<tc>, window_params = [{transform_indices = @transform_0, window_bounds = array<i64: 16, 512>}, {pipeline_mode = #tpu.pipeline_mode<synchronous>, transform_indices = @transform_1, window_bounds = array<i64: 512, 512>}, {pipeline_mode = #tpu.pipeline_mode<synchronous>, transform_indices = @transform_2, window_bounds = array<i64: 1, 512>}, {pipeline_mode = #tpu.pipeline_mode<synchronous>, transform_indices = @transform_3, window_bounds = array<i64: 512, 512>}, {pipeline_mode = #tpu.pipeline_mode<synchronous>, transform_indices = @transform_4, window_bounds = array<i64: 1, 512>}, {pipeline_mode = #tpu.pipeline_mode<synchronous>, transform_indices = @transform_5, window_bounds = array<i64: 512, 128>}, {transform_indices = @transform_6, window_bounds = array<i64: 16, 8>}]} {
    %c0 = arith.constant 0 : index
    %c0_0 = arith.constant 0 : index
    %0 = vector.load %arg1[%c0, %c0_0] : memref<16x512xbf16, #tpu.memory_space<vmem>>, vector<16x512xbf16>
    %c0_1 = arith.constant 0 : index
    %c0_2 = arith.constant 0 : index
    %1 = vector.load %arg2[%c0_1, %c0_2] : memref<512x512xbf16, #tpu.memory_space<vmem>>, vector<512x512xbf16>
    %cst = arith.constant dense<0.000000e+00> : vector<16x512xf32>
    %2 = tpu.matmul %0, %1, %cst {dimension_numbers = #tpu.dot_dimension_numbers<[1], [0], [0], [1], [0, 0, 1, 1], [], []>} : vector<16x512xbf16>, vector<512x512xbf16>, vector<16x512xf32> -> vector<16x512xf32>
    %c0_3 = arith.constant 0 : index
    %c0_4 = arith.constant 0 : index
    %3 = vector.load %arg3[%c0_3, %c0_4] : memref<1x512xf32, #tpu.memory_space<vmem>>, vector<1x512xf32>
    %4 = vector.broadcast %3 : vector<1x512xf32> to vector<16x512xf32>
    %5 = arith.addf %2, %4 : vector<16x512xf32>
    %cst_5 = arith.constant 0.000000e+00 : f32
    %6 = vector.broadcast %cst_5 : f32 to vector<16x512xf32>
    %7 = arith.maximumf %5, %6 : vector<16x512xf32>
    %8 = arith.truncf %7 : vector<16x512xf32> to vector<16x512xbf16>
    %c0_6 = arith.constant 0 : index
    %c0_7 = arith.constant 0 : index
    %9 = vector.load %arg4[%c0_6, %c0_7] : memref<512x512xbf16, #tpu.memory_space<vmem>>, vector<512x512xbf16>
    %cst_8 = arith.constant dense<0.000000e+00> : vector<16x512xf32>
    %10 = tpu.matmul %8, %9, %cst_8 {dimension_numbers = #tpu.dot_dimension_numbers<[1], [0], [0], [1], [0, 0, 1, 1], [], []>} : vector<16x512xbf16>, vector<512x512xbf16>, vector<16x512xf32> -> vector<16x512xf32>
    %c0_9 = arith.constant 0 : index
    %c0_10 = arith.constant 0 : index
    %11 = vector.load %arg5[%c0_9, %c0_10] : memref<1x512xf32, #tpu.memory_space<vmem>>, vector<1x512xf32>
    %12 = vector.broadcast %11 : vector<1x512xf32> to vector<16x512xf32>
    %13 = arith.addf %10, %12 : vector<16x512xf32>
    %cst_11 = arith.constant 0.000000e+00 : f32
    %14 = vector.broadcast %cst_11 : f32 to vector<16x512xf32>
    %15 = arith.maximumf %13, %14 : vector<16x512xf32>
    %16 = arith.truncf %15 : vector<16x512xf32> to vector<16x512xbf16>
    %c0_12 = arith.constant 0 : index
    %c0_13 = arith.constant 0 : index
    %17 = vector.load %arg6[%c0_12, %c0_13] : memref<512x128xbf16, #tpu.memory_space<vmem>>, vector<512x128xbf16>
    %cst_14 = arith.constant dense<0.000000e+00> : vector<16x128xf32>
    %18 = tpu.matmul %16, %17, %cst_14 {dimension_numbers = #tpu.dot_dimension_numbers<[1], [0], [0], [1], [0, 0, 1, 1], [], []>} : vector<16x512xbf16>, vector<512x128xbf16>, vector<16x128xf32> -> vector<16x128xf32>
    %19 = vector.extract_strided_slice %18 {offsets = [0, 0], sizes = [16, 8], strides = [1, 1]} : vector<16x128xf32> to vector<16x8xf32>
    %20 = arith.truncf %19 : vector<16x8xf32> to vector<16x8xbf16>
    %c0_15 = arith.constant 0 : index
    %c0_16 = arith.constant 0 : index
    %21 = vector.load %arg7[%c0_15, %c0_16] : memref<16x8xbf16, #tpu.memory_space<vmem>>, vector<16x8xbf16>
    tpu.vector_store %arg7[%c0_15, %c0_16], %20 {strides = array<i32>} : memref<16x8xbf16, #tpu.memory_space<vmem>>, vector<16x8xbf16>,
    return
  }
  func.func @transform_0(%arg0: i32) -> (i32, i32) {
    %c0_i32 = arith.constant 0 : i32
    %c0_i32_0 = arith.constant 0 : i32
    return %arg0, %c0_i32 : i32, i32
  }
  func.func @transform_1(%arg0: i32) -> (i32, i32) {
    %c0_i32 = arith.constant 0 : i32
    %c0_i32_0 = arith.constant 0 : i32
    %c0_i32_1 = arith.constant 0 : i32
    return %c0_i32, %c0_i32_0 : i32, i32
  }
  func.func @transform_2(%arg0: i32) -> (i32, i32) {
    %c0_i32 = arith.constant 0 : i32
    %c0_i32_0 = arith.constant 0 : i32
    %c0_i32_1 = arith.constant 0 : i32
    return %c0_i32, %c0_i32_0 : i32, i32
  }
  func.func @transform_3(%arg0: i32) -> (i32, i32) {
    %c0_i32 = arith.constant 0 : i32
    %c0_i32_0 = arith.constant 0 : i32
    %c0_i32_1 = arith.constant 0 : i32
    return %c0_i32, %c0_i32_0 : i32, i32
  }
  func.func @transform_4(%arg0: i32) -> (i32, i32) {
    %c0_i32 = arith.constant 0 : i32
    %c0_i32_0 = arith.constant 0 : i32
    %c0_i32_1 = arith.constant 0 : i32
    return %c0_i32, %c0_i32_0 : i32, i32
  }
  func.func @transform_5(%arg0: i32) -> (i32, i32) {
    %c0_i32 = arith.constant 0 : i32
    %c0_i32_0 = arith.constant 0 : i32
    %c0_i32_1 = arith.constant 0 : i32
    return %c0_i32, %c0_i32_0 : i32, i32
  }
  func.func @transform_6(%arg0: i32) -> (i32, i32) {
    %c0_i32 = arith.constant 0 : i32
    %c0_i32_0 = arith.constant 0 : i32
    return %arg0, %c0_i32 : i32, i32
  }
}

module attributes {stable_mosaic.version = 11 : i64} {
  func.func @_p3_combine_kernel(%arg0: i32, %arg1: i32, %arg2: memref<256x256xbf16, #tpu.memory_space<vmem>>, %arg3: memref<1x4x16x8xbf16, #tpu.memory_space<vmem>>, %arg4: memref<1x8x16x8xbf16, #tpu.memory_space<vmem>>, %arg5: memref<256x128xbf16, #tpu.memory_space<vmem>>, %arg6: memref<1x8xf32, #tpu.memory_space<vmem>>, %arg7: memref<1x16x16x8xf32, #tpu.memory_space<vmem>>) attributes {dimension_semantics = [#tpu.dimension_semantics<parallel>, #tpu.dimension_semantics<parallel>], iteration_bounds = array<i64: 2, 1>, scalar_prefetch = 0 : i64, scratch_operands = 0 : i64, tpu.core_type = #tpu.core_type<tc>, window_params = [{transform_indices = @transform_0, window_bounds = array<i64: 256, 256>}, {transform_indices = @transform_1, window_bounds = array<i64: 1, 4, 16, 8>}, {transform_indices = @transform_2, window_bounds = array<i64: 1, 8, 16, 8>}, {pipeline_mode = #tpu.pipeline_mode<synchronous>, transform_indices = @transform_3, window_bounds = array<i64: 256, 128>}, {pipeline_mode = #tpu.pipeline_mode<synchronous>, transform_indices = @transform_4, window_bounds = array<i64: 1, 8>}, {transform_indices = @transform_5, window_bounds = array<i64: 1, 16, 16, 8>}]} {
    %c0 = arith.constant 0 : index
    %c0_0 = arith.constant 0 : index
    %0 = vector.load %arg2[%c0, %c0_0] : memref<256x256xbf16, #tpu.memory_space<vmem>>, vector<256x256xbf16>
    %c0_1 = arith.constant 0 : index
    %c0_2 = arith.constant 0 : index
    %1 = vector.load %arg5[%c0_1, %c0_2] : memref<256x128xbf16, #tpu.memory_space<vmem>>, vector<256x128xbf16>
    %cst = arith.constant dense<0.000000e+00> : vector<256x128xf32>
    %2 = tpu.matmul %0, %1, %cst {dimension_numbers = #tpu.dot_dimension_numbers<[1], [0], [0], [1], [0, 0, 1, 1], [], []>} : vector<256x256xbf16>, vector<256x128xbf16>, vector<256x128xf32> -> vector<256x128xf32>
    %3 = vector.extract_strided_slice %2 {offsets = [0, 0], sizes = [256, 8], strides = [1, 1]} : vector<256x128xf32> to vector<256x8xf32>
    %4 = vector.shape_cast %3 : vector<256x8xf32> to vector<16x16x8xf32>
    %c0_3 = arith.constant 0 : index
    %c0_4 = arith.constant 0 : index
    %c0_5 = arith.constant 0 : index
    %c0_6 = arith.constant 0 : index
    %5 = vector.load %arg3[%c0_3, %c0_4, %c0_5, %c0_6] : memref<1x4x16x8xbf16, #tpu.memory_space<vmem>>, vector<1x4x16x8xbf16>
    %6 = vector.shape_cast %5 : vector<1x4x16x8xbf16> to vector<4x16x8xbf16>
    %7 = arith.extf %6 : vector<4x16x8xbf16> to vector<4x16x8xf32>
    %8 = vector.shape_cast %7 : vector<4x16x8xf32> to vector<4x1x16x8xf32>
    %9 = vector.shape_cast %8 : vector<4x1x16x8xf32> to vector<4x1x16x8xf32>
    %10 = vector.broadcast %9 : vector<4x1x16x8xf32> to vector<4x4x16x8xf32>
    %11 = vector.shape_cast %10 : vector<4x4x16x8xf32> to vector<16x16x8xf32>
    %c0_7 = arith.constant 0 : index
    %c0_8 = arith.constant 0 : index
    %c0_9 = arith.constant 0 : index
    %c0_10 = arith.constant 0 : index
    %12 = vector.load %arg4[%c0_7, %c0_8, %c0_9, %c0_10] : memref<1x8x16x8xbf16, #tpu.memory_space<vmem>>, vector<1x8x16x8xbf16>
    %13 = vector.shape_cast %12 : vector<1x8x16x8xbf16> to vector<8x16x8xbf16>
    %14 = arith.extf %13 : vector<8x16x8xbf16> to vector<8x16x8xf32>
    %15 = vector.shape_cast %14 : vector<8x16x8xf32> to vector<8x1x16x8xf32>
    %16 = vector.shape_cast %15 : vector<8x1x16x8xf32> to vector<8x1x16x8xf32>
    %17 = vector.broadcast %16 : vector<8x1x16x8xf32> to vector<8x2x16x8xf32>
    %18 = vector.shape_cast %17 : vector<8x2x16x8xf32> to vector<16x16x8xf32>
    %19 = arith.addf %4, %11 : vector<16x16x8xf32>
    %20 = arith.addf %19, %18 : vector<16x16x8xf32>
    %c0_11 = arith.constant 0 : index
    %c0_12 = arith.constant 0 : index
    %21 = vector.load %arg6[%c0_11, %c0_12] : memref<1x8xf32, #tpu.memory_space<vmem>>, vector<1x8xf32>
    %22 = vector.shape_cast %21 : vector<1x8xf32> to vector<1x1x8xf32>
    %23 = vector.broadcast %22 : vector<1x1x8xf32> to vector<16x16x8xf32>
    %24 = arith.addf %20, %23 : vector<16x16x8xf32>
    %c0_13 = arith.constant 0 : index
    %c0_14 = arith.constant 0 : index
    %c0_15 = arith.constant 0 : index
    %c0_16 = arith.constant 0 : index
    %25 = vector.load %arg7[%c0_13, %c0_14, %c0_15, %c0_16] : memref<1x16x16x8xf32, #tpu.memory_space<vmem>>, vector<1x16x16x8xf32>
    %26 = vector.shape_cast %25 : vector<1x16x16x8xf32> to vector<16x16x8xf32>
    %27 = vector.shape_cast %24 : vector<16x16x8xf32> to vector<1x16x16x8xf32>
    tpu.vector_store %arg7[%c0_13, %c0_14, %c0_15, %c0_16], %27 {strides = array<i32>} : memref<1x16x16x8xf32, #tpu.memory_space<vmem>>, vector<1x16x16x8xf32>,
    return
  }
  func.func @transform_0(%arg0: i32, %arg1: i32) -> (i32, i32) {
    %c1_i32 = arith.constant 1 : i32
    %0 = arith.muli %arg0, %c1_i32 : i32
    %1 = arith.addi %0, %arg1 : i32
    %c0_i32 = arith.constant 0 : i32
    %c0_i32_0 = arith.constant 0 : i32
    return %1, %c0_i32 : i32, i32
  }
  func.func @transform_1(%arg0: i32, %arg1: i32) -> (i32, i32, i32, i32) {
    %c0_i32 = arith.constant 0 : i32
    %c0_i32_0 = arith.constant 0 : i32
    %c0_i32_1 = arith.constant 0 : i32
    return %arg0, %arg1, %c0_i32, %c0_i32_0 : i32, i32, i32, i32
  }
  func.func @transform_2(%arg0: i32, %arg1: i32) -> (i32, i32, i32, i32) {
    %c0_i32 = arith.constant 0 : i32
    %c0_i32_0 = arith.constant 0 : i32
    %c0_i32_1 = arith.constant 0 : i32
    return %arg0, %arg1, %c0_i32, %c0_i32_0 : i32, i32, i32, i32
  }
  func.func @transform_3(%arg0: i32, %arg1: i32) -> (i32, i32) {
    %c0_i32 = arith.constant 0 : i32
    %c0_i32_0 = arith.constant 0 : i32
    %c0_i32_1 = arith.constant 0 : i32
    return %c0_i32, %c0_i32_0 : i32, i32
  }
  func.func @transform_4(%arg0: i32, %arg1: i32) -> (i32, i32) {
    %c0_i32 = arith.constant 0 : i32
    %c0_i32_0 = arith.constant 0 : i32
    %c0_i32_1 = arith.constant 0 : i32
    return %c0_i32, %c0_i32_0 : i32, i32
  }
  func.func @transform_5(%arg0: i32, %arg1: i32) -> (i32, i32, i32, i32) {
    %c0_i32 = arith.constant 0 : i32
    %c0_i32_0 = arith.constant 0 : i32
    %c0_i32_1 = arith.constant 0 : i32
    return %arg0, %arg1, %c0_i32, %c0_i32_0 : i32, i32, i32, i32
  }
}

</mosaic_0001>

<llo_original>
// kernel: column_decoder_forward.4
$region0: #{column_decoder_forward.4}
  #allocation0 [shape = 'u32[]', space=smem, size = 0x4, offset = 0x4, fixed_abs, tag = 'smem constant byte address 0x4 - core index']
  #allocation1 [shape = 'u32[144,128]{1,0:T(1,128)}', space=vmem, size = 0x12000, scoped, tag = 'internal scratch']
  %s0 = inlined_call_operand.vmem [shape: bf16[128,512], index: 0, kind: input, shape index: {}]
  %s1 = inlined_call_operand.vmem [shape: bf16[512,128], index: 1, kind: input, shape index: {}]
  %s2 = inlined_call_operand.vmem [shape: bf16[128,8], index: 2, kind: output, shape index: {}]
  %s3 = sld [smem:[#allocation0]]
  $region41: #{column_decoder_forward.4} parent=0
    _
  %s5 = ssub.s32 1, %s3
  %s6 = scalar_select 0, %s5, %s3
  loop: start=0, step=1, limit=4
  $region2: #{column_decoder_forward.4} parent=0 // loop_pre_header
    _
  $region3: #{column_decoder_forward.4} parent=0 // loop_header
    %s8 = sphi 0, %s12
    %p9 = scmp.ge.s32.totalorder %s8, 4
    %s18 = sphi 0, %s20
    %s21 = sphi 0, %s18
    %s22 = sphi 0, %s21
    %s38 = sphi 0, %s22
    %s42 = sphi 0, %s42
    %s44 = sphi 0, %s42
    %s45 = sphi 0, %s44
    %s59 = sphi 0, %s45
    %s65 = sphi 0, %s67
    %s68 = sphi 0, %s65
    %s69 = sphi 0, %s68
    %s85 = sphi 0, %s69
  $region4: #{column_decoder_forward.4} parent=0 // loop_header_branch
    %11 = sbr.rel (%p9) target = $region8
  $region5: #{column_decoder_forward.4} parent=0 // loop_body
    %s13 = ssub.s32 %s8, 1
    %s14 = ssub.s32 %s8, 2
    %s15 = sadd.s32 %s8, 1
    %s16 = ssub.s32 %s8, %s15
    %p17 = scmp.eq.s32.totalorder %s16, 0
    %s19 = sadd.s32 %s18, 1
    %s20 = scalar_select %p17, %s18, %s19
    %p23 = pneg %p17
    %p24 = scmp.eq.s32.totalorder %s8, 1
    %p25 = por %p23, %p24
    %p26 = scmp.ne.s32.totalorder %s18, %s21
    %p27 = scmp.eq.s32.totalorder %s8, 0
    %p28 = por %p26, %p27
    %p29 = scmp.ne.s32.totalorder %s18, %s21
    %p30 = scmp.eq.s32.totalorder %s13, 1
    %p31 = por %p29, %p30
    %p32 = scmp.ne.s32.totalorder %s21, %s22
    %p33 = scmp.eq.s32.totalorder %s13, 0
    %p34 = por %p32, %p33
    %p35 = scmp.ne.s32.totalorder %s21, %s22
    %p36 = scmp.eq.s32.totalorder %s14, 1
    %p37 = por %p35, %p36
    %p39 = scmp.ne.s32.totalorder %s22, %s38
    %p40 = scmp.eq.s32.totalorder %s14, 0
    %p41 = por %p39, %p40
    %s43 = sadd.s32 %s42, 1
    %p46 = scmp.eq.s32.totalorder %s8, 1
    %p47 = scmp.ne.s32.totalorder %s42, %s44
    %p48 = scmp.eq.s32.totalorder %s8, 0
    %p49 = por %p47, %p48
    %p50 = scmp.ne.s32.totalorder %s42, %s44
    %p51 = scmp.eq.s32.totalorder %s13, 1
    %p52 = por %p50, %p51
    %p53 = scmp.ne.s32.totalorder %s44, %s45
    %p54 = scmp.eq.s32.totalorder %s13, 0
    %p55 = por %p53, %p54
    %p56 = scmp.ne.s32.totalorder %s44, %s45
    %p57 = scmp.eq.s32.totalorder %s14, 1
    %p58 = por %p56, %p57
    %p60 = scmp.ne.s32.totalorder %s45, %s59
    %p61 = scmp.eq.s32.totalorder %s14, 0
    %p62 = por %p60, %p61
    %s63 = ssub.s32 %s8, %s15
    %p64 = scmp.eq.s32.totalorder %s63, 0
    %s66 = sadd.s32 %s65, 1
    %s67 = scalar_select %p64, %s65, %s66
    %p70 = pneg %p64
    %p71 = scmp.eq.s32.totalorder %s8, 1
    %p72 = por %p70, %p71
    %p73 = scmp.ne.s32.totalorder %s65, %s68
    %p74 = scmp.eq.s32.totalorder %s8, 0
    %p75 = por %p73, %p74
    %p76 = scmp.ne.s32.totalorder %s65, %s68
    %p77 = scmp.eq.s32.totalorder %s13, 1
    %p78 = por %p76, %p77
    %p79 = scmp.ne.s32.totalorder %s68, %s69
    %p80 = scmp.eq.s32.totalorder %s13, 0
    %p81 = por %p79, %p80
    %p82 = scmp.ne.s32.totalorder %s68, %s69
    %p83 = scmp.eq.s32.totalorder %s14, 1
    %p84 = por %p82, %p83
    %p86 = scmp.ne.s32.totalorder %s69, %s85
    %p87 = scmp.eq.s32.totalorder %s14, 0
    %p88 = por %p86, %p87
    %p89 = scmp.le.s32.totalorder 1, %s8
    %p90 = scmp.lt.s32.totalorder %s8, 3
    %p91 = pnand %p89, %p90
    %p92 = pneg %p91
    // Predicated region
    $region9: #{column_decoder_forward.4} parent=5 // pred_check
      _
    $region10: #{column_decoder_forward.4} parent=5 // pred_check_branch
      %94 = sbr.rel (%p91) target = $region12
    $region11: #{column_decoder_forward.4} parent=5 // pred_region
      %s95 = ssub.s32 %s8, 1
      // Predicated region
      $region13: #{column_decoder_forward.4} parent=11 // pred_check
        %p96 = pneg %p55
      $region14: #{column_decoder_forward.4} parent=11 // pred_check_branch
        %98 = sbr.rel (%p96) target = $region16
      $region15: #{column_decoder_forward.4} parent=11 // pred_region
        _
      $region16: #{column_decoder_forward.4} parent=11 // pred_fallthru
        _
    $region12: #{column_decoder_forward.4} parent=5 // pred_fallthru
      _
    %p99 = scmp.lt.s32.totalorder %s8, 2
    // Predicated region
    $region17: #{column_decoder_forward.4} parent=5 // pred_check
      %p100 = pneg %p99
    $region18: #{column_decoder_forward.4} parent=5 // pred_check_branch
      %102 = sbr.rel (%p100) target = $region20
    $region19: #{column_decoder_forward.4} parent=5 // pred_region
      // Predicated region
      $region21: #{column_decoder_forward.4} parent=19 // pred_check
        %p103 = pneg %p28
      $region22: #{column_decoder_forward.4} parent=19 // pred_check_branch
        %105 = sbr.rel (%p103) target = $region24
      $region23: #{column_decoder_forward.4} parent=19 // pred_region
        %s106 = smul.u32 8, %s8
        %p107 = scmp.lt.s32.totalorder %s106, 15
        %s108 = scalar_select %p107, %s106, 15
        %s109 = smul.addr %s108, 4
        %s110 = smul.addr %s109, 4
        %s111 = scalar_lea.vmem %s0, %s110
        %s112 = smul.u32 8, %s8
      $region24: #{column_decoder_forward.4} parent=19 // pred_fallthru
        _
    $region20: #{column_decoder_forward.4} parent=5 // pred_fallthru
      _
    %p113 = scmp.le.s32.totalorder 1, %s8
    %p114 = scmp.lt.s32.totalorder %s8, 3
    %p115 = pnand %p113, %p114
    %p116 = pneg %p115
    // Predicated region
    $region25: #{column_decoder_forward.4} parent=5 // pred_check
      _
    $region26: #{column_decoder_forward.4} parent=5 // pred_check_branch
      %118 = sbr.rel (%p115) target = $region28
    $region27: #{column_decoder_forward.4} parent=5 // pred_region
      %s119 = ssub.s32 %s8, 1
      %s120 = smul.u32 8, %s13
      %p121 = scmp.lt.s32.totalorder %s120, 15
      %s122 = scalar_select %p121, %s120, 15
      %s123 = smul.addr %s122, 4
      %s124 = smul.addr %s123, 4
      %s125 = scalar_lea.vmem %s0, %s124
      %p126 = pneg %p34
      %p127 = pneg %p31
      %p128 = pneg %p55
      %p129 = pneg %p52
      %p130 = pneg %p81
      %p131 = pneg %p78
      %s132 = smul.u32 8, %s13
      %p133 = scmp.lt.s32.totalorder %s132, 15
      %s134 = scalar_select %p133, %s132, 15
      %s135 = smul.addr %s134, 4
      %s136 = scalar_lea.vmem %s2, %s135
      %s137 = smul.u32 8, %s13
      %p138 = scmp.lt.s32.totalorder %s137, 15
      %s139 = scalar_select %p138, %s137, 15
      %s140 = smul.addr %s139, 4
      %s141 = smul.addr %s140, 4
      %s142 = scalar_lea.vmem %s0, %s141
      %s143 = smul.u32 8, %s13
      %s144 = smul.u32 8, %s13
      %p145 = scmp.lt.s32.totalorder %s144, 15
      %s146 = scalar_select %p145, %s144, 15
      %s147 = smul.addr %s146, 4
      %s148 = scalar_lea.vmem %s2, %s147
      %s149 = smul.u32 8, %s13
      %v151 = vld [vmem:[%s142] sm:$0xff]
      %v152 = vld [vmem:[%s142 + $0x8] sm:$0xff]
      %v153 = vld [vmem:[%s142 + $0x10] sm:$0xff]
      %v154 = vld [vmem:[%s142 + $0x18] sm:$0xff]
      %v155 = vld [vmem:[%s142 + $0x20] sm:$0xff]
      %v156 = vld [vmem:[%s142 + $0x28] sm:$0xff]
      %v157 = vld [vmem:[%s142 + $0x30] sm:$0xff]
      %v158 = vld [vmem:[%s142 + $0x38] sm:$0xff]
      %v159 = vld [vmem:[%s142 + $0x40] sm:$0xff]
      %v160 = vld [vmem:[%s142 + $0x48] sm:$0xff]
      %v161 = vld [vmem:[%s142 + $0x50] sm:$0xff]
      %v162 = vld [vmem:[%s142 + $0x58] sm:$0xff]
      %v163 = vld [vmem:[%s142 + $0x60] sm:$0xff]
      %v164 = vld [vmem:[%s142 + $0x68] sm:$0xff]
      %v165 = vld [vmem:[%s142 + $0x70] sm:$0xff]
      %v166 = vld [vmem:[%s142 + $0x78] sm:$0xff]
      %v167 = vld [vmem:[%s1] sm:$0xf]
      %v168 = vld [vmem:[%s1 + $0x4] sm:$0xf]
      %v169 = vld [vmem:[%s1 + $0x8] sm:$0xf]
      %v170 = vld [vmem:[%s1 + $0xc] sm:$0xf]
      %v171 = vld [vmem:[%s1 + $0x10] sm:$0xf]
      %v172 = vld [vmem:[%s1 + $0x14] sm:$0xf]
      %v173 = vld [vmem:[%s1 + $0x18] sm:$0xf]
      %v174 = vld [vmem:[%s1 + $0x1c] sm:$0xf]
      %v175 = vld [vmem:[%s1 + $0x20] sm:$0xf]
      %v176 = vld [vmem:[%s1 + $0x24] sm:$0xf]
      %v177 = vld [vmem:[%s1 + $0x28] sm:$0xf]
      %v178 = vld [vmem:[%s1 + $0x2c] sm:$0xf]
      %v179 = vld [vmem:[%s1 + $0x30] sm:$0xf]
      %v180 = vld [vmem:[%s1 + $0x34] sm:$0xf]
      %v181 = vld [vmem:[%s1 + $0x38] sm:$0xf]
      %v182 = vld [vmem:[%s1 + $0x3c] sm:$0xf]
      %v183 = vld [vmem:[%s1 + $0x40] sm:$0xf]
      %v184 = vld [vmem:[%s1 + $0x44] sm:$0xf]
      %v185 = vld [vmem:[%s1 + $0x48] sm:$0xf]
      %v186 = vld [vmem:[%s1 + $0x4c] sm:$0xf]
      %v187 = vld [vmem:[%s1 + $0x50] sm:$0xf]
      %v188 = vld [vmem:[%s1 + $0x54] sm:$0xf]
      %v189 = vld [vmem:[%s1 + $0x58] sm:$0xf]
      %v190 = vld [vmem:[%s1 + $0x5c] sm:$0xf]
      %v191 = vld [vmem:[%s1 + $0x60] sm:$0xf]
      %v192 = vld [vmem:[%s1 + $0x64] sm:$0xf]
      %v193 = vld [vmem:[%s1 + $0x68] sm:$0xf]
      %v194 = vld [vmem:[%s1 + $0x6c] sm:$0xf]
      %v195 = vld [vmem:[%s1 + $0x70] sm:$0xf]
      %v196 = vld [vmem:[%s1 + $0x74] sm:$0xf]
      %v197 = vld [vmem:[%s1 + $0x78] sm:$0xf]
      %v198 = vld [vmem:[%s1 + $0x7c] sm:$0xf]
      %v199 = vld [vmem:[%s1 + $0x80] sm:$0xf]
      %v200 = vld [vmem:[%s1 + $0x84] sm:$0xf]
      %v201 = vld [vmem:[%s1 + $0x88] sm:$0xf]
      %v202 = vld [vmem:[%s1 + $0x8c] sm:$0xf]
      %v203 = vld [vmem:[%s1 + $0x90] sm:$0xf]
      %v204 = vld [vmem:[%s1 + $0x94] sm:$0xf]
      %v205 = vld [vmem:[%s1 + $0x98] sm:$0xf]
      %v206 = vld [vmem:[%s1 + $0x9c] sm:$0xf]
      %v207 = vld [vmem:[%s1 + $0xa0] sm:$0xf]
      %v208 = vld [vmem:[%s1 + $0xa4] sm:$0xf]
      %v209 = vld [vmem:[%s1 + $0xa8] sm:$0xf]
      %v210 = vld [vmem:[%s1 + $0xac] sm:$0xf]
      %v211 = vld [vmem:[%s1 + $0xb0] sm:$0xf]
      %v212 = vld [vmem:[%s1 + $0xb4] sm:$0xf]
      %v213 = vld [vmem:[%s1 + $0xb8] sm:$0xf]
      %v214 = vld [vmem:[%s1 + $0xbc] sm:$0xf]
      %v215 = vld [vmem:[%s1 + $0xc0] sm:$0xf]
      %v216 = vld [vmem:[%s1 + $0xc4] sm:$0xf]
      %v217 = vld [vmem:[%s1 + $0xc8] sm:$0xf]
      %v218 = vld [vmem:[%s1 + $0xcc] sm:$0xf]
      %v219 = vld [vmem:[%s1 + $0xd0] sm:$0xf]
      %v220 = vld [vmem:[%s1 + $0xd4] sm:$0xf]
      %v221 = vld [vmem:[%s1 + $0xd8] sm:$0xf]
      %v222 = vld [vmem:[%s1 + $0xdc] sm:$0xf]
      %v223 = vld [vmem:[%s1 + $0xe0] sm:$0xf]
      %v224 = vld [vmem:[%s1 + $0xe4] sm:$0xf]
      %v225 = vld [vmem:[%s1 + $0xe8] sm:$0xf]
      %v226 = vld [vmem:[%s1 + $0xec] sm:$0xf]
      %v227 = vld [vmem:[%s1 + $0xf0] sm:$0xf]
      %v228 = vld [vmem:[%s1 + $0xf4] sm:$0xf]
      %v229 = vld [vmem:[%s1 + $0xf8] sm:$0xf]
      %v230 = vld [vmem:[%s1 + $0xfc] sm:$0xf]
      %v247 = vunpack.c.l.b16 %v151
      %v248 = vunpack.c.h.b16 %v151
      %v249 = vunpack.c.l.b16 %v152
      %v250 = vunpack.c.h.b16 %v152
      %v251 = vunpack.c.l.b16 %v153
      %v252 = vunpack.c.h.b16 %v153
      %v253 = vunpack.c.l.b16 %v154
      %v254 = vunpack.c.h.b16 %v154
      %v255 = vunpack.c.l.b16 %v155
      %v256 = vunpack.c.h.b16 %v155
      %v257 = vunpack.c.l.b16 %v156
      %v258 = vunpack.c.h.b16 %v156
      %v259 = vunpack.c.l.b16 %v157
      %v260 = vunpack.c.h.b16 %v157
      %v261 = vunpack.c.l.b16 %v158
      %v262 = vunpack.c.h.b16 %v158
      %v263 = vunpack.c.l.b16 %v159
      %v264 = vunpack.c.h.b16 %v159
      %v265 = vunpack.c.l.b16 %v160
      %v266 = vunpack.c.h.b16 %v160
      %v267 = vunpack.c.l.b16 %v161
      %v268 = vunpack.c.h.b16 %v161
      %v269 = vunpack.c.l.b16 %v162
      %v270 = vunpack.c.h.b16 %v162
      %v271 = vunpack.c.l.b16 %v163
      %v272 = vunpack.c.h.b16 %v163
      %v273 = vunpack.c.l.b16 %v164
      %v274 = vunpack.c.h.b16 %v164
      %v275 = vunpack.c.l.b16 %v165
      %v276 = vunpack.c.h.b16 %v165
      %v277 = vunpack.c.l.b16 %v166
      %v278 = vunpack.c.h.b16 %v166
      %v279 = vpack.c.b16 %v251, %v247
      %v280 = vpack.c.b16 %v252, %v248
      %v281 = vpack.c.b16 %v253, %v249
      %v282 = vpack.c.b16 %v254, %v250
      %v283 = vpack.c.b16 %v259, %v255
      %v284 = vpack.c.b16 %v260, %v256
      %v285 = vpack.c.b16 %v261, %v257
      %v286 = vpack.c.b16 %v262, %v258
      %v287 = vpack.c.b16 %v267, %v263
      %v288 = vpack.c.b16 %v268, %v264
      %v289 = vpack.c.b16 %v269, %v265
      %v290 = vpack.c.b16 %v270, %v266
      %v291 = vpack.c.b16 %v275, %v271
      %v292 = vpack.c.b16 %v276, %v272
      %v293 = vpack.c.b16 %v277, %v273
      %v294 = vpack.c.b16 %v278, %v274
      %v375 = vunpack.c.l.b16 %v167
      %v376 = vunpack.c.l.b16 %v168
      %v377 = vunpack.c.l.b16 %v169
      %v378 = vunpack.c.l.b16 %v170
      %v379 = vunpack.c.l.b16 %v171
      %v380 = vunpack.c.l.b16 %v172
      %v381 = vunpack.c.l.b16 %v173
      %v382 = vunpack.c.l.b16 %v174
      %v383 = vunpack.c.l.b16 %v175
      %v384 = vunpack.c.l.b16 %v176
      %v385 = vunpack.c.l.b16 %v177
      %v386 = vunpack.c.l.b16 %v178
      %v387 = vunpack.c.l.b16 %v179
      %v388 = vunpack.c.l.b16 %v180
      %v389 = vunpack.c.l.b16 %v181
      %v390 = vunpack.c.l.b16 %v182
      %v391 = vunpack.c.l.b16 %v183
      %v392 = vunpack.c.l.b16 %v184
      %v393 = vunpack.c.l.b16 %v185
      %v394 = vunpack.c.l.b16 %v186
      %v395 = vunpack.c.l.b16 %v187
      %v396 = vunpack.c.l.b16 %v188
      %v397 = vunpack.c.l.b16 %v189
      %v398 = vunpack.c.l.b16 %v190
      %v399 = vunpack.c.l.b16 %v191
      %v400 = vunpack.c.l.b16 %v192
      %v401 = vunpack.c.l.b16 %v193
      %v402 = vunpack.c.l.b16 %v194
      %v403 = vunpack.c.l.b16 %v195
      %v404 = vunpack.c.l.b16 %v196
      %v405 = vunpack.c.l.b16 %v197
      %v406 = vunpack.c.l.b16 %v198
      %v407 = vunpack.c.l.b16 %v199
      %v408 = vunpack.c.l.b16 %v200
      %v409 = vunpack.c.l.b16 %v201
      %v410 = vunpack.c.l.b16 %v202
      %v411 = vunpack.c.l.b16 %v203
      %v412 = vunpack.c.l.b16 %v204
      %v413 = vunpack.c.l.b16 %v205
      %v414 = vunpack.c.l.b16 %v206
      %v415 = vunpack.c.l.b16 %v207
      %v416 = vunpack.c.l.b16 %v208
      %v417 = vunpack.c.l.b16 %v209
      %v418 = vunpack.c.l.b16 %v210
      %v419 = vunpack.c.l.b16 %v211
      %v420 = vunpack.c.l.b16 %v212
      %v421 = vunpack.c.l.b16 %v213
      %v422 = vunpack.c.l.b16 %v214
      %v423 = vunpack.c.l.b16 %v215
      %v424 = vunpack.c.l.b16 %v216
      %v425 = vunpack.c.l.b16 %v217
      %v426 = vunpack.c.l.b16 %v218
      %v427 = vunpack.c.l.b16 %v219
      %v428 = vunpack.c.l.b16 %v220
      %v429 = vunpack.c.l.b16 %v221
      %v430 = vunpack.c.l.b16 %v222
      %v431 = vunpack.c.l.b16 %v223
      %v432 = vunpack.c.l.b16 %v224
      %v433 = vunpack.c.l.b16 %v225
      %v434 = vunpack.c.l.b16 %v226
      %v435 = vunpack.c.l.b16 %v227
      %v436 = vunpack.c.l.b16 %v228
      %v437 = vunpack.c.l.b16 %v229
      %v438 = vunpack.c.l.b16 %v230
      %v439 = vpack.c.b16 %v376, %v375
      %v440 = vpack.c.b16 %v378, %v377
      %v441 = vpack.c.b16 %v380, %v379
      %v442 = vpack.c.b16 %v382, %v381
      %v443 = vpack.c.b16 %v384, %v383
      %v444 = vpack.c.b16 %v386, %v385
      %v445 = vpack.c.b16 %v388, %v387
      %v446 = vpack.c.b16 %v390, %v389
      %v447 = vpack.c.b16 %v392, %v391
      %v448 = vpack.c.b16 %v394, %v393
      %v449 = vpack.c.b16 %v396, %v395
      %v450 = vpack.c.b16 %v398, %v397
      %v451 = vpack.c.b16 %v400, %v399
      %v452 = vpack.c.b16 %v402, %v401
      %v453 = vpack.c.b16 %v404, %v403
      %v454 = vpack.c.b16 %v406, %v405
      %v455 = vpack.c.b16 %v408, %v407
      %v456 = vpack.c.b16 %v410, %v409
      %v457 = vpack.c.b16 %v412, %v411
      %v458 = vpack.c.b16 %v414, %v413
      %v459 = vpack.c.b16 %v416, %v415
      %v460 = vpack.c.b16 %v418, %v417
      %v461 = vpack.c.b16 %v420, %v419
      %v462 = vpack.c.b16 %v422, %v421
      %v463 = vpack.c.b16 %v424, %v423
      %v464 = vpack.c.b16 %v426, %v425
      %v465 = vpack.c.b16 %v428, %v427
      %v466 = vpack.c.b16 %v430, %v429
      %v467 = vpack.c.b16 %v432, %v431
      %v468 = vpack.c.b16 %v434, %v433
      %v469 = vpack.c.b16 %v436, %v435
      %v470 = vpack.c.b16 %v438, %v437
      %503 = vmatprep.subr.bf16.mxu0 0
      %504 = vmatpush1.bf16.msra.mxu0 %v439
      %505 = vmatprep.subr.bf16.mxu0 0
      %506 = vmatpush1.bf16.msra.mxu0 %v440
      %507 = vmatprep.subr.bf16.mxu0 0
      %508 = vmatpush1.bf16.msra.mxu0 %v441
      %509 = vmatprep.subr.bf16.mxu0 0
      %510 = vmatpush1.bf16.msra.mxu0 %v442
      %511 = vmatprep.subr.bf16.mxu0 0
      %512 = vmatpush1.bf16.msra.mxu0 %v443
      %513 = vmatprep.subr.bf16.mxu0 0
      %514 = vmatpush1.bf16.msra.mxu0 %v444
      %515 = vmatprep.subr.bf16.mxu0 0
      %516 = vmatpush1.bf16.msra.mxu0 %v445
      %517 = vmatprep.subr.bf16.mxu0 0
      %518 = vmatpush1.bf16.msra.mxu0 %v446
      %519 = vmatprep.subr.bf16.mxu0 0
      %520 = vmatpush1.bf16.msra.mxu0 %v447
      %521 = vmatprep.subr.bf16.mxu0 0
      %522 = vmatpush1.bf16.msra.mxu0 %v448
      %523 = vmatprep.subr.bf16.mxu0 0
      %524 = vmatpush1.bf16.msra.mxu0 %v449
      %525 = vmatprep.subr.bf16.mxu0 0
      %526 = vmatpush1.bf16.msra.mxu0 %v450
      %527 = vmatprep.subr.bf16.mxu0 0
      %528 = vmatpush1.bf16.msra.mxu0 %v451
      %529 = vmatprep.subr.bf16.mxu0 0
      %530 = vmatpush1.bf16.msra.mxu0 %v452
      %531 = vmatprep.subr.bf16.mxu0 0
      %532 = vmatpush1.bf16.msra.mxu0 %v453
      %533 = vmatprep.subr.bf16.mxu0 0
      %534 = vmatpush1.bf16.msra.mxu0 %v454
      %535 = vmatprep.mubr.bf16.mxu0 %v280
      %536 = vmatmul.mubr.bf16.gmra.mrb[0].mxu0 %v279
      %v537 = vpop.f32.mrb[0].mxu0
      %v538 = vadd.f32 0.0, %v537
      %v539 = vpop.f32.mrb[0].mxu0
      %v540 = vpop.f32.mrb[0].mxu0
      %v541 = vadd.f32 0.0, %v540
      %v542 = vpop.f32.mrb[0].mxu0
      %543 = vmatprep.mubr.bf16.mxu0 %v284
      %544 = vmatmul.mubr.bf16.gmra.mrb[0].mxu0 %v283
      %v545 = vpop.f32.mrb[0].mxu0
      %v546 = vadd.f32 0.0, %v545
      %v547 = vpop.f32.mrb[0].mxu0
      %v548 = vpop.f32.mrb[0].mxu0
      %v549 = vadd.f32 0.0, %v548
      %v550 = vpop.f32.mrb[0].mxu0
      %551 = vmatprep.mubr.bf16.mxu0 %v288
      %552 = vmatmul.mubr.bf16.gmra.mrb[0].mxu0 %v287
      %v553 = vpop.f32.mrb[0].mxu0
      %v554 = vadd.f32 0.0, %v553
      %v555 = vpop.f32.mrb[0].mxu0
      %v556 = vpop.f32.mrb[0].mxu0
      %v557 = vadd.f32 0.0, %v556
      %v558 = vpop.f32.mrb[0].mxu0
      %559 = vmatprep.mubr.bf16.mxu0 %v292
      %560 = vmatmul.mubr.bf16.gmra.mrb[0].mxu0 %v291
      %v561 = vpop.f32.mrb[0].mxu0
      %v562 = vadd.f32 0.0, %v561
      %v563 = vpop.f32.mrb[0].mxu0
      %v564 = vpop.f32.mrb[0].mxu0
      %v565 = vadd.f32 0.0, %v564
      %v566 = vpop.f32.mrb[0].mxu0
      %567 = vdwg.mxu0
      %568 = vmatprep.subr.bf16.mxu0 0
      %569 = vmatpush1.bf16.msra.mxu0 %v455
      %570 = vmatprep.subr.bf16.mxu0 0
      %571 = vmatpush1.bf16.msra.mxu0 %v456
      %572 = vmatprep.subr.bf16.mxu0 0
      %573 = vmatpush1.bf16.msra.mxu0 %v457
      %574 = vmatprep.subr.bf16.mxu0 0
      %575 = vmatpush1.bf16.msra.mxu0 %v458
      %576 = vmatprep.subr.bf16.mxu0 0
      %577 = vmatpush1.bf16.msra.mxu0 %v459
      %578 = vmatprep.subr.bf16.mxu0 0
      %579 = vmatpush1.bf16.msra.mxu0 %v460
      %580 = vmatprep.subr.bf16.mxu0 0
      %581 = vmatpush1.bf16.msra.mxu0 %v461
      %582 = vmatprep.subr.bf16.mxu0 0
      %583 = vmatpush1.bf16.msra.mxu0 %v462
      %584 = vmatprep.subr.bf16.mxu0 0
      %585 = vmatpush1.bf16.msra.mxu0 %v463
      %586 = vmatprep.subr.bf16.mxu0 0
      %587 = vmatpush1.bf16.msra.mxu0 %v464
      %588 = vmatprep.subr.bf16.mxu0 0
      %589 = vmatpush1.bf16.msra.mxu0 %v465
      %590 = vmatprep.subr.bf16.mxu0 0
      %591 = vmatpush1.bf16.msra.mxu0 %v466
      %592 = vmatprep.subr.bf16.mxu0 0
      %593 = vmatpush1.bf16.msra.mxu0 %v467
      %594 = vmatprep.subr.bf16.mxu0 0
      %595 = vmatpush1.bf16.msra.mxu0 %v468
      %596 = vmatprep.subr.bf16.mxu0 0
      %597 = vmatpush1.bf16.msra.mxu0 %v469
      %598 = vmatprep.subr.bf16.mxu0 0
      %599 = vmatpush1.bf16.msra.mxu0 %v470
      %600 = vmatprep.mubr.bf16.mxu0 %v282
      %601 = vmatmul.mubr.bf16.gmra.mrb[0].mxu0 %v281
      %v602 = vpop.f32.mrb[0].mxu0
      %v603 = vadd.f32 %v538, %v602
      %v604 = vpop.f32.mrb[0].mxu0
      %v605 = vpop.f32.mrb[0].mxu0
      %v606 = vadd.f32 %v541, %v605
      %v607 = vpop.f32.mrb[0].mxu0
      %608 = vmatprep.mubr.bf16.mxu0 %v286
      %609 = vmatmul.mubr.bf16.gmra.mrb[0].mxu0 %v285
      %v610 = vpop.f32.mrb[0].mxu0
      %v611 = vadd.f32 %v546, %v610
      %v612 = vpop.f32.mrb[0].mxu0
      %v613 = vpop.f32.mrb[0].mxu0
      %v614 = vadd.f32 %v549, %v613
      %v615 = vpop.f32.mrb[0].mxu0
      %616 = vmatprep.mubr.bf16.mxu0 %v290
      %617 = vmatmul.mubr.bf16.gmra.mrb[0].mxu0 %v289
      %v618 = vpop.f32.mrb[0].mxu0
      %v619 = vadd.f32 %v554, %v618
      %v620 = vpop.f32.mrb[0].mxu0
      %v621 = vpop.f32.mrb[0].mxu0
      %v622 = vadd.f32 %v557, %v621
      %v623 = vpop.f32.mrb[0].mxu0
      %624 = vmatprep.mubr.bf16.mxu0 %v294
      %625 = vmatmul.mubr.bf16.gmra.mrb[0].mxu0 %v293
      %v626 = vpop.f32.mrb[0].mxu0
      %v627 = vadd.f32 %v562, %v626
      %v628 = vpop.f32.mrb[0].mxu0
      %v629 = vpop.f32.mrb[0].mxu0
      %v630 = vadd.f32 %v565, %v629
      %v631 = vpop.f32.mrb[0].mxu0
      %632 = vdwg.mxu0
      %v633 = vpack.c.bf16 %v606, %v603
      %v634 = vpack.c.bf16 %v614, %v611
      %v635 = vpack.c.bf16 %v622, %v619
      %v636 = vpack.c.bf16 %v630, %v627
      %v641 = vunpack.c.l.b16 %v633
      %v642 = vunpack.c.h.b16 %v633
      %v643 = vunpack.c.l.b16 %v634
      %v644 = vunpack.c.h.b16 %v634
      %v645 = vunpack.c.l.b16 %v635
      %v646 = vunpack.c.h.b16 %v635
      %v647 = vunpack.c.l.b16 %v636
      %v648 = vunpack.c.h.b16 %v636
      %v649 = vpack.c.b16 %v641, %v641
      %v650 = vpack.c.b16 %v642, %v642
      %v651 = vpack.c.b16 %v643, %v643
      %v652 = vpack.c.b16 %v644, %v644
      %v653 = vpack.c.b16 %v645, %v645
      %v654 = vpack.c.b16 %v646, %v646
      %v655 = vpack.c.b16 %v647, %v647
      %v656 = vpack.c.b16 %v648, %v648
      %vm665 = vcmask 60416
      %666 = vst.msk [vmem:[%s148] sm:$0xf] %vm665, %v649
      %667 = vst.msk [vmem:[%s148 + $0x4] sm:$0xf] %vm665, %v650
      %668 = vst.msk [vmem:[%s148 + $0x8] sm:$0xf] %vm665, %v651
      %669 = vst.msk [vmem:[%s148 + $0xc] sm:$0xf] %vm665, %v652
      %670 = vst.msk [vmem:[%s148 + $0x10] sm:$0xf] %vm665, %v653
      %671 = vst.msk [vmem:[%s148 + $0x14] sm:$0xf] %vm665, %v654
      %672 = vst.msk [vmem:[%s148 + $0x18] sm:$0xf] %vm665, %v655
      %673 = vst.msk [vmem:[%s148 + $0x1c] sm:$0xf] %vm665, %v656
      %s674 = smul.u32 8, %s13
      %p675 = scmp.lt.s32.totalorder %s674, 15
      %s676 = scalar_select %p675, %s674, 15
      %s677 = smul.addr %s676, 4
      %s678 = scalar_lea.vmem %s2, %s677
      // Predicated region
      $region29: #{column_decoder_forward.4} parent=27 // pred_check
        %p679 = pneg %p78
      $region30: #{column_decoder_forward.4} parent=27 // pred_check_branch
        %681 = sbr.rel (%p679) target = $region32
      $region31: #{column_decoder_forward.4} parent=27 // pred_region
        %s682 = smul.u32 8, %s13
      $region32: #{column_decoder_forward.4} parent=27 // pred_fallthru
        _
    $region28: #{column_decoder_forward.4} parent=5 // pred_fallthru
      _
    %p683 = scmp.le.s32.totalorder 2, %s8
    // Predicated region
    $region33: #{column_decoder_forward.4} parent=5 // pred_check
      %p684 = pneg %p683
    $region34: #{column_decoder_forward.4} parent=5 // pred_check_branch
      %686 = sbr.rel (%p684) target = $region36
    $region35: #{column_decoder_forward.4} parent=5 // pred_region
      %s687 = ssub.s32 %s8, 2
      // Predicated region
      $region37: #{column_decoder_forward.4} parent=35 // pred_check
        %p688 = pneg %p84
      $region38: #{column_decoder_forward.4} parent=35 // pred_check_branch
        %690 = sbr.rel (%p688) target = $region40
      $region39: #{column_decoder_forward.4} parent=35 // pred_region
        %s691 = smul.u32 8, %s14
        %p692 = scmp.lt.s32.totalorder %s691, 15
        %s693 = scalar_select %p692, %s691, 15
        %s694 = smul.addr %s693, 4
        %s695 = scalar_lea.vmem %s2, %s694
      $region40: #{column_decoder_forward.4} parent=35 // pred_fallthru
        _
    $region36: #{column_decoder_forward.4} parent=5 // pred_fallthru
      _
  $region6: #{column_decoder_forward.4} parent=0 // loop_footer
    %s12 = sadd.s32 1, %s8
  $region7: #{column_decoder_forward.4} parent=0 // loop_footer_branch
    %7 = sbr.rel target = $region3
  $region8: #{column_decoder_forward.4} parent=0 // loop_exit
    _

// kernel: column_decoder_forward.5
$region0: #{column_decoder_forward.5}
  #allocation0 [shape = 'u32[]', space=smem, size = 0x4, offset = 0x4, fixed_abs, tag = 'smem constant byte address 0x4 - core index']
  #allocation1 [shape = 'u32[144,128]{1,0:T(1,128)}', space=vmem, size = 0x12000, scoped, tag = 'internal scratch']
  %s0 = inlined_call_operand.vmem [shape: bf16[512,256], index: 0, kind: input, shape index: {}]
  %s1 = inlined_call_operand.vmem [shape: bf16[2,4,16,8], index: 1, kind: input, shape index: {}]
  %s2 = inlined_call_operand.vmem [shape: bf16[2,8,16,8], index: 2, kind: input, shape index: {}]
  %s3 = inlined_call_operand.vmem [shape: bf16[256,128], index: 3, kind: input, shape index: {}]
  %s4 = inlined_call_operand.vmem [shape: f32[1,8], index: 4, kind: input, shape index: {}]
  %s5 = inlined_call_operand.vmem [shape: f32[2,16,16,8], index: 5, kind: output, shape index: {}]
  %s6 = sld [smem:[#allocation0]]
  $region53: #{column_decoder_forward.5} parent=0
    _
  %s8 = ssub.s32 1, %s6
  %s9 = scalar_select 0, %s8, %s6
  loop: start=0, step=1, limit=4
  $region2: #{column_decoder_forward.5} parent=0 // loop_pre_header
    _
  $region3: #{column_decoder_forward.5} parent=0 // loop_header
    %s11 = sphi 0, %s15
    %p12 = scmp.ge.s32.totalorder %s11, 4
    %s18 = sphi 0, %s30
    %s19 = sphi 0, %s26
    %s20 = sphi 0, %s18
    %s21 = sphi 0, %s19
    %s22 = sphi 0, %s20
    %s23 = sphi 0, %s21
    %s35 = sphi 0, %s37
    %s38 = sphi 0, %s35
    %s39 = sphi 0, %s38
    %s55 = sphi 0, %s39
    %s63 = sphi 0, %s65
    %s66 = sphi 0, %s63
    %s67 = sphi 0, %s66
    %s83 = sphi 0, %s67
    %s91 = sphi 0, %s93
    %s94 = sphi 0, %s91
    %s95 = sphi 0, %s94
    %s111 = sphi 0, %s95
    %s115 = sphi 0, %s115
    %s117 = sphi 0, %s115
    %s118 = sphi 0, %s117
    %s132 = sphi 0, %s118
    %s136 = sphi 0, %s136
    %s138 = sphi 0, %s136
    %s139 = sphi 0, %s138
    %s153 = sphi 0, %s139
    %s161 = sphi 0, %s163
    %s164 = sphi 0, %s161
    %s165 = sphi 0, %s164
    %s181 = sphi 0, %s165
  $region4: #{column_decoder_forward.5} parent=0 // loop_header_branch
    %14 = sbr.rel (%p12) target = $region8
  $region5: #{column_decoder_forward.5} parent=0 // loop_body
    %s16 = ssub.s32 %s11, 1
    %s17 = ssub.s32 %s11, 2
    %s24 = sadd.s32 1, %s19
    %p25 = scmp.ge.s32.totalorder %s24, 1
    %s26 = scalar_select %p25, 0, %s24
    %s27 = sadd.s32 1, %s18
    %s28 = scalar_select %p25, %s27, %s18
    %p29 = scmp.ge.s32.totalorder %s28, 2
    %s30 = scalar_select %p29, 0, %s28
    %s31 = sadd.s32 %s18, %s19
    %s32 = sadd.s32 %s30, %s26
    %s33 = ssub.s32 %s31, %s32
    %p34 = scmp.eq.s32.totalorder %s33, 0
    %s36 = sadd.s32 %s35, 1
    %s37 = scalar_select %p34, %s35, %s36
    %p40 = pneg %p34
    %p41 = scmp.eq.s32.totalorder %s11, 1
    %p42 = por %p40, %p41
    %p43 = scmp.ne.s32.totalorder %s35, %s38
    %p44 = scmp.eq.s32.totalorder %s11, 0
    %p45 = por %p43, %p44
    %p46 = scmp.ne.s32.totalorder %s35, %s38
    %p47 = scmp.eq.s32.totalorder %s16, 1
    %p48 = por %p46, %p47
    %p49 = scmp.ne.s32.totalorder %s38, %s39
    %p50 = scmp.eq.s32.totalorder %s16, 0
    %p51 = por %p49, %p50
    %p52 = scmp.ne.s32.totalorder %s38, %s39
    %p53 = scmp.eq.s32.totalorder %s17, 1
    %p54 = por %p52, %p53
    %p56 = scmp.ne.s32.totalorder %s39, %s55
    %p57 = scmp.eq.s32.totalorder %s17, 0
    %p58 = por %p56, %p57
    %s59 = ssub.s32 %s18, %s30
    %s60 = ssub.s32 %s19, %s26
    %s61 = sor.u32 %s59, %s60
    %p62 = scmp.eq.s32.totalorder %s61, 0
    %s64 = sadd.s32 %s63, 1
    %s65 = scalar_select %p62, %s63, %s64
    %p68 = pneg %p62
    %p69 = scmp.eq.s32.totalorder %s11, 1
    %p70 = por %p68, %p69
    %p71 = scmp.ne.s32.totalorder %s63, %s66
    %p72 = scmp.eq.s32.totalorder %s11, 0
    %p73 = por %p71, %p72
    %p74 = scmp.ne.s32.totalorder %s63, %s66
    %p75 = scmp.eq.s32.totalorder %s16, 1
    %p76 = por %p74, %p75
    %p77 = scmp.ne.s32.totalorder %s66, %s67
    %p78 = scmp.eq.s32.totalorder %s16, 0
    %p79 = por %p77, %p78
    %p80 = scmp.ne.s32.totalorder %s66, %s67
    %p81 = scmp.eq.s32.totalorder %s17, 1
    %p82 = por %p80, %p81
    %p84 = scmp.ne.s32.totalorder %s67, %s83
    %p85 = scmp.eq.s32.totalorder %s17, 0
    %p86 = por %p84, %p85
    %s87 = ssub.s32 %s18, %s30
    %s88 = ssub.s32 %s19, %s26
    %s89 = sor.u32 %s87, %s88
    %p90 = scmp.eq.s32.totalorder %s89, 0
    %s92 = sadd.s32 %s91, 1
    %s93 = scalar_select %p90, %s91, %s92
    %p96 = pneg %p90
    %p97 = scmp.eq.s32.totalorder %s11, 1
    %p98 = por %p96, %p97
    %p99 = scmp.ne.s32.totalorder %s91, %s94
    %p100 = scmp.eq.s32.totalorder %s11, 0
    %p101 = por %p99, %p100
    %p102 = scmp.ne.s32.totalorder %s91, %s94
    %p103 = scmp.eq.s32.totalorder %s16, 1
    %p104 = por %p102, %p103
    %p105 = scmp.ne.s32.totalorder %s94, %s95
    %p106 = scmp.eq.s32.totalorder %s16, 0
    %p107 = por %p105, %p106
    %p108 = scmp.ne.s32.totalorder %s94, %s95
    %p109 = scmp.eq.s32.totalorder %s17, 1
    %p110 = por %p108, %p109
    %p112 = scmp.ne.s32.totalorder %s95, %s111
    %p113 = scmp.eq.s32.totalorder %s17, 0
    %p114 = por %p112, %p113
    %s116 = sadd.s32 %s115, 1
    %p119 = scmp.eq.s32.totalorder %s11, 1
    %p120 = scmp.ne.s32.totalorder %s115, %s117
    %p121 = scmp.eq.s32.totalorder %s11, 0
    %p122 = por %p120, %p121
    %p123 = scmp.ne.s32.totalorder %s115, %s117
    %p124 = scmp.eq.s32.totalorder %s16, 1
    %p125 = por %p123, %p124
    %p126 = scmp.ne.s32.totalorder %s117, %s118
    %p127 = scmp.eq.s32.totalorder %s16, 0
    %p128 = por %p126, %p127
    %p129 = scmp.ne.s32.totalorder %s117, %s118
    %p130 = scmp.eq.s32.totalorder %s17, 1
    %p131 = por %p129, %p130
    %p133 = scmp.ne.s32.totalorder %s118, %s132
    %p134 = scmp.eq.s32.totalorder %s17, 0
    %p135 = por %p133, %p134
    %s137 = sadd.s32 %s136, 1
    %p140 = scmp.eq.s32.totalorder %s11, 1
    %p141 = scmp.ne.s32.totalorder %s136, %s138
    %p142 = scmp.eq.s32.totalorder %s11, 0
    %p143 = por %p141, %p142
    %p144 = scmp.ne.s32.totalorder %s136, %s138
    %p145 = scmp.eq.s32.totalorder %s16, 1
    %p146 = por %p144, %p145
    %p147 = scmp.ne.s32.totalorder %s138, %s139
    %p148 = scmp.eq.s32.totalorder %s16, 0
    %p149 = por %p147, %p148
    %p150 = scmp.ne.s32.totalorder %s138, %s139
    %p151 = scmp.eq.s32.totalorder %s17, 1
    %p152 = por %p150, %p151
    %p154 = scmp.ne.s32.totalorder %s139, %s153
    %p155 = scmp.eq.s32.totalorder %s17, 0
    %p156 = por %p154, %p155
    %s157 = ssub.s32 %s18, %s30
    %s158 = ssub.s32 %s19, %s26
    %s159 = sor.u32 %s157, %s158
    %p160 = scmp.eq.s32.totalorder %s159, 0
    %s162 = sadd.s32 %s161, 1
    %s163 = scalar_select %p160, %s161, %s162
    %p166 = pneg %p160
    %p167 = scmp.eq.s32.totalorder %s11, 1
    %p168 = por %p166, %p167
    %p169 = scmp.ne.s32.totalorder %s161, %s164
    %p170 = scmp.eq.s32.totalorder %s11, 0
    %p171 = por %p169, %p170
    %p172 = scmp.ne.s32.totalorder %s161, %s164
    %p173 = scmp.eq.s32.totalorder %s16, 1
    %p174 = por %p172, %p173
    %p175 = scmp.ne.s32.totalorder %s164, %s165
    %p176 = scmp.eq.s32.totalorder %s16, 0
    %p177 = por %p175, %p176
    %p178 = scmp.ne.s32.totalorder %s164, %s165
    %p179 = scmp.eq.s32.totalorder %s17, 1
    %p180 = por %p178, %p179
    %p182 = scmp.ne.s32.totalorder %s165, %s181
    %p183 = scmp.eq.s32.totalorder %s17, 0
    %p184 = por %p182, %p183
    %p185 = scmp.le.s32.totalorder 1, %s11
    %p186 = scmp.lt.s32.totalorder %s11, 3
    %p187 = pnand %p185, %p186
    %p188 = pneg %p187
    // Predicated region
    $region9: #{column_decoder_forward.5} parent=5 // pred_check
      _
    $region10: #{column_decoder_forward.5} parent=5 // pred_check_branch
      %190 = sbr.rel (%p187) target = $region12
    $region11: #{column_decoder_forward.5} parent=5 // pred_region
      %s191 = ssub.s32 %s11, 1
      // Predicated region
      $region13: #{column_decoder_forward.5} parent=11 // pred_check
        %p192 = pneg %p128
      $region14: #{column_decoder_forward.5} parent=11 // pred_check_branch
        %194 = sbr.rel (%p192) target = $region16
      $region15: #{column_decoder_forward.5} parent=11 // pred_region
        _
      $region16: #{column_decoder_forward.5} parent=11 // pred_fallthru
        _
      // Predicated region
      $region17: #{column_decoder_forward.5} parent=11 // pred_check
        %p195 = pneg %p149
      $region18: #{column_decoder_forward.5} parent=11 // pred_check_branch
        %197 = sbr.rel (%p195) target = $region20
      $region19: #{column_decoder_forward.5} parent=11 // pred_region
        _
      $region20: #{column_decoder_forward.5} parent=11 // pred_fallthru
        _
    $region12: #{column_decoder_forward.5} parent=5 // pred_fallthru
      _
    %p198 = scmp.lt.s32.totalorder %s11, 2
    // Predicated region
    $region21: #{column_decoder_forward.5} parent=5 // pred_check
      %p199 = pneg %p198
    $region22: #{column_decoder_forward.5} parent=5 // pred_check_branch
      %201 = sbr.rel (%p199) target = $region24
    $region23: #{column_decoder_forward.5} parent=5 // pred_region
      // Predicated region
      $region25: #{column_decoder_forward.5} parent=23 // pred_check
        %p202 = pneg %p45
      $region26: #{column_decoder_forward.5} parent=23 // pred_check_branch
        %204 = sbr.rel (%p202) target = $region28
      $region27: #{column_decoder_forward.5} parent=23 // pred_region
        %s205 = sadd.s32 %s18, %s19
        %s206 = smul.u32 32, %s205
        %p207 = scmp.lt.s32.totalorder %s206, 63
        %s208 = scalar_select %p207, %s206, 63
        %s209 = smul.addr %s208, 2
        %s210 = smul.addr %s209, 4
        %s211 = scalar_lea.vmem %s0, %s210
        %s212 = sadd.s32 %s18, %s19
        %s213 = smul.u32 32, %s212
      $region28: #{column_decoder_forward.5} parent=23 // pred_fallthru
        _
      // Predicated region
      $region29: #{column_decoder_forward.5} parent=23 // pred_check
        %p214 = pneg %p73
      $region30: #{column_decoder_forward.5} parent=23 // pred_check_branch
        %216 = sbr.rel (%p214) target = $region32
      $region31: #{column_decoder_forward.5} parent=23 // pred_region
        %s217 = smul.u32 4, %s19
        %p218 = scmp.lt.s32.totalorder %s18, 1
        %s219 = scalar_select %p218, %s18, 1
        %p220 = scmp.lt.s32.totalorder %s217, 3
        %s221 = scalar_select %p220, %s217, 3
        %s222 = smul.addr %s221, 2
        %s223 = smul.addr %s219, 8
        %s224 = sadd.s32 %s222, %s223
        %s225 = smul.addr %s224, 4
        %s226 = scalar_lea.vmem %s1, %s225
        %s227 = smul.u32 4, %s19
      $region32: #{column_decoder_forward.5} parent=23 // pred_fallthru
        _
      // Predicated region
      $region33: #{column_decoder_forward.5} parent=23 // pred_check
        %p228 = pneg %p101
      $region34: #{column_decoder_forward.5} parent=23 // pred_check_branch
        %230 = sbr.rel (%p228) target = $region36
      $region35: #{column_decoder_forward.5} parent=23 // pred_region
        %s231 = smul.u32 8, %s19
        %p232 = scmp.lt.s32.totalorder %s18, 1
        %s233 = scalar_select %p232, %s18, 1
        %p234 = scmp.lt.s32.totalorder %s231, 7
        %s235 = scalar_select %p234, %s231, 7
        %s236 = smul.addr %s235, 2
        %s237 = smul.addr %s233, 16
        %s238 = sadd.s32 %s236, %s237
        %s239 = smul.addr %s238, 4
        %s240 = scalar_lea.vmem %s2, %s239
        %s241 = smul.u32 8, %s19
      $region36: #{column_decoder_forward.5} parent=23 // pred_fallthru
        _
    $region24: #{column_decoder_forward.5} parent=5 // pred_fallthru
      _
    %p242 = scmp.le.s32.totalorder 1, %s11
    %p243 = scmp.lt.s32.totalorder %s11, 3
    %p244 = pnand %p242, %p243
    %p245 = pneg %p244
    // Predicated region
    $region37: #{column_decoder_forward.5} parent=5 // pred_check
      _
    $region38: #{column_decoder_forward.5} parent=5 // pred_check_branch
      %247 = sbr.rel (%p244) target = $region40
    $region39: #{column_decoder_forward.5} parent=5 // pred_region
      %s248 = ssub.s32 %s11, 1
      %s249 = sadd.s32 %s20, %s21
      %s250 = smul.u32 32, %s249
      %p251 = scmp.lt.s32.totalorder %s250, 63
      %s252 = scalar_select %p251, %s250, 63
      %s253 = smul.addr %s252, 2
      %s254 = smul.addr %s253, 4
      %s255 = scalar_lea.vmem %s0, %s254
      %p256 = pneg %p51
      %p257 = pneg %p48
      %s258 = smul.u32 4, %s21
      %p259 = scmp.lt.s32.totalorder %s20, 1
      %s260 = scalar_select %p259, %s20, 1
      %p261 = scmp.lt.s32.totalorder %s258, 3
      %s262 = scalar_select %p261, %s258, 3
      %s263 = smul.addr %s262, 2
      %s264 = smul.addr %s260, 8
      %s265 = sadd.s32 %s263, %s264
      %s266 = smul.addr %s265, 4
      %s267 = scalar_lea.vmem %s1, %s266
      %p268 = pneg %p79
      %p269 = pneg %p76
      %s270 = smul.u32 8, %s21
      %p271 = scmp.lt.s32.totalorder %s20, 1
      %s272 = scalar_select %p271, %s20, 1
      %p273 = scmp.lt.s32.totalorder %s270, 7
      %s274 = scalar_select %p273, %s270, 7
      %s275 = smul.addr %s274, 2
      %s276 = smul.addr %s272, 16
      %s277 = sadd.s32 %s275, %s276
      %s278 = smul.addr %s277, 4
      %s279 = scalar_lea.vmem %s2, %s278
      %p280 = pneg %p107
      %p281 = pneg %p104
      %p282 = pneg %p128
      %p283 = pneg %p125
      %p284 = pneg %p149
      %p285 = pneg %p146
      %p286 = pneg %p177
      %p287 = pneg %p174
      %s288 = smul.u32 16, %s21
      %p289 = scmp.lt.s32.totalorder %s20, 1
      %s290 = scalar_select %p289, %s20, 1
      %p291 = scmp.lt.s32.totalorder %s288, 15
      %s292 = scalar_select %p291, %s288, 15
      %s293 = smul.addr %s292, 2
      %s294 = smul.addr %s290, 32
      %s295 = sadd.s32 %s293, %s294
      %s296 = smul.addr %s295, 8
      %s297 = scalar_lea.vmem %s5, %s296
      %s298 = sadd.s32 %s20, %s21
      %s299 = smul.u32 32, %s298
      %p300 = scmp.lt.s32.totalorder %s299, 63
      %s301 = scalar_select %p300, %s299, 63
      %s302 = smul.addr %s301, 2
      %s303 = smul.addr %s302, 4
      %s304 = scalar_lea.vmem %s0, %s303
      %s305 = sadd.s32 %s20, %s21
      %s306 = smul.u32 32, %s305
      %s307 = smul.u32 4, %s21
      %p308 = scmp.lt.s32.totalorder %s20, 1
      %s309 = scalar_select %p308, %s20, 1
      %p310 = scmp.lt.s32.totalorder %s307, 3
      %s311 = scalar_select %p310, %s307, 3
      %s312 = smul.addr %s311, 2
      %s313 = smul.addr %s309, 8
      %s314 = sadd.s32 %s312, %s313
      %s315 = smul.addr %s314, 4
      %s316 = scalar_lea.vmem %s1, %s315
      %s317 = smul.u32 4, %s21
      %s318 = smul.u32 8, %s21
      %p319 = scmp.lt.s32.totalorder %s20, 1
      %s320 = scalar_select %p319, %s20, 1
      %p321 = scmp.lt.s32.totalorder %s318, 7
      %s322 = scalar_select %p321, %s318, 7
      %s323 = smul.addr %s322, 2
      %s324 = smul.addr %s320, 16
      %s325 = sadd.s32 %s323, %s324
      %s326 = smul.addr %s325, 4
      %s327 = scalar_lea.vmem %s2, %s326
      %s328 = smul.u32 8, %s21
      %s329 = smul.u32 16, %s21
      %p330 = scmp.lt.s32.totalorder %s20, 1
      %s331 = scalar_select %p330, %s20, 1
      %p332 = scmp.lt.s32.totalorder %s329, 15
      %s333 = scalar_select %p332, %s329, 15
      %s334 = smul.addr %s333, 2
      %s335 = smul.addr %s331, 32
      %s336 = sadd.s32 %s334, %s335
      %s337 = smul.addr %s336, 8
      %s338 = scalar_lea.vmem %s5, %s337
      %s339 = smul.u32 16, %s21
      %v341 = vld [vmem:[%s304] sm:$0xff]
      %v342 = vld [vmem:[%s304 + $0x8] sm:$0xff]
      %v343 = vld [vmem:[%s304 + $0x10] sm:$0xff]
      %v344 = vld [vmem:[%s304 + $0x18] sm:$0xff]
      %v345 = vld [vmem:[%s304 + $0x20] sm:$0xff]
      %v346 = vld [vmem:[%s304 + $0x28] sm:$0xff]
      %v347 = vld [vmem:[%s304 + $0x30] sm:$0xff]
      %v348 = vld [vmem:[%s304 + $0x38] sm:$0xff]
      %v349 = vld [vmem:[%s304 + $0x40] sm:$0xff]
      %v350 = vld [vmem:[%s304 + $0x48] sm:$0xff]
      %v351 = vld [vmem:[%s304 + $0x50] sm:$0xff]
      %v352 = vld [vmem:[%s304 + $0x58] sm:$0xff]
      %v353 = vld [vmem:[%s304 + $0x60] sm:$0xff]
      %v354 = vld [vmem:[%s304 + $0x68] sm:$0xff]
      %v355 = vld [vmem:[%s304 + $0x70] sm:$0xff]
      %v356 = vld [vmem:[%s304 + $0x78] sm:$0xff]
      %v357 = vld [vmem:[%s304 + $0x80] sm:$0xff]
      %v358 = vld [vmem:[%s304 + $0x88] sm:$0xff]
      %v359 = vld [vmem:[%s304 + $0x90] sm:$0xff]
      %v360 = vld [vmem:[%s304 + $0x98] sm:$0xff]
      %v361 = vld [vmem:[%s304 + $0xa0] sm:$0xff]
      %v362 = vld [vmem:[%s304 + $0xa8] sm:$0xff]
      %v363 = vld [vmem:[%s304 + $0xb0] sm:$0xff]
      %v364 = vld [vmem:[%s304 + $0xb8] sm:$0xff]
      %v365 = vld [vmem:[%s304 + $0xc0] sm:$0xff]
      %v366 = vld [vmem:[%s304 + $0xc8] sm:$0xff]
      %v367 = vld [vmem:[%s304 + $0xd0] sm:$0xff]
      %v368 = vld [vmem:[%s304 + $0xd8] sm:$0xff]
      %v369 = vld [vmem:[%s304 + $0xe0] sm:$0xff]
      %v370 = vld [vmem:[%s304 + $0xe8] sm:$0xff]
      %v371 = vld [vmem:[%s304 + $0xf0] sm:$0xff]
      %v372 = vld [vmem:[%s304 + $0xf8] sm:$0xff]
      %v373 = vld [vmem:[%s3] sm:$0xf]
      %v374 = vld [vmem:[%s3 + $0x4] sm:$0xf]
      %v375 = vld [vmem:[%s3 + $0x8] sm:$0xf]
      %v376 = vld [vmem:[%s3 + $0xc] sm:$0xf]
      %v377 = vld [vmem:[%s3 + $0x10] sm:$0xf]
      %v378 = vld [vmem:[%s3 + $0x14] sm:$0xf]
      %v379 = vld [vmem:[%s3 + $0x18] sm:$0xf]
      %v380 = vld [vmem:[%s3 + $0x1c] sm:$0xf]
      %v381 = vld [vmem:[%s3 + $0x20] sm:$0xf]
      %v382 = vld [vmem:[%s3 + $0x24] sm:$0xf]
      %v383 = vld [vmem:[%s3 + $0x28] sm:$0xf]
      %v384 = vld [vmem:[%s3 + $0x2c] sm:$0xf]
      %v385 = vld [vmem:[%s3 + $0x30] sm:$0xf]
      %v386 = vld [vmem:[%s3 + $0x34] sm:$0xf]
      %v387 = vld [vmem:[%s3 + $0x38] sm:$0xf]
      %v388 = vld [vmem:[%s3 + $0x3c] sm:$0xf]
      %v389 = vld [vmem:[%s3 + $0x40] sm:$0xf]
      %v390 = vld [vmem:[%s3 + $0x44] sm:$0xf]
      %v391 = vld [vmem:[%s3 + $0x48] sm:$0xf]
      %v392 = vld [vmem:[%s3 + $0x4c] sm:$0xf]
      %v393 = vld [vmem:[%s3 + $0x50] sm:$0xf]
      %v394 = vld [vmem:[%s3 + $0x54] sm:$0xf]
      %v395 = vld [vmem:[%s3 + $0x58] sm:$0xf]
      %v396 = vld [vmem:[%s3 + $0x5c] sm:$0xf]
      %v397 = vld [vmem:[%s3 + $0x60] sm:$0xf]
      %v398 = vld [vmem:[%s3 + $0x64] sm:$0xf]
      %v399 = vld [vmem:[%s3 + $0x68] sm:$0xf]
      %v400 = vld [vmem:[%s3 + $0x6c] sm:$0xf]
      %v401 = vld [vmem:[%s3 + $0x70] sm:$0xf]
      %v402 = vld [vmem:[%s3 + $0x74] sm:$0xf]
      %v403 = vld [vmem:[%s3 + $0x78] sm:$0xf]
      %v404 = vld [vmem:[%s3 + $0x7c] sm:$0xf]
      %v437 = vunpack.c.l.b16 %v341
      %v438 = vunpack.c.h.b16 %v341
      %v439 = vunpack.c.l.b16 %v342
      %v440 = vunpack.c.h.b16 %v342
      %v441 = vunpack.c.l.b16 %v343
      %v442 = vunpack.c.h.b16 %v343
      %v443 = vunpack.c.l.b16 %v344
      %v444 = vunpack.c.h.b16 %v344
      %v445 = vunpack.c.l.b16 %v345
      %v446 = vunpack.c.h.b16 %v345
      %v447 = vunpack.c.l.b16 %v346
      %v448 = vunpack.c.h.b16 %v346
      %v449 = vunpack.c.l.b16 %v347
      %v450 = vunpack.c.h.b16 %v347
      %v451 = vunpack.c.l.b16 %v348
      %v452 = vunpack.c.h.b16 %v348
      %v453 = vunpack.c.l.b16 %v349
      %v454 = vunpack.c.h.b16 %v349
      %v455 = vunpack.c.l.b16 %v350
      %v456 = vunpack.c.h.b16 %v350
      %v457 = vunpack.c.l.b16 %v351
      %v458 = vunpack.c.h.b16 %v351
      %v459 = vunpack.c.l.b16 %v352
      %v460 = vunpack.c.h.b16 %v352
      %v461 = vunpack.c.l.b16 %v353
      %v462 = vunpack.c.h.b16 %v353
      %v463 = vunpack.c.l.b16 %v354
      %v464 = vunpack.c.h.b16 %v354
      %v465 = vunpack.c.l.b16 %v355
      %v466 = vunpack.c.h.b16 %v355
      %v467 = vunpack.c.l.b16 %v356
      %v468 = vunpack.c.h.b16 %v356
      %v469 = vunpack.c.l.b16 %v357
      %v470 = vunpack.c.h.b16 %v357
      %v471 = vunpack.c.l.b16 %v358
      %v472 = vunpack.c.h.b16 %v358
      %v473 = vunpack.c.l.b16 %v359
      %v474 = vunpack.c.h.b16 %v359
      %v475 = vunpack.c.l.b16 %v360
      %v476 = vunpack.c.h.b16 %v360
      %v477 = vunpack.c.l.b16 %v361
      %v478 = vunpack.c.h.b16 %v361
      %v479 = vunpack.c.l.b16 %v362
      %v480 = vunpack.c.h.b16 %v362
      %v481 = vunpack.c.l.b16 %v363
      %v482 = vunpack.c.h.b16 %v363
      %v483 = vunpack.c.l.b16 %v364
      %v484 = vunpack.c.h.b16 %v364
      %v485 = vunpack.c.l.b16 %v365
      %v486 = vunpack.c.h.b16 %v365
      %v487 = vunpack.c.l.b16 %v366
      %v488 = vunpack.c.h.b16 %v366
      %v489 = vunpack.c.l.b16 %v367
      %v490 = vunpack.c.h.b16 %v367
      %v491 = vunpack.c.l.b16 %v368
      %v492 = vunpack.c.h.b16 %v368
      %v493 = vunpack.c.l.b16 %v369
      %v494 = vunpack.c.h.b16 %v369
      %v495 = vunpack.c.l.b16 %v370
      %v496 = vunpack.c.h.b16 %v370
      %v497 = vunpack.c.l.b16 %v371
      %v498 = vunpack.c.h.b16 %v371
      %v499 = vunpack.c.l.b16 %v372
      %v500 = vunpack.c.h.b16 %v372
      %v501 = vpack.c.b16 %v439, %v437
      %v502 = vpack.c.b16 %v440, %v438
      %v503 = vpack.c.b16 %v443, %v441
      %v504 = vpack.c.b16 %v444, %v442
      %v505 = vpack.c.b16 %v447, %v445
      %v506 = vpack.c.b16 %v448, %v446
      %v507 = vpack.c.b16 %v451, %v449
      %v508 = vpack.c.b16 %v452, %v450
      %v509 = vpack.c.b16 %v455, %v453
      %v510 = vpack.c.b16 %v456, %v454
      %v511 = vpack.c.b16 %v459, %v457
      %v512 = vpack.c.b16 %v460, %v458
      %v513 = vpack.c.b16 %v463, %v461
      %v514 = vpack.c.b16 %v464, %v462
      %v515 = vpack.c.b16 %v467, %v465
      %v516 = vpack.c.b16 %v468, %v466
      %v517 = vpack.c.b16 %v471, %v469
      %v518 = vpack.c.b16 %v472, %v470
      %v519 = vpack.c.b16 %v475, %v473
      %v520 = vpack.c.b16 %v476, %v474
      %v521 = vpack.c.b16 %v479, %v477
      %v522 = vpack.c.b16 %v480, %v478
      %v523 = vpack.c.b16 %v483, %v481
      %v524 = vpack.c.b16 %v484, %v482
      %v525 = vpack.c.b16 %v487, %v485
      %v526 = vpack.c.b16 %v488, %v486
      %v527 = vpack.c.b16 %v491, %v489
      %v528 = vpack.c.b16 %v492, %v490
      %v529 = vpack.c.b16 %v495, %v493
      %v530 = vpack.c.b16 %v496, %v494
      %v531 = vpack.c.b16 %v499, %v497
      %v532 = vpack.c.b16 %v500, %v498
      %v597 = vunpack.c.l.b16 %v373
      %v598 = vunpack.c.l.b16 %v374
      %v599 = vunpack.c.l.b16 %v375
      %v600 = vunpack.c.l.b16 %v376
      %v601 = vunpack.c.l.b16 %v377
      %v602 = vunpack.c.l.b16 %v378
      %v603 = vunpack.c.l.b16 %v379
      %v604 = vunpack.c.l.b16 %v380
      %v605 = vunpack.c.l.b16 %v381
      %v606 = vunpack.c.l.b16 %v382
      %v607 = vunpack.c.l.b16 %v383
      %v608 = vunpack.c.l.b16 %v384
      %v609 = vunpack.c.l.b16 %v385
      %v610 = vunpack.c.l.b16 %v386
      %v611 = vunpack.c.l.b16 %v387
      %v612 = vunpack.c.l.b16 %v388
      %v613 = vunpack.c.l.b16 %v389
      %v614 = vunpack.c.l.b16 %v390
      %v615 = vunpack.c.l.b16 %v391
      %v616 = vunpack.c.l.b16 %v392
      %v617 = vunpack.c.l.b16 %v393
      %v618 = vunpack.c.l.b16 %v394
      %v619 = vunpack.c.l.b16 %v395
      %v620 = vunpack.c.l.b16 %v396
      %v621 = vunpack.c.l.b16 %v397
      %v622 = vunpack.c.l.b16 %v398
      %v623 = vunpack.c.l.b16 %v399
      %v624 = vunpack.c.l.b16 %v400
      %v625 = vunpack.c.l.b16 %v401
      %v626 = vunpack.c.l.b16 %v402
      %v627 = vunpack.c.l.b16 %v403
      %v628 = vunpack.c.l.b16 %v404
      %v629 = vpack.c.b16 %v598, %v597
      %v630 = vpack.c.b16 %v600, %v599
      %v631 = vpack.c.b16 %v602, %v601
      %v632 = vpack.c.b16 %v604, %v603
      %v633 = vpack.c.b16 %v606, %v605
      %v634 = vpack.c.b16 %v608, %v607
      %v635 = vpack.c.b16 %v610, %v609
      %v636 = vpack.c.b16 %v612, %v611
      %v637 = vpack.c.b16 %v614, %v613
      %v638 = vpack.c.b16 %v616, %v615
      %v639 = vpack.c.b16 %v618, %v617
      %v640 = vpack.c.b16 %v620, %v619
      %v641 = vpack.c.b16 %v622, %v621
      %v642 = vpack.c.b16 %v624, %v623
      %v643 = vpack.c.b16 %v626, %v625
      %v644 = vpack.c.b16 %v628, %v627
      %661 = vmatprep.subr.bf16.mxu0 0
      %662 = vmatpush1.bf16.msra.mxu0 %v629
      %663 = vmatprep.subr.bf16.mxu0 0
      %664 = vmatpush1.bf16.msra.mxu0 %v630
      %665 = vmatprep.subr.bf16.mxu0 0
      %666 = vmatpush1.bf16.msra.mxu0 %v631
      %667 = vmatprep.subr.bf16.mxu0 0
      %668 = vmatpush1.bf16.msra.mxu0 %v632
      %669 = vmatprep.subr.bf16.mxu0 0
      %670 = vmatpush1.bf16.msra.mxu0 %v633
      %671 = vmatprep.subr.bf16.mxu0 0
      %672 = vmatpush1.bf16.msra.mxu0 %v634
      %673 = vmatprep.subr.bf16.mxu0 0
      %674 = vmatpush1.bf16.msra.mxu0 %v635
      %675 = vmatprep.subr.bf16.mxu0 0
      %676 = vmatpush1.bf16.msra.mxu0 %v636
      %677 = vmatprep.subr.bf16.mxu0 0
      %678 = vmatpush1.bf16.msra.mxu0 %v637
      %679 = vmatprep.subr.bf16.mxu0 0
      %680 = vmatpush1.bf16.msra.mxu0 %v638
      %681 = vmatprep.subr.bf16.mxu0 0
      %682 = vmatpush1.bf16.msra.mxu0 %v639
      %683 = vmatprep.subr.bf16.mxu0 0
      %684 = vmatpush1.bf16.msra.mxu0 %v640
      %685 = vmatprep.subr.bf16.mxu0 0
      %686 = vmatpush1.bf16.msra.mxu0 %v641
      %687 = vmatprep.subr.bf16.mxu0 0
      %688 = vmatpush1.bf16.msra.mxu0 %v642
      %689 = vmatprep.subr.bf16.mxu0 0
      %690 = vmatpush1.bf16.msra.mxu0 %v643
      %691 = vmatprep.subr.bf16.mxu0 0
      %692 = vmatpush1.bf16.msra.mxu0 %v644
      %693 = vmatprep.mubr.bf16.mxu0 %v502
      %694 = vmatmul.mubr.bf16.gmra.mrb[0].mxu0 %v501
      %v695 = vpop.f32.mrb[0].mxu0
      %v696 = vadd.f32 0.0, %v695
      %v697 = vpop.f32.mrb[0].mxu0
      %v698 = vpop.f32.mrb[0].mxu0
      %v699 = vadd.f32 0.0, %v698
      %v700 = vpop.f32.mrb[0].mxu0
      %701 = vmatprep.mubr.bf16.mxu0 %v504
      %702 = vmatmul.mubr.bf16.gmra.mrb[0].mxu0 %v503
      %v703 = vpop.f32.mrb[0].mxu0
      %v704 = vadd.f32 0.0, %v703
      %v705 = vpop.f32.mrb[0].mxu0
      %v706 = vpop.f32.mrb[0].mxu0
      %v707 = vadd.f32 0.0, %v706
      %v708 = vpop.f32.mrb[0].mxu0
      %709 = vmatprep.mubr.bf16.mxu0 %v506
      %710 = vmatmul.mubr.bf16.gmra.mrb[0].mxu0 %v505
      %v711 = vpop.f32.mrb[0].mxu0
      %v712 = vadd.f32 0.0, %v711
      %v713 = vpop.f32.mrb[0].mxu0
      %v714 = vpop.f32.mrb[0].mxu0
      %v715 = vadd.f32 0.0, %v714
      %v716 = vpop.f32.mrb[0].mxu0
      %717 = vmatprep.mubr.bf16.mxu0 %v508
      %718 = vmatmul.mubr.bf16.gmra.mrb[0].mxu0 %v507
      %v719 = vpop.f32.mrb[0].mxu0
      %v720 = vadd.f32 0.0, %v719
      %v721 = vpop.f32.mrb[0].mxu0
      %v722 = vpop.f32.mrb[0].mxu0
      %v723 = vadd.f32 0.0, %v722
      %v724 = vpop.f32.mrb[0].mxu0
      %725 = vmatprep.mubr.bf16.mxu0 %v510
      %726 = vmatmul.mubr.bf16.gmra.mrb[0].mxu0 %v509
      %v727 = vpop.f32.mrb[0].mxu0
      %v728 = vadd.f32 0.0, %v727
      %v729 = vpop.f32.mrb[0].mxu0
      %v730 = vpop.f32.mrb[0].mxu0
      %v731 = vadd.f32 0.0, %v730
      %v732 = vpop.f32.mrb[0].mxu0
      %733 = vmatprep.mubr.bf16.mxu0 %v512
      %734 = vmatmul.mubr.bf16.gmra.mrb[0].mxu0 %v511
      %v735 = vpop.f32.mrb[0].mxu0
      %v736 = vadd.f32 0.0, %v735
      %v737 = vpop.f32.mrb[0].mxu0
      %v738 = vpop.f32.mrb[0].mxu0
      %v739 = vadd.f32 0.0, %v738
      %v740 = vpop.f32.mrb[0].mxu0
      %741 = vmatprep.mubr.bf16.mxu0 %v514
      %742 = vmatmul.mubr.bf16.gmra.mrb[0].mxu0 %v513
      %v743 = vpop.f32.mrb[0].mxu0
      %v744 = vadd.f32 0.0, %v743
      %v745 = vpop.f32.mrb[0].mxu0
      %v746 = vpop.f32.mrb[0].mxu0
      %v747 = vadd.f32 0.0, %v746
      %v748 = vpop.f32.mrb[0].mxu0
      %749 = vmatprep.mubr.bf16.mxu0 %v516
      %750 = vmatmul.mubr.bf16.gmra.mrb[0].mxu0 %v515
      %v751 = vpop.f32.mrb[0].mxu0
      %v752 = vadd.f32 0.0, %v751
      %v753 = vpop.f32.mrb[0].mxu0
      %v754 = vpop.f32.mrb[0].mxu0
      %v755 = vadd.f32 0.0, %v754
      %v756 = vpop.f32.mrb[0].mxu0
      %757 = vmatprep.mubr.bf16.mxu0 %v518
      %758 = vmatmul.mubr.bf16.gmra.mrb[0].mxu0 %v517
      %v759 = vpop.f32.mrb[0].mxu0
      %v760 = vadd.f32 0.0, %v759
      %v761 = vpop.f32.mrb[0].mxu0
      %v762 = vpop.f32.mrb[0].mxu0
      %v763 = vadd.f32 0.0, %v762
      %v764 = vpop.f32.mrb[0].mxu0
      %765 = vmatprep.mubr.bf16.mxu0 %v520
      %766 = vmatmul.mubr.bf16.gmra.mrb[0].mxu0 %v519
      %v767 = vpop.f32.mrb[0].mxu0
      %v768 = vadd.f32 0.0, %v767
      %v769 = vpop.f32.mrb[0].mxu0
      %v770 = vpop.f32.mrb[0].mxu0
      %v771 = vadd.f32 0.0, %v770
      %v772 = vpop.f32.mrb[0].mxu0
      %773 = vmatprep.mubr.bf16.mxu0 %v522
      %774 = vmatmul.mubr.bf16.gmra.mrb[0].mxu0 %v521
      %v775 = vpop.f32.mrb[0].mxu0
      %v776 = vadd.f32 0.0, %v775
      %v777 = vpop.f32.mrb[0].mxu0
      %v778 = vpop.f32.mrb[0].mxu0
      %v779 = vadd.f32 0.0, %v778
      %v780 = vpop.f32.mrb[0].mxu0
      %781 = vmatprep.mubr.bf16.mxu0 %v524
      %782 = vmatmul.mubr.bf16.gmra.mrb[0].mxu0 %v523
      %v783 = vpop.f32.mrb[0].mxu0
      %v784 = vadd.f32 0.0, %v783
      %v785 = vpop.f32.mrb[0].mxu0
      %v786 = vpop.f32.mrb[0].mxu0
      %v787 = vadd.f32 0.0, %v786
      %v788 = vpop.f32.mrb[0].mxu0
      %789 = vmatprep.mubr.bf16.mxu0 %v526
      %790 = vmatmul.mubr.bf16.gmra.mrb[0].mxu0 %v525
      %v791 = vpop.f32.mrb[0].mxu0
      %v792 = vadd.f32 0.0, %v791
      %v793 = vpop.f32.mrb[0].mxu0
      %v794 = vpop.f32.mrb[0].mxu0
      %v795 = vadd.f32 0.0, %v794
      %v796 = vpop.f32.mrb[0].mxu0
      %797 = vmatprep.mubr.bf16.mxu0 %v528
      %798 = vmatmul.mubr.bf16.gmra.mrb[0].mxu0 %v527
      %v799 = vpop.f32.mrb[0].mxu0
      %v800 = vadd.f32 0.0, %v799
      %v801 = vpop.f32.mrb[0].mxu0
      %v802 = vpop.f32.mrb[0].mxu0
      %v803 = vadd.f32 0.0, %v802
      %v804 = vpop.f32.mrb[0].mxu0
      %805 = vmatprep.mubr.bf16.mxu0 %v530
      %806 = vmatmul.mubr.bf16.gmra.mrb[0].mxu0 %v529
      %v807 = vpop.f32.mrb[0].mxu0
      %v808 = vadd.f32 0.0, %v807
      %v809 = vpop.f32.mrb[0].mxu0
      %v810 = vpop.f32.mrb[0].mxu0
      %v811 = vadd.f32 0.0, %v810
      %v812 = vpop.f32.mrb[0].mxu0
      %813 = vmatprep.mubr.bf16.mxu0 %v532
      %814 = vmatmul.mubr.bf16.gmra.mrb[0].mxu0 %v531
      %v815 = vpop.f32.mrb[0].mxu0
      %v816 = vadd.f32 0.0, %v815
      %v817 = vpop.f32.mrb[0].mxu0
      %v818 = vpop.f32.mrb[0].mxu0
      %v819 = vadd.f32 0.0, %v818
      %v820 = vpop.f32.mrb[0].mxu0
      %821 = vdwg.mxu0
      %v822 = vld [vmem:[%s316] sm:$0xf]
      %v823 = vld [vmem:[%s316 + $0x4] sm:$0xf]
      %v824 = vld [vmem:[%s316 + $0x8] sm:$0xf]
      %v825 = vld [vmem:[%s316 + $0xc] sm:$0xf]
      %v826 = vld [vmem:[%s316 + $0x10] sm:$0xf]
      %v827 = vld [vmem:[%s316 + $0x14] sm:$0xf]
      %v828 = vld [vmem:[%s316 + $0x18] sm:$0xf]
      %v829 = vld [vmem:[%s316 + $0x1c] sm:$0xf]
      %v830 = vunpack.c.l.bf16 %v822
      %v831 = vunpack.c.l.bf16 %v823
      %v832 = vunpack.c.l.bf16 %v824
      %v833 = vunpack.c.l.bf16 %v825
      %v834 = vunpack.c.l.bf16 %v826
      %v835 = vunpack.c.l.bf16 %v827
      %v836 = vunpack.c.l.bf16 %v828
      %v837 = vunpack.c.l.bf16 %v829
      %v838 = vld [vmem:[%s327] sm:$0xf]
      %v839 = vld [vmem:[%s327 + $0x4] sm:$0xf]
      %v840 = vld [vmem:[%s327 + $0x8] sm:$0xf]
      %v841 = vld [vmem:[%s327 + $0xc] sm:$0xf]
      %v842 = vld [vmem:[%s327 + $0x10] sm:$0xf]
      %v843 = vld [vmem:[%s327 + $0x14] sm:$0xf]
      %v844 = vld [vmem:[%s327 + $0x18] sm:$0xf]
      %v845 = vld [vmem:[%s327 + $0x1c] sm:$0xf]
      %v846 = vld [vmem:[%s327 + $0x20] sm:$0xf]
      %v847 = vld [vmem:[%s327 + $0x24] sm:$0xf]
      %v848 = vld [vmem:[%s327 + $0x28] sm:$0xf]
      %v849 = vld [vmem:[%s327 + $0x2c] sm:$0xf]
      %v850 = vld [vmem:[%s327 + $0x30] sm:$0xf]
      %v851 = vld [vmem:[%s327 + $0x34] sm:$0xf]
      %v852 = vld [vmem:[%s327 + $0x38] sm:$0xf]
      %v853 = vld [vmem:[%s327 + $0x3c] sm:$0xf]
      %v854 = vunpack.c.l.bf16 %v838
      %v855 = vunpack.c.l.bf16 %v839
      %v856 = vunpack.c.l.bf16 %v840
      %v857 = vunpack.c.l.bf16 %v841
      %v858 = vunpack.c.l.bf16 %v842
      %v859 = vunpack.c.l.bf16 %v843
      %v860 = vunpack.c.l.bf16 %v844
      %v861 = vunpack.c.l.bf16 %v845
      %v862 = vunpack.c.l.bf16 %v846
      %v863 = vunpack.c.l.bf16 %v847
      %v864 = vunpack.c.l.bf16 %v848
      %v865 = vunpack.c.l.bf16 %v849
      %v866 = vunpack.c.l.bf16 %v850
      %v867 = vunpack.c.l.bf16 %v851
      %v868 = vunpack.c.l.bf16 %v852
      %v869 = vunpack.c.l.bf16 %v853
      %v870 = vadd.f32 %v696, %v830
      %v871 = vadd.f32 %v699, %v831
      %v872 = vadd.f32 %v704, %v830
      %v873 = vadd.f32 %v707, %v831
      %v874 = vadd.f32 %v712, %v830
      %v875 = vadd.f32 %v715, %v831
      %v876 = vadd.f32 %v720, %v830
      %v877 = vadd.f32 %v723, %v831
      %v878 = vadd.f32 %v728, %v832
      %v879 = vadd.f32 %v731, %v833
      %v880 = vadd.f32 %v736, %v832
      %v881 = vadd.f32 %v739, %v833
      %v882 = vadd.f32 %v744, %v832
      %v883 = vadd.f32 %v747, %v833
      %v884 = vadd.f32 %v752, %v832
      %v885 = vadd.f32 %v755, %v833
      %v886 = vadd.f32 %v760, %v834
      %v887 = vadd.f32 %v763, %v835
      %v888 = vadd.f32 %v768, %v834
      %v889 = vadd.f32 %v771, %v835
      %v890 = vadd.f32 %v776, %v834
      %v891 = vadd.f32 %v779, %v835
      %v892 = vadd.f32 %v784, %v834
      %v893 = vadd.f32 %v787, %v835
      %v894 = vadd.f32 %v792, %v836
      %v895 = vadd.f32 %v795, %v837
      %v896 = vadd.f32 %v800, %v836
      %v897 = vadd.f32 %v803, %v837
      %v898 = vadd.f32 %v808, %v836
      %v899 = vadd.f32 %v811, %v837
      %v900 = vadd.f32 %v816, %v836
      %v901 = vadd.f32 %v819, %v837
      %v902 = vadd.f32 %v870, %v854
      %v903 = vadd.f32 %v871, %v855
      %v904 = vadd.f32 %v872, %v854
      %v905 = vadd.f32 %v873, %v855
      %v906 = vadd.f32 %v874, %v856
      %v907 = vadd.f32 %v875, %v857
      %v908 = vadd.f32 %v876, %v856
      %v909 = vadd.f32 %v877, %v857
      %v910 = vadd.f32 %v878, %v858
      %v911 = vadd.f32 %v879, %v859
      %v912 = vadd.f32 %v880, %v858
      %v913 = vadd.f32 %v881, %v859
      %v914 = vadd.f32 %v882, %v860
      %v915 = vadd.f32 %v883, %v861
      %v916 = vadd.f32 %v884, %v860
      %v917 = vadd.f32 %v885, %v861
      %v918 = vadd.f32 %v886, %v862
      %v919 = vadd.f32 %v887, %v863
      %v920 = vadd.f32 %v888, %v862
      %v921 = vadd.f32 %v889, %v863
      %v922 = vadd.f32 %v890, %v864
      %v923 = vadd.f32 %v891, %v865
      %v924 = vadd.f32 %v892, %v864
      %v925 = vadd.f32 %v893, %v865
      %v926 = vadd.f32 %v894, %v866
      %v927 = vadd.f32 %v895, %v867
      %v928 = vadd.f32 %v896, %v866
      %v929 = vadd.f32 %v897, %v867
      %v930 = vadd.f32 %v898, %v868
      %v931 = vadd.f32 %v899, %v869
      %v932 = vadd.f32 %v900, %v868
      %v933 = vadd.f32 %v901, %v869
      %v934 = vld [vmem:[%s4] sm:$0x1]
      %v936 = vlaneseq
      %v937 = vshrl.u32 %v936, 7
      %v938 = vsub.s32 0, %v937
      %v939 = vrot.slane %v934, %v938
      %v941 = vadd.f32 %v902, %v939
      %v942 = vadd.f32 %v903, %v939
      %v943 = vadd.f32 %v904, %v939
      %v944 = vadd.f32 %v905, %v939
      %v945 = vadd.f32 %v906, %v939
      %v946 = vadd.f32 %v907, %v939
      %v947 = vadd.f32 %v908, %v939
      %v948 = vadd.f32 %v909, %v939
      %v949 = vadd.f32 %v910, %v939
      %v950 = vadd.f32 %v911, %v939
      %v951 = vadd.f32 %v912, %v939
      %v952 = vadd.f32 %v913, %v939
      %v953 = vadd.f32 %v914, %v939
      %v954 = vadd.f32 %v915, %v939
      %v955 = vadd.f32 %v916, %v939
      %v956 = vadd.f32 %v917, %v939
      %v957 = vadd.f32 %v918, %v939
      %v958 = vadd.f32 %v919, %v939
      %v959 = vadd.f32 %v920, %v939
      %v960 = vadd.f32 %v921, %v939
      %v961 = vadd.f32 %v922, %v939
      %v962 = vadd.f32 %v923, %v939
      %v963 = vadd.f32 %v924, %v939
      %v964 = vadd.f32 %v925, %v939
      %v965 = vadd.f32 %v926, %v939
      %v966 = vadd.f32 %v927, %v939
      %v967 = vadd.f32 %v928, %v939
      %v968 = vadd.f32 %v929, %v939
      %v969 = vadd.f32 %v930, %v939
      %v970 = vadd.f32 %v931, %v939
      %v971 = vadd.f32 %v932, %v939
      %v972 = vadd.f32 %v933, %v939
      %vm973 = vcmask 64512
      %974 = vst.msk [vmem:[%s338] sm:$0xff] %vm973, %v941
      %975 = vst.msk [vmem:[%s338 + $0x8] sm:$0xff] %vm973, %v942
      %976 = vst.msk [vmem:[%s338 + $0x10] sm:$0xff] %vm973, %v943
      %977 = vst.msk [vmem:[%s338 + $0x18] sm:$0xff] %vm973, %v944
      %978 = vst.msk [vmem:[%s338 + $0x20] sm:$0xff] %vm973, %v945
      %979 = vst.msk [vmem:[%s338 + $0x28] sm:$0xff] %vm973, %v946
      %980 = vst.msk [vmem:[%s338 + $0x30] sm:$0xff] %vm973, %v947
      %981 = vst.msk [vmem:[%s338 + $0x38] sm:$0xff] %vm973, %v948
      %982 = vst.msk [vmem:[%s338 + $0x40] sm:$0xff] %vm973, %v949
      %983 = vst.msk [vmem:[%s338 + $0x48] sm:$0xff] %vm973, %v950
      %984 = vst.msk [vmem:[%s338 + $0x50] sm:$0xff] %vm973, %v951
      %985 = vst.msk [vmem:[%s338 + $0x58] sm:$0xff] %vm973, %v952
      %986 = vst.msk [vmem:[%s338 + $0x60] sm:$0xff] %vm973, %v953
      %987 = vst.msk [vmem:[%s338 + $0x68] sm:$0xff] %vm973, %v954
      %988 = vst.msk [vmem:[%s338 + $0x70] sm:$0xff] %vm973, %v955
      %989 = vst.msk [vmem:[%s338 + $0x78] sm:$0xff] %vm973, %v956
      %990 = vst.msk [vmem:[%s338 + $0x80] sm:$0xff] %vm973, %v957
      %991 = vst.msk [vmem:[%s338 + $0x88] sm:$0xff] %vm973, %v958
      %992 = vst.msk [vmem:[%s338 + $0x90] sm:$0xff] %vm973, %v959
      %993 = vst.msk [vmem:[%s338 + $0x98] sm:$0xff] %vm973, %v960
      %994 = vst.msk [vmem:[%s338 + $0xa0] sm:$0xff] %vm973, %v961
      %995 = vst.msk [vmem:[%s338 + $0xa8] sm:$0xff] %vm973, %v962
      %996 = vst.msk [vmem:[%s338 + $0xb0] sm:$0xff] %vm973, %v963
      %997 = vst.msk [vmem:[%s338 + $0xb8] sm:$0xff] %vm973, %v964
      %998 = vst.msk [vmem:[%s338 + $0xc0] sm:$0xff] %vm973, %v965
      %999 = vst.msk [vmem:[%s338 + $0xc8] sm:$0xff] %vm973, %v966
      %1000 = vst.msk [vmem:[%s338 + $0xd0] sm:$0xff] %vm973, %v967
      %1001 = vst.msk [vmem:[%s338 + $0xd8] sm:$0xff] %vm973, %v968
      %1002 = vst.msk [vmem:[%s338 + $0xe0] sm:$0xff] %vm973, %v969
      %1003 = vst.msk [vmem:[%s338 + $0xe8] sm:$0xff] %vm973, %v970
      %1004 = vst.msk [vmem:[%s338 + $0xf0] sm:$0xff] %vm973, %v971
      %1005 = vst.msk [vmem:[%s338 + $0xf8] sm:$0xff] %vm973, %v972
      %s1006 = smul.u32 16, %s21
      %p1007 = scmp.lt.s32.totalorder %s20, 1
      %s1008 = scalar_select %p1007, %s20, 1
      %p1009 = scmp.lt.s32.totalorder %s1006, 15
      %s1010 = scalar_select %p1009, %s1006, 15
      %s1011 = smul.addr %s1010, 2
      %s1012 = smul.addr %s1008, 32
      %s1013 = sadd.s32 %s1011, %s1012
      %s1014 = smul.addr %s1013, 8
      %s1015 = scalar_lea.vmem %s5, %s1014
      // Predicated region
      $region41: #{column_decoder_forward.5} parent=39 // pred_check
        %p1016 = pneg %p174
      $region42: #{column_decoder_forward.5} parent=39 // pred_check_branch
        %1018 = sbr.rel (%p1016) target = $region44
      $region43: #{column_decoder_forward.5} parent=39 // pred_region
        %s1019 = smul.u32 16, %s21
      $region44: #{column_decoder_forward.5} parent=39 // pred_fallthru
        _
    $region40: #{column_decoder_forward.5} parent=5 // pred_fallthru
      _
    %p1020 = scmp.le.s32.totalorder 2, %s11
    // Predicated region
    $region45: #{column_decoder_forward.5} parent=5 // pred_check
      %p1021 = pneg %p1020
    $region46: #{column_decoder_forward.5} parent=5 // pred_check_branch
      %1023 = sbr.rel (%p1021) target = $region48
    $region47: #{column_decoder_forward.5} parent=5 // pred_region
      %s1024 = ssub.s32 %s11, 2
      // Predicated region
      $region49: #{column_decoder_forward.5} parent=47 // pred_check
        %p1025 = pneg %p180
      $region50: #{column_decoder_forward.5} parent=47 // pred_check_branch
        %1027 = sbr.rel (%p1025) target = $region52
      $region51: #{column_decoder_forward.5} parent=47 // pred_region
        %s1028 = smul.u32 16, %s23
        %p1029 = scmp.lt.s32.totalorder %s22, 1
        %s1030 = scalar_select %p1029, %s22, 1
        %p1031 = scmp.lt.s32.totalorder %s1028, 15
        %s1032 = scalar_select %p1031, %s1028, 15
        %s1033 = smul.addr %s1032, 2
        %s1034 = smul.addr %s1030, 32
        %s1035 = sadd.s32 %s1033, %s1034
        %s1036 = smul.addr %s1035, 8
        %s1037 = scalar_lea.vmem %s5, %s1036
      $region52: #{column_decoder_forward.5} parent=47 // pred_fallthru
        _
    $region48: #{column_decoder_forward.5} parent=5 // pred_fallthru
      _
  $region6: #{column_decoder_forward.5} parent=0 // loop_footer
    %s15 = sadd.s32 1, %s11
  $region7: #{column_decoder_forward.5} parent=0 // loop_footer_branch
    %10 = sbr.rel target = $region3
  $region8: #{column_decoder_forward.5} parent=0 // loop_exit
    _

// kernel: column_decoder_forward.3
$region0: #{column_decoder_forward.3}
  #allocation0 [shape = 'u32[]', space=smem, size = 0x4, offset = 0x4, fixed_abs, tag = 'smem constant byte address 0x4 - core index']
  #allocation1 [shape = 'u32[144,128]{1,0:T(1,128)}', space=vmem, size = 0x12000, scoped, tag = 'internal scratch']
  %s0 = inlined_call_operand.vmem [shape: bf16[32,512], index: 0, kind: input, shape index: {}]
  %s1 = inlined_call_operand.vmem [shape: bf16[512,512], index: 1, kind: input, shape index: {}]
  %s2 = inlined_call_operand.hbm [shape: f32[1,512], index: 2, kind: input, shape index: {}]
  %s3 = inlined_call_operand.vmem [shape: bf16[512,512], index: 3, kind: input, shape index: {}]
  %s4 = inlined_call_operand.hbm [shape: f32[1,512], index: 4, kind: input, shape index: {}]
  %s5 = inlined_call_operand.vmem [shape: bf16[512,128], index: 5, kind: input, shape index: {}]
  %s6 = inlined_call_operand.vmem [shape: bf16[32,8], index: 6, kind: output, shape index: {}]
  %s7 = sld [smem:[#allocation0]]
  $region65: #{column_decoder_forward.3} parent=0
    _
  %s9 = ssub.s32 1, %s7
  %s10 = scalar_select 0, %s9, %s7
  $region1: #{column_decoder_forward.3} parent=0
    #allocation2 [shape = 'u8[2048]{0}', space=vmem, size = 0x800, scoped, tag = 'input window, operand 2, single buffered']
    #allocation3 [shape = 's32[2]{0}', space=sflag, size = 0x8, scoped, tag = 'scoped memory for column_decoder_forward.3']
    #allocation4 [shape = 'u8[2048]{0}', space=vmem, size = 0x800, scoped, tag = 'input window, operand 4, single buffered']
    #allocation5 [shape = 's32[1]{0}', space=sflag, size = 0x4, scoped, tag = 'scoped memory for column_decoder_forward.3']
    %11 = vsyncpa [#allocation3], 0
    %12 = vsyncpa [#allocation5], 0
    loop: start=0, step=1, limit=4
    $region2: #{column_decoder_forward.3} parent=1 // loop_pre_header
      _
    $region3: #{column_decoder_forward.3} parent=1 // loop_header
      %s14 = sphi 0, %s18
      %p15 = scmp.ge.s32.totalorder %s14, 4
      %s24 = sphi 0, %s26
      %s27 = sphi 0, %s24
      %s28 = sphi 0, %s27
      %s44 = sphi 0, %s28
      %s48 = sphi 0, %s48
      %s50 = sphi 0, %s48
      %s51 = sphi 0, %s50
      %s65 = sphi 0, %s51
      %s69 = sphi 0, %s69
      %s71 = sphi 0, %s69
      %s72 = sphi 0, %s71
      %s86 = sphi 0, %s72
      %s90 = sphi 0, %s90
      %s92 = sphi 0, %s90
      %s93 = sphi 0, %s92
      %s107 = sphi 0, %s93
      %s111 = sphi 0, %s111
      %s113 = sphi 0, %s111
      %s114 = sphi 0, %s113
      %s128 = sphi 0, %s114
      %s132 = sphi 0, %s132
      %s134 = sphi 0, %s132
      %s135 = sphi 0, %s134
      %s149 = sphi 0, %s135
      %s155 = sphi 0, %s157
      %s158 = sphi 0, %s155
      %s159 = sphi 0, %s158
      %s175 = sphi 0, %s159
    $region4: #{column_decoder_forward.3} parent=1 // loop_header_branch
      %17 = sbr.rel (%p15) target = $region8
    $region5: #{column_decoder_forward.3} parent=1 // loop_body
      %s19 = ssub.s32 %s14, 1
      %s20 = ssub.s32 %s14, 2
      %s21 = sadd.s32 %s14, 1
      %s22 = ssub.s32 %s14, %s21
      %p23 = scmp.eq.s32.totalorder %s22, 0
      %s25 = sadd.s32 %s24, 1
      %s26 = scalar_select %p23, %s24, %s25
      %p29 = pneg %p23
      %p30 = scmp.eq.s32.totalorder %s14, 1
      %p31 = por %p29, %p30
      %p32 = scmp.ne.s32.totalorder %s24, %s27
      %p33 = scmp.eq.s32.totalorder %s14, 0
      %p34 = por %p32, %p33
      %p35 = scmp.ne.s32.totalorder %s24, %s27
      %p36 = scmp.eq.s32.totalorder %s19, 1
      %p37 = por %p35, %p36
      %p38 = scmp.ne.s32.totalorder %s27, %s28
      %p39 = scmp.eq.s32.totalorder %s19, 0
      %p40 = por %p38, %p39
      %p41 = scmp.ne.s32.totalorder %s27, %s28
      %p42 = scmp.eq.s32.totalorder %s20, 1
      %p43 = por %p41, %p42
      %p45 = scmp.ne.s32.totalorder %s28, %s44
      %p46 = scmp.eq.s32.totalorder %s20, 0
      %p47 = por %p45, %p46
      %s49 = sadd.s32 %s48, 1
      %p52 = scmp.eq.s32.totalorder %s14, 1
      %p53 = scmp.ne.s32.totalorder %s48, %s50
      %p54 = scmp.eq.s32.totalorder %s14, 0
      %p55 = por %p53, %p54
      %p56 = scmp.ne.s32.totalorder %s48, %s50
      %p57 = scmp.eq.s32.totalorder %s19, 1
      %p58 = por %p56, %p57
      %p59 = scmp.ne.s32.totalorder %s50, %s51
      %p60 = scmp.eq.s32.totalorder %s19, 0
      %p61 = por %p59, %p60
      %p62 = scmp.ne.s32.totalorder %s50, %s51
      %p63 = scmp.eq.s32.totalorder %s20, 1
      %p64 = por %p62, %p63
      %p66 = scmp.ne.s32.totalorder %s51, %s65
      %p67 = scmp.eq.s32.totalorder %s20, 0
      %p68 = por %p66, %p67
      %s70 = sadd.s32 %s69, 1
      %p73 = scmp.eq.s32.totalorder %s14, 1
      %p74 = scmp.ne.s32.totalorder %s69, %s71
      %p75 = scmp.eq.s32.totalorder %s14, 0
      %p76 = por %p74, %p75
      %p77 = scmp.ne.s32.totalorder %s69, %s71
      %p78 = scmp.eq.s32.totalorder %s19, 1
      %p79 = por %p77, %p78
      %p80 = scmp.ne.s32.totalorder %s71, %s72
      %p81 = scmp.eq.s32.totalorder %s19, 0
      %p82 = por %p80, %p81
      %p83 = scmp.ne.s32.totalorder %s71, %s72
      %p84 = scmp.eq.s32.totalorder %s20, 1
      %p85 = por %p83, %p84
      %p87 = scmp.ne.s32.totalorder %s72, %s86
      %p88 = scmp.eq.s32.totalorder %s20, 0
      %p89 = por %p87, %p88
      %s91 = sadd.s32 %s90, 1
      %p94 = scmp.eq.s32.totalorder %s14, 1
      %p95 = scmp.ne.s32.totalorder %s90, %s92
      %p96 = scmp.eq.s32.totalorder %s14, 0
      %p97 = por %p95, %p96
      %p98 = scmp.ne.s32.totalorder %s90, %s92
      %p99 = scmp.eq.s32.totalorder %s19, 1
      %p100 = por %p98, %p99
      %p101 = scmp.ne.s32.totalorder %s92, %s93
      %p102 = scmp.eq.s32.totalorder %s19, 0
      %p103 = por %p101, %p102
      %p104 = scmp.ne.s32.totalorder %s92, %s93
      %p105 = scmp.eq.s32.totalorder %s20, 1
      %p106 = por %p104, %p105
      %p108 = scmp.ne.s32.totalorder %s93, %s107
      %p109 = scmp.eq.s32.totalorder %s20, 0
      %p110 = por %p108, %p109
      %s112 = sadd.s32 %s111, 1
      %p115 = scmp.eq.s32.totalorder %s14, 1
      %p116 = scmp.ne.s32.totalorder %s111, %s113
      %p117 = scmp.eq.s32.totalorder %s14, 0
      %p118 = por %p116, %p117
      %p119 = scmp.ne.s32.totalorder %s111, %s113
      %p120 = scmp.eq.s32.totalorder %s19, 1
      %p121 = por %p119, %p120
      %p122 = scmp.ne.s32.totalorder %s113, %s114
      %p123 = scmp.eq.s32.totalorder %s19, 0
      %p124 = por %p122, %p123
      %p125 = scmp.ne.s32.totalorder %s113, %s114
      %p126 = scmp.eq.s32.totalorder %s20, 1
      %p127 = por %p125, %p126
      %p129 = scmp.ne.s32.totalorder %s114, %s128
      %p130 = scmp.eq.s32.totalorder %s20, 0
      %p131 = por %p129, %p130
      %s133 = sadd.s32 %s132, 1
      %p136 = scmp.eq.s32.totalorder %s14, 1
      %p137 = scmp.ne.s32.totalorder %s132, %s134
      %p138 = scmp.eq.s32.totalorder %s14, 0
      %p139 = por %p137, %p138
      %p140 = scmp.ne.s32.totalorder %s132, %s134
      %p141 = scmp.eq.s32.totalorder %s19, 1
      %p142 = por %p140, %p141
      %p143 = scmp.ne.s32.totalorder %s134, %s135
      %p144 = scmp.eq.s32.totalorder %s19, 0
      %p145 = por %p143, %p144
      %p146 = scmp.ne.s32.totalorder %s134, %s135
      %p147 = scmp.eq.s32.totalorder %s20, 1
      %p148 = por %p146, %p147
      %p150 = scmp.ne.s32.totalorder %s135, %s149
      %p151 = scmp.eq.s32.totalorder %s20, 0
      %p152 = por %p150, %p151
      %s153 = ssub.s32 %s14, %s21
      %p154 = scmp.eq.s32.totalorder %s153, 0
      %s156 = sadd.s32 %s155, 1
      %s157 = scalar_select %p154, %s155, %s156
      %p160 = pneg %p154
      %p161 = scmp.eq.s32.totalorder %s14, 1
      %p162 = por %p160, %p161
      %p163 = scmp.ne.s32.totalorder %s155, %s158
      %p164 = scmp.eq.s32.totalorder %s14, 0
      %p165 = por %p163, %p164
      %p166 = scmp.ne.s32.totalorder %s155, %s158
      %p167 = scmp.eq.s32.totalorder %s19, 1
      %p168 = por %p166, %p167
      %p169 = scmp.ne.s32.totalorder %s158, %s159
      %p170 = scmp.eq.s32.totalorder %s19, 0
      %p171 = por %p169, %p170
      %p172 = scmp.ne.s32.totalorder %s158, %s159
      %p173 = scmp.eq.s32.totalorder %s20, 1
      %p174 = por %p172, %p173
      %p176 = scmp.ne.s32.totalorder %s159, %s175
      %p177 = scmp.eq.s32.totalorder %s20, 0
      %p178 = por %p176, %p177
      %p179 = scmp.le.s32.totalorder 1, %s14
      %p180 = scmp.lt.s32.totalorder %s14, 3
      %p181 = pnand %p179, %p180
      %p182 = pneg %p181
      // Predicated region
      $region9: #{column_decoder_forward.3} parent=5 // pred_check
        _
      $region10: #{column_decoder_forward.3} parent=5 // pred_check_branch
        %184 = sbr.rel (%p181) target = $region12
      $region11: #{column_decoder_forward.3} parent=5 // pred_region
        %s185 = ssub.s32 %s14, 1
        // Predicated region
        $region13: #{column_decoder_forward.3} parent=11 // pred_check
          %p186 = pneg %p61
        $region14: #{column_decoder_forward.3} parent=11 // pred_check_branch
          %188 = sbr.rel (%p186) target = $region16
        $region15: #{column_decoder_forward.3} parent=11 // pred_region
          _
        $region16: #{column_decoder_forward.3} parent=11 // pred_fallthru
          _
        // Predicated region
        $region17: #{column_decoder_forward.3} parent=11 // pred_check
          %p189 = pneg %p82
        $region18: #{column_decoder_forward.3} parent=11 // pred_check_branch
          %191 = sbr.rel (%p189) target = $region20
        $region19: #{column_decoder_forward.3} parent=11 // pred_region
          %s193 = ssub.s32 64, 64
          %194 = vsyncadd [#allocation3], %s193
          %s196 = sshll.u32 [#allocation2], 4
          %s197 = int_to_ptr.vmem [resolvable:$true] %s196
          %199 = dma.hbm_to_vmem [thread:$0]  %s2, 64, %s197, [#allocation3]
        $region20: #{column_decoder_forward.3} parent=11 // pred_fallthru
          _
        // Predicated region
        $region21: #{column_decoder_forward.3} parent=11 // pred_check
          %p200 = pneg %p103
        $region22: #{column_decoder_forward.3} parent=11 // pred_check_branch
          %202 = sbr.rel (%p200) target = $region24
        $region23: #{column_decoder_forward.3} parent=11 // pred_region
          _
        $region24: #{column_decoder_forward.3} parent=11 // pred_fallthru
          _
        // Predicated region
        $region25: #{column_decoder_forward.3} parent=11 // pred_check
          %p203 = pneg %p124
        $region26: #{column_decoder_forward.3} parent=11 // pred_check_branch
          %205 = sbr.rel (%p203) target = $region28
        $region27: #{column_decoder_forward.3} parent=11 // pred_region
          %s207 = ssub.s32 64, 64
          %208 = vsyncadd [#allocation5], %s207
          %s210 = sshll.u32 [#allocation4], 4
          %s211 = int_to_ptr.vmem [resolvable:$true] %s210
          %213 = dma.hbm_to_vmem [thread:$0]  %s4, 64, %s211, [#allocation5]
        $region28: #{column_decoder_forward.3} parent=11 // pred_fallthru
          _
        // Predicated region
        $region29: #{column_decoder_forward.3} parent=11 // pred_check
          %p214 = pneg %p145
        $region30: #{column_decoder_forward.3} parent=11 // pred_check_branch
          %216 = sbr.rel (%p214) target = $region32
        $region31: #{column_decoder_forward.3} parent=11 // pred_region
          _
        $region32: #{column_decoder_forward.3} parent=11 // pred_fallthru
          _
      $region12: #{column_decoder_forward.3} parent=5 // pred_fallthru
        _
      %p217 = scmp.lt.s32.totalorder %s14, 2
      // Predicated region
      $region33: #{column_decoder_forward.3} parent=5 // pred_check
        %p218 = pneg %p217
      $region34: #{column_decoder_forward.3} parent=5 // pred_check_branch
        %220 = sbr.rel (%p218) target = $region36
      $region35: #{column_decoder_forward.3} parent=5 // pred_region
        // Predicated region
        $region37: #{column_decoder_forward.3} parent=35 // pred_check
          %p221 = pneg %p34
        $region38: #{column_decoder_forward.3} parent=35 // pred_check_branch
          %223 = sbr.rel (%p221) target = $region40
        $region39: #{column_decoder_forward.3} parent=35 // pred_region
          %s224 = smul.u32 2, %s14
          %p225 = scmp.lt.s32.totalorder %s224, 3
          %s226 = scalar_select %p225, %s224, 3
          %s227 = smul.addr %s226, 4
          %s228 = smul.addr %s227, 4
          %s229 = scalar_lea.vmem %s0, %s228
          %s230 = smul.u32 2, %s14
        $region40: #{column_decoder_forward.3} parent=35 // pred_fallthru
          _
      $region36: #{column_decoder_forward.3} parent=5 // pred_fallthru
        _
      %p231 = scmp.le.s32.totalorder 1, %s14
      %p232 = scmp.lt.s32.totalorder %s14, 3
      %p233 = pnand %p231, %p232
      %p234 = pneg %p233
      // Predicated region
      $region41: #{column_decoder_forward.3} parent=5 // pred_check
        _
      $region42: #{column_decoder_forward.3} parent=5 // pred_check_branch
        %236 = sbr.rel (%p233) target = $region44
      $region43: #{column_decoder_forward.3} parent=5 // pred_region
        %s237 = ssub.s32 %s14, 1
        // Predicated region
        $region45: #{column_decoder_forward.3} parent=43 // pred_check
          %p238 = pneg %p82
        $region46: #{column_decoder_forward.3} parent=43 // pred_check_branch
          %240 = sbr.rel (%p238) target = $region48
        $region47: #{column_decoder_forward.3} parent=43 // pred_region
          %241 = dma.done [#allocation3], 64
        $region48: #{column_decoder_forward.3} parent=43 // pred_fallthru
          _
        // Predicated region
        $region49: #{column_decoder_forward.3} parent=43 // pred_check
          %p242 = pneg %p124
        $region50: #{column_decoder_forward.3} parent=43 // pred_check_branch
          %244 = sbr.rel (%p242) target = $region52
        $region51: #{column_decoder_forward.3} parent=43 // pred_region
          %245 = dma.done [#allocation5], 64
        $region52: #{column_decoder_forward.3} parent=43 // pred_fallthru
          _
        %s246 = smul.u32 2, %s19
        %p247 = scmp.lt.s32.totalorder %s246, 3
        %s248 = scalar_select %p247, %s246, 3
        %s249 = smul.addr %s248, 4
        %s250 = smul.addr %s249, 4
        %s251 = scalar_lea.vmem %s0, %s250
        %p252 = pneg %p40
        %p253 = pneg %p37
        %p254 = pneg %p61
        %p255 = pneg %p58
        %p256 = pneg %p82
        %p257 = pneg %p79
        %p258 = pneg %p103
        %p259 = pneg %p100
        %p260 = pneg %p124
        %p261 = pneg %p121
        %p262 = pneg %p145
        %p263 = pneg %p142
        %p264 = pneg %p171
        %p265 = pneg %p168
        %s266 = smul.u32 2, %s19
        %p267 = scmp.lt.s32.totalorder %s266, 3
        %s268 = scalar_select %p267, %s266, 3
        %s269 = smul.addr %s268, 4
        %s270 = scalar_lea.vmem %s6, %s269
        %s271 = smul.u32 2, %s19
        %p272 = scmp.lt.s32.totalorder %s271, 3
        %s273 = scalar_select %p272, %s271, 3
        %s274 = smul.addr %s273, 4
        %s275 = smul.addr %s274, 4
        %s276 = scalar_lea.vmem %s0, %s275
        %s277 = smul.u32 2, %s19
        %s278 = smul.u32 2, %s19
        %p279 = scmp.lt.s32.totalorder %s278, 3
        %s280 = scalar_select %p279, %s278, 3
        %s281 = smul.addr %s280, 4
        %s282 = scalar_lea.vmem %s6, %s281
        %s283 = smul.u32 2, %s19
        %v285 = vld [vmem:[%s276] sm:$0xff]
        %v286 = vld [vmem:[%s276 + $0x8] sm:$0xff]
        %v287 = vld [vmem:[%s276 + $0x10] sm:$0xff]
        %v288 = vld [vmem:[%s276 + $0x18] sm:$0xff]
        %v289 = vld [vmem:[%s1] sm:$0xff]
        %v290 = vld [vmem:[%s1 + $0x8] sm:$0xff]
        %v291 = vld [vmem:[%s1 + $0x10] sm:$0xff]
        %v292 = vld [vmem:[%s1 + $0x18] sm:$0xff]
        %v293 = vld [vmem:[%s1 + $0x20] sm:$0xff]
        %v294 = vld [vmem:[%s1 + $0x28] sm:$0xff]
        %v295 = vld [vmem:[%s1 + $0x30] sm:$0xff]
        %v296 = vld [vmem:[%s1 + $0x38] sm:$0xff]
        %v297 = vld [vmem:[%s1 + $0x40] sm:$0xff]
        %v298 = vld [vmem:[%s1 + $0x48] sm:$0xff]
        %v299 = vld [vmem:[%s1 + $0x50] sm:$0xff]
        %v300 = vld [vmem:[%s1 + $0x58] sm:$0xff]
        %v301 = vld [vmem:[%s1 + $0x60] sm:$0xff]
        %v302 = vld [vmem:[%s1 + $0x68] sm:$0xff]
        %v303 = vld [vmem:[%s1 + $0x70] sm:$0xff]
        %v304 = vld [vmem:[%s1 + $0x78] sm:$0xff]
        %v305 = vld [vmem:[%s1 + $0x80] sm:$0xff]
        %v306 = vld [vmem:[%s1 + $0x88] sm:$0xff]
        %v307 = vld [vmem:[%s1 + $0x90] sm:$0xff]
        %v308 = vld [vmem:[%s1 + $0x98] sm:$0xff]
        %v309 = vld [vmem:[%s1 + $0xa0] sm:$0xff]
        %v310 = vld [vmem:[%s1 + $0xa8] sm:$0xff]
        %v311 = vld [vmem:[%s1 + $0xb0] sm:$0xff]
        %v312 = vld [vmem:[%s1 + $0xb8] sm:$0xff]
        %v313 = vld [vmem:[%s1 + $0xc0] sm:$0xff]
        %v314 = vld [vmem:[%s1 + $0xc8] sm:$0xff]
        %v315 = vld [vmem:[%s1 + $0xd0] sm:$0xff]
        %v316 = vld [vmem:[%s1 + $0xd8] sm:$0xff]
        %v317 = vld [vmem:[%s1 + $0xe0] sm:$0xff]
        %v318 = vld [vmem:[%s1 + $0xe8] sm:$0xff]
        %v319 = vld [vmem:[%s1 + $0xf0] sm:$0xff]
        %v320 = vld [vmem:[%s1 + $0xf8] sm:$0xff]
        %v321 = vld [vmem:[%s1 + $0x100] sm:$0xff]
        %v322 = vld [vmem:[%s1 + $0x108] sm:$0xff]
        %v323 = vld [vmem:[%s1 + $0x110] sm:$0xff]
        %v324 = vld [vmem:[%s1 + $0x118] sm:$0xff]
        %v325 = vld [vmem:[%s1 + $0x120] sm:$0xff]
        %v326 = vld [vmem:[%s1 + $0x128] sm:$0xff]
        %v327 = vld [vmem:[%s1 + $0x130] sm:$0xff]
        %v328 = vld [vmem:[%s1 + $0x138] sm:$0xff]
        %v329 = vld [vmem:[%s1 + $0x140] sm:$0xff]
        %v330 = vld [vmem:[%s1 + $0x148] sm:$0xff]
        %v331 = vld [vmem:[%s1 + $0x150] sm:$0xff]
        %v332 = vld [vmem:[%s1 + $0x158] sm:$0xff]
        %v333 = vld [vmem:[%s1 + $0x160] sm:$0xff]
        %v334 = vld [vmem:[%s1 + $0x168] sm:$0xff]
        %v335 = vld [vmem:[%s1 + $0x170] sm:$0xff]
        %v336 = vld [vmem:[%s1 + $0x178] sm:$0xff]
        %v337 = vld [vmem:[%s1 + $0x180] sm:$0xff]
        %v338 = vld [vmem:[%s1 + $0x188] sm:$0xff]
        %v339 = vld [vmem:[%s1 + $0x190] sm:$0xff]
        %v340 = vld [vmem:[%s1 + $0x198] sm:$0xff]
        %v341 = vld [vmem:[%s1 + $0x1a0] sm:$0xff]
        %v342 = vld [vmem:[%s1 + $0x1a8] sm:$0xff]
        %v343 = vld [vmem:[%s1 + $0x1b0] sm:$0xff]
        %v344 = vld [vmem:[%s1 + $0x1b8] sm:$0xff]
        %v345 = vld [vmem:[%s1 + $0x1c0] sm:$0xff]
        %v346 = vld [vmem:[%s1 + $0x1c8] sm:$0xff]
        %v347 = vld [vmem:[%s1 + $0x1d0] sm:$0xff]
        %v348 = vld [vmem:[%s1 + $0x1d8] sm:$0xff]
        %v349 = vld [vmem:[%s1 + $0x1e0] sm:$0xff]
        %v350 = vld [vmem:[%s1 + $0x1e8] sm:$0xff]
        %v351 = vld [vmem:[%s1 + $0x1f0] sm:$0xff]
        %v352 = vld [vmem:[%s1 + $0x1f8] sm:$0xff]
        %v353 = vld [vmem:[%s1 + $0x200] sm:$0xff]
        %v354 = vld [vmem:[%s1 + $0x208] sm:$0xff]
        %v355 = vld [vmem:[%s1 + $0x210] sm:$0xff]
        %v356 = vld [vmem:[%s1 + $0x218] sm:$0xff]
        %v357 = vld [vmem:[%s1 + $0x220] sm:$0xff]
        %v358 = vld [vmem:[%s1 + $0x228] sm:$0xff]
        %v359 = vld [vmem:[%s1 + $0x230] sm:$0xff]
        %v360 = vld [vmem:[%s1 + $0x238] sm:$0xff]
        %v361 = vld [vmem:[%s1 + $0x240] sm:$0xff]
        %v362 = vld [vmem:[%s1 + $0x248] sm:$0xff]
        %v363 = vld [vmem:[%s1 + $0x250] sm:$0xff]
        %v364 = vld [vmem:[%s1 + $0x258] sm:$0xff]
        %v365 = vld [vmem:[%s1 + $0x260] sm:$0xff]
        %v366 = vld [vmem:[%s1 + $0x268] sm:$0xff]
        %v367 = vld [vmem:[%s1 + $0x270] sm:$0xff]
        %v368 = vld [vmem:[%s1 + $0x278] sm:$0xff]
        %v369 = vld [vmem:[%s1 + $0x280] sm:$0xff]
        %v370 = vld [vmem:[%s1 + $0x288] sm:$0xff]
        %v371 = vld [vmem:[%s1 + $0x290] sm:$0xff]
        %v372 = vld [vmem:[%s1 + $0x298] sm:$0xff]
        %v373 = vld [vmem:[%s1 + $0x2a0] sm:$0xff]
        %v374 = vld [vmem:[%s1 + $0x2a8] sm:$0xff]
        %v375 = vld [vmem:[%s1 + $0x2b0] sm:$0xff]
        %v376 = vld [vmem:[%s1 + $0x2b8] sm:$0xff]
        %v377 = vld [vmem:[%s1 + $0x2c0] sm:$0xff]
        %v378 = vld [vmem:[%s1 + $0x2c8] sm:$0xff]
        %v379 = vld [vmem:[%s1 + $0x2d0] sm:$0xff]
        %v380 = vld [vmem:[%s1 + $0x2d8] sm:$0xff]
        %v381 = vld [vmem:[%s1 + $0x2e0] sm:$0xff]
        %v382 = vld [vmem:[%s1 + $0x2e8] sm:$0xff]
        %v383 = vld [vmem:[%s1 + $0x2f0] sm:$0xff]
        %v384 = vld [vmem:[%s1 + $0x2f8] sm:$0xff]
        %v385 = vld [vmem:[%s1 + $0x300] sm:$0xff]
        %v386 = vld [vmem:[%s1 + $0x308] sm:$0xff]
        %v387 = vld [vmem:[%s1 + $0x310] sm:$0xff]
        %v388 = vld [vmem:[%s1 + $0x318] sm:$0xff]
        %v389 = vld [vmem:[%s1 + $0x320] sm:$0xff]
        %v390 = vld [vmem:[%s1 + $0x328] sm:$0xff]
        %v391 = vld [vmem:[%s1 + $0x330] sm:$0xff]
        %v392 = vld [vmem:[%s1 + $0x338] sm:$0xff]
        %v393 = vld [vmem:[%s1 + $0x340] sm:$0xff]
        %v394 = vld [vmem:[%s1 + $0x348] sm:$0xff]
        %v395 = vld [vmem:[%s1 + $0x350] sm:$0xff]
        %v396 = vld [vmem:[%s1 + $0x358] sm:$0xff]
        %v397 = vld [vmem:[%s1 + $0x360] sm:$0xff]
        %v398 = vld [vmem:[%s1 + $0x368] sm:$0xff]
        %v399 = vld [vmem:[%s1 + $0x370] sm:$0xff]
        %v400 = vld [vmem:[%s1 + $0x378] sm:$0xff]
        %v401 = vld [vmem:[%s1 + $0x380] sm:$0xff]
        %v402 = vld [vmem:[%s1 + $0x388] sm:$0xff]
        %v403 = vld [vmem:[%s1 + $0x390] sm:$0xff]
        %v404 = vld [vmem:[%s1 + $0x398] sm:$0xff]
        %v405 = vld [vmem:[%s1 + $0x3a0] sm:$0xff]
        %v406 = vld [vmem:[%s1 + $0x3a8] sm:$0xff]
        %v407 = vld [vmem:[%s1 + $0x3b0] sm:$0xff]
        %v408 = vld [vmem:[%s1 + $0x3b8] sm:$0xff]
        %v409 = vld [vmem:[%s1 + $0x3c0] sm:$0xff]
        %v410 = vld [vmem:[%s1 + $0x3c8] sm:$0xff]
        %v411 = vld [vmem:[%s1 + $0x3d0] sm:$0xff]
        %v412 = vld [vmem:[%s1 + $0x3d8] sm:$0xff]
        %v413 = vld [vmem:[%s1 + $0x3e0] sm:$0xff]
        %v414 = vld [vmem:[%s1 + $0x3e8] sm:$0xff]
        %v415 = vld [vmem:[%s1 + $0x3f0] sm:$0xff]
        %v416 = vld [vmem:[%s1 + $0x3f8] sm:$0xff]
        %v417 = vld [vmem:[#allocation2] sm:$0xf]
        %v419 = vlaneseq
        %v420 = vshrl.u32 %v419, 7
        %v421 = vsub.s32 0, %v420
        %v422 = vrot.slane %v417, %v421
        %v423 = vlaneseq
        %v424 = vshrl.u32 %v423, 7
        %v425 = vsub.s32 1, %v424
        %v426 = vrot.slane %v417, %v425
        %v427 = vlaneseq
        %v428 = vshrl.u32 %v427, 7
        %v429 = vsub.s32 2, %v428
        %v430 = vrot.slane %v417, %v429
        %v431 = vlaneseq
        %v432 = vshrl.u32 %v431, 7
        %v433 = vsub.s32 3, %v432
        %v434 = vrot.slane %v417, %v433
        %v443 = vunpack.c.l.b16 %v285
        %v444 = vunpack.c.h.b16 %v285
        %v445 = vunpack.c.l.b16 %v286
        %v446 = vunpack.c.h.b16 %v286
        %v447 = vunpack.c.l.b16 %v287
        %v448 = vunpack.c.h.b16 %v287
        %v449 = vunpack.c.l.b16 %v288
        %v450 = vunpack.c.h.b16 %v288
        %v451 = vpack.c.b16 %v447, %v443
        %v452 = vpack.c.b16 %v448, %v444
        %v453 = vpack.c.b16 %v449, %v445
        %v454 = vpack.c.b16 %v450, %v446
        %v587 = vunpack.c.l.b16 %v289
        %v588 = vunpack.c.h.b16 %v289
        %v589 = vunpack.c.l.b16 %v290
        %v590 = vunpack.c.h.b16 %v290
        %v591 = vunpack.c.l.b16 %v291
        %v592 = vunpack.c.h.b16 %v291
        %v593 = vunpack.c.l.b16 %v292
        %v594 = vunpack.c.h.b16 %v292
        %v595 = vunpack.c.l.b16 %v293
        %v596 = vunpack.c.h.b16 %v293
        %v597 = vunpack.c.l.b16 %v294
        %v598 = vunpack.c.h.b16 %v294
        %v599 = vunpack.c.l.b16 %v295
        %v600 = vunpack.c.h.b16 %v295
        %v601 = vunpack.c.l.b16 %v296
        %v602 = vunpack.c.h.b16 %v296
        %v603 = vunpack.c.l.b16 %v297
        %v604 = vunpack.c.h.b16 %v297
        %v605 = vunpack.c.l.b16 %v298
        %v606 = vunpack.c.h.b16 %v298
        %v607 = vunpack.c.l.b16 %v299
        %v608 = vunpack.c.h.b16 %v299
        %v609 = vunpack.c.l.b16 %v300
        %v610 = vunpack.c.h.b16 %v300
        %v611 = vunpack.c.l.b16 %v301
        %v612 = vunpack.c.h.b16 %v301
        %v613 = vunpack.c.l.b16 %v302
        %v614 = vunpack.c.h.b16 %v302
        %v615 = vunpack.c.l.b16 %v303
        %v616 = vunpack.c.h.b16 %v303
        %v617 = vunpack.c.l.b16 %v304
        %v618 = vunpack.c.h.b16 %v304
        %v619 = vunpack.c.l.b16 %v305
        %v620 = vunpack.c.h.b16 %v305
        %v621 = vunpack.c.l.b16 %v306
        %v622 = vunpack.c.h.b16 %v306
        %v623 = vunpack.c.l.b16 %v307
        %v624 = vunpack.c.h.b16 %v307
        %v625 = vunpack.c.l.b16 %v308
        %v626 = vunpack.c.h.b16 %v308
        %v627 = vunpack.c.l.b16 %v309
        %v628 = vunpack.c.h.b16 %v309
        %v629 = vunpack.c.l.b16 %v310
        %v630 = vunpack.c.h.b16 %v310
        %v631 = vunpack.c.l.b16 %v311
        %v632 = vunpack.c.h.b16 %v311
        %v633 = vunpack.c.l.b16 %v312
        %v634 = vunpack.c.h.b16 %v312
        %v635 = vunpack.c.l.b16 %v313
        %v636 = vunpack.c.h.b16 %v313
        %v637 = vunpack.c.l.b16 %v314
        %v638 = vunpack.c.h.b16 %v314
        %v639 = vunpack.c.l.b16 %v315
        %v640 = vunpack.c.h.b16 %v315
        %v641 = vunpack.c.l.b16 %v316
        %v642 = vunpack.c.h.b16 %v316
        %v643 = vunpack.c.l.b16 %v317
        %v644 = vunpack.c.h.b16 %v317
        %v645 = vunpack.c.l.b16 %v318
        %v646 = vunpack.c.h.b16 %v318
        %v647 = vunpack.c.l.b16 %v319
        %v648 = vunpack.c.h.b16 %v319
        %v649 = vunpack.c.l.b16 %v320
        %v650 = vunpack.c.h.b16 %v320
        %v651 = vunpack.c.l.b16 %v321
        %v652 = vunpack.c.h.b16 %v321
        %v653 = vunpack.c.l.b16 %v322
        %v654 = vunpack.c.h.b16 %v322
        %v655 = vunpack.c.l.b16 %v323
        %v656 = vunpack.c.h.b16 %v323
        %v657 = vunpack.c.l.b16 %v324
        %v658 = vunpack.c.h.b16 %v324
        %v659 = vunpack.c.l.b16 %v325
        %v660 = vunpack.c.h.b16 %v325
        %v661 = vunpack.c.l.b16 %v326
        %v662 = vunpack.c.h.b16 %v326
        %v663 = vunpack.c.l.b16 %v327
        %v664 = vunpack.c.h.b16 %v327
        %v665 = vunpack.c.l.b16 %v328
        %v666 = vunpack.c.h.b16 %v328
        %v667 = vunpack.c.l.b16 %v329
        %v668 = vunpack.c.h.b16 %v329
        %v669 = vunpack.c.l.b16 %v330
        %v670 = vunpack.c.h.b16 %v330
        %v671 = vunpack.c.l.b16 %v331
        %v672 = vunpack.c.h.b16 %v331
        %v673 = vunpack.c.l.b16 %v332
        %v674 = vunpack.c.h.b16 %v332
        %v675 = vunpack.c.l.b16 %v333
        %v676 = vunpack.c.h.b16 %v333
        %v677 = vunpack.c.l.b16 %v334
        %v678 = vunpack.c.h.b16 %v334
        %v679 = vunpack.c.l.b16 %v335
        %v680 = vunpack.c.h.b16 %v335
        %v681 = vunpack.c.l.b16 %v336
        %v682 = vunpack.c.h.b16 %v336
        %v683 = vunpack.c.l.b16 %v337
        %v684 = vunpack.c.h.b16 %v337
        %v685 = vunpack.c.l.b16 %v338
        %v686 = vunpack.c.h.b16 %v338
        %v687 = vunpack.c.l.b16 %v339
        %v688 = vunpack.c.h.b16 %v339
        %v689 = vunpack.c.l.b16 %v340
        %v690 = vunpack.c.h.b16 %v340
        %v691 = vunpack.c.l.b16 %v341
        %v692 = vunpack.c.h.b16 %v341
        %v693 = vunpack.c.l.b16 %v342
        %v694 = vunpack.c.h.b16 %v342
        %v695 = vunpack.c.l.b16 %v343
        %v696 = vunpack.c.h.b16 %v343
        %v697 = vunpack.c.l.b16 %v344
        %v698 = vunpack.c.h.b16 %v344
        %v699 = vunpack.c.l.b16 %v345
        %v700 = vunpack.c.h.b16 %v345
        %v701 = vunpack.c.l.b16 %v346
        %v702 = vunpack.c.h.b16 %v346
        %v703 = vunpack.c.l.b16 %v347
        %v704 = vunpack.c.h.b16 %v347
        %v705 = vunpack.c.l.b16 %v348
        %v706 = vunpack.c.h.b16 %v348
        %v707 = vunpack.c.l.b16 %v349
        %v708 = vunpack.c.h.b16 %v349
        %v709 = vunpack.c.l.b16 %v350
        %v710 = vunpack.c.h.b16 %v350
        %v711 = vunpack.c.l.b16 %v351
        %v712 = vunpack.c.h.b16 %v351
        %v713 = vunpack.c.l.b16 %v352
        %v714 = vunpack.c.h.b16 %v352
        %v715 = vunpack.c.l.b16 %v353
        %v716 = vunpack.c.h.b16 %v353
        %v717 = vunpack.c.l.b16 %v354
        %v718 = vunpack.c.h.b16 %v354
        %v719 = vunpack.c.l.b16 %v355
        %v720 = vunpack.c.h.b16 %v355
        %v721 = vunpack.c.l.b16 %v356
        %v722 = vunpack.c.h.b16 %v356
        %v723 = vunpack.c.l.b16 %v357
        %v724 = vunpack.c.h.b16 %v357
        %v725 = vunpack.c.l.b16 %v358
        %v726 = vunpack.c.h.b16 %v358
        %v727 = vunpack.c.l.b16 %v359
        %v728 = vunpack.c.h.b16 %v359
        %v729 = vunpack.c.l.b16 %v360
        %v730 = vunpack.c.h.b16 %v360
        %v731 = vunpack.c.l.b16 %v361
        %v732 = vunpack.c.h.b16 %v361
        %v733 = vunpack.c.l.b16 %v362
        %v734 = vunpack.c.h.b16 %v362
        %v735 = vunpack.c.l.b16 %v363
        %v736 = vunpack.c.h.b16 %v363
        %v737 = vunpack.c.l.b16 %v364
        %v738 = vunpack.c.h.b16 %v364
        %v739 = vunpack.c.l.b16 %v365
        %v740 = vunpack.c.h.b16 %v365
        %v741 = vunpack.c.l.b16 %v366
        %v742 = vunpack.c.h.b16 %v366
        %v743 = vunpack.c.l.b16 %v367
        %v744 = vunpack.c.h.b16 %v367
        %v745 = vunpack.c.l.b16 %v368
        %v746 = vunpack.c.h.b16 %v368
        %v747 = vunpack.c.l.b16 %v369
        %v748 = vunpack.c.h.b16 %v369
        %v749 = vunpack.c.l.b16 %v370
        %v750 = vunpack.c.h.b16 %v370
        %v751 = vunpack.c.l.b16 %v371
        %v752 = vunpack.c.h.b16 %v371
        %v753 = vunpack.c.l.b16 %v372
        %v754 = vunpack.c.h.b16 %v372
        %v755 = vunpack.c.l.b16 %v373
        %v756 = vunpack.c.h.b16 %v373
        %v757 = vunpack.c.l.b16 %v374
        %v758 = vunpack.c.h.b16 %v374
        %v759 = vunpack.c.l.b16 %v375
        %v760 = vunpack.c.h.b16 %v375
        %v761 = vunpack.c.l.b16 %v376
        %v762 = vunpack.c.h.b16 %v376
        %v763 = vunpack.c.l.b16 %v377
        %v764 = vunpack.c.h.b16 %v377
        %v765 = vunpack.c.l.b16 %v378
        %v766 = vunpack.c.h.b16 %v378
        %v767 = vunpack.c.l.b16 %v379
        %v768 = vunpack.c.h.b16 %v379
        %v769 = vunpack.c.l.b16 %v380
        %v770 = vunpack.c.h.b16 %v380
        %v771 = vunpack.c.l.b16 %v381
        %v772 = vunpack.c.h.b16 %v381
        %v773 = vunpack.c.l.b16 %v382
        %v774 = vunpack.c.h.b16 %v382
        %v775 = vunpack.c.l.b16 %v383
        %v776 = vunpack.c.h.b16 %v383
        %v777 = vunpack.c.l.b16 %v384
        %v778 = vunpack.c.h.b16 %v384
        %v779 = vunpack.c.l.b16 %v385
        %v780 = vunpack.c.h.b16 %v385
        %v781 = vunpack.c.l.b16 %v386
        %v782 = vunpack.c.h.b16 %v386
        %v783 = vunpack.c.l.b16 %v387
        %v784 = vunpack.c.h.b16 %v387
        %v785 = vunpack.c.l.b16 %v388
        %v786 = vunpack.c.h.b16 %v388
        %v787 = vunpack.c.l.b16 %v389
        %v788 = vunpack.c.h.b16 %v389
        %v789 = vunpack.c.l.b16 %v390
        %v790 = vunpack.c.h.b16 %v390
        %v791 = vunpack.c.l.b16 %v391
        %v792 = vunpack.c.h.b16 %v391
        %v793 = vunpack.c.l.b16 %v392
        %v794 = vunpack.c.h.b16 %v392
        %v795 = vunpack.c.l.b16 %v393
        %v796 = vunpack.c.h.b16 %v393
        %v797 = vunpack.c.l.b16 %v394
        %v798 = vunpack.c.h.b16 %v394
        %v799 = vunpack.c.l.b16 %v395
        %v800 = vunpack.c.h.b16 %v395
        %v801 = vunpack.c.l.b16 %v396
        %v802 = vunpack.c.h.b16 %v396
        %v803 = vunpack.c.l.b16 %v397
        %v804 = vunpack.c.h.b16 %v397
        %v805 = vunpack.c.l.b16 %v398
        %v806 = vunpack.c.h.b16 %v398
        %v807 = vunpack.c.l.b16 %v399
        %v808 = vunpack.c.h.b16 %v399
        %v809 = vunpack.c.l.b16 %v400
        %v810 = vunpack.c.h.b16 %v400
        %v811 = vunpack.c.l.b16 %v401
        %v812 = vunpack.c.h.b16 %v401
        %v813 = vunpack.c.l.b16 %v402
        %v814 = vunpack.c.h.b16 %v402
        %v815 = vunpack.c.l.b16 %v403
        %v816 = vunpack.c.h.b16 %v403
        %v817 = vunpack.c.l.b16 %v404
        %v818 = vunpack.c.h.b16 %v404
        %v819 = vunpack.c.l.b16 %v405
        %v820 = vunpack.c.h.b16 %v405
        %v821 = vunpack.c.l.b16 %v406
        %v822 = vunpack.c.h.b16 %v406
        %v823 = vunpack.c.l.b16 %v407
        %v824 = vunpack.c.h.b16 %v407
        %v825 = vunpack.c.l.b16 %v408
        %v826 = vunpack.c.h.b16 %v408
        %v827 = vunpack.c.l.b16 %v409
        %v828 = vunpack.c.h.b16 %v409
        %v829 = vunpack.c.l.b16 %v410
        %v830 = vunpack.c.h.b16 %v410
        %v831 = vunpack.c.l.b16 %v411
        %v832 = vunpack.c.h.b16 %v411
        %v833 = vunpack.c.l.b16 %v412
        %v834 = vunpack.c.h.b16 %v412
        %v835 = vunpack.c.l.b16 %v413
        %v836 = vunpack.c.h.b16 %v413
        %v837 = vunpack.c.l.b16 %v414
        %v838 = vunpack.c.h.b16 %v414
        %v839 = vunpack.c.l.b16 %v415
        %v840 = vunpack.c.h.b16 %v415
        %v841 = vunpack.c.l.b16 %v416
        %v842 = vunpack.c.h.b16 %v416
        %v843 = vpack.c.b16 %v591, %v587
        %v844 = vpack.c.b16 %v592, %v588
        %v845 = vpack.c.b16 %v593, %v589
        %v846 = vpack.c.b16 %v594, %v590
        %v847 = vpack.c.b16 %v599, %v595
        %v848 = vpack.c.b16 %v600, %v596
        %v849 = vpack.c.b16 %v601, %v597
        %v850 = vpack.c.b16 %v602, %v598
        %v851 = vpack.c.b16 %v607, %v603
        %v852 = vpack.c.b16 %v608, %v604
        %v853 = vpack.c.b16 %v609, %v605
        %v854 = vpack.c.b16 %v610, %v606
        %v855 = vpack.c.b16 %v615, %v611
        %v856 = vpack.c.b16 %v616, %v612
        %v857 = vpack.c.b16 %v617, %v613
        %v858 = vpack.c.b16 %v618, %v614
        %v859 = vpack.c.b16 %v623, %v619
        %v860 = vpack.c.b16 %v624, %v620
        %v861 = vpack.c.b16 %v625, %v621
        %v862 = vpack.c.b16 %v626, %v622
        %v863 = vpack.c.b16 %v631, %v627
        %v864 = vpack.c.b16 %v632, %v628
        %v865 = vpack.c.b16 %v633, %v629
        %v866 = vpack.c.b16 %v634, %v630
        %v867 = vpack.c.b16 %v639, %v635
        %v868 = vpack.c.b16 %v640, %v636
        %v869 = vpack.c.b16 %v641, %v637
        %v870 = vpack.c.b16 %v642, %v638
        %v871 = vpack.c.b16 %v647, %v643
        %v872 = vpack.c.b16 %v648, %v644
        %v873 = vpack.c.b16 %v649, %v645
        %v874 = vpack.c.b16 %v650, %v646
        %v875 = vpack.c.b16 %v655, %v651
        %v876 = vpack.c.b16 %v656, %v652
        %v877 = vpack.c.b16 %v657, %v653
        %v878 = vpack.c.b16 %v658, %v654
        %v879 = vpack.c.b16 %v663, %v659
        %v880 = vpack.c.b16 %v664, %v660
        %v881 = vpack.c.b16 %v665, %v661
        %v882 = vpack.c.b16 %v666, %v662
        %v883 = vpack.c.b16 %v671, %v667
        %v884 = vpack.c.b16 %v672, %v668
        %v885 = vpack.c.b16 %v673, %v669
        %v886 = vpack.c.b16 %v674, %v670
        %v887 = vpack.c.b16 %v679, %v675
        %v888 = vpack.c.b16 %v680, %v676
        %v889 = vpack.c.b16 %v681, %v677
        %v890 = vpack.c.b16 %v682, %v678
        %v891 = vpack.c.b16 %v687, %v683
        %v892 = vpack.c.b16 %v688, %v684
        %v893 = vpack.c.b16 %v689, %v685
        %v894 = vpack.c.b16 %v690, %v686
        %v895 = vpack.c.b16 %v695, %v691
        %v896 = vpack.c.b16 %v696, %v692
        %v897 = vpack.c.b16 %v697, %v693
        %v898 = vpack.c.b16 %v698, %v694
        %v899 = vpack.c.b16 %v703, %v699
        %v900 = vpack.c.b16 %v704, %v700
        %v901 = vpack.c.b16 %v705, %v701
        %v902 = vpack.c.b16 %v706, %v702
        %v903 = vpack.c.b16 %v711, %v707
        %v904 = vpack.c.b16 %v712, %v708
        %v905 = vpack.c.b16 %v713, %v709
        %v906 = vpack.c.b16 %v714, %v710
        %v907 = vpack.c.b16 %v719, %v715
        %v908 = vpack.c.b16 %v720, %v716
        %v909 = vpack.c.b16 %v721, %v717
        %v910 = vpack.c.b16 %v722, %v718
        %v911 = vpack.c.b16 %v727, %v723
        %v912 = vpack.c.b16 %v728, %v724
        %v913 = vpack.c.b16 %v729, %v725
        %v914 = vpack.c.b16 %v730, %v726
        %v915 = vpack.c.b16 %v735, %v731
        %v916 = vpack.c.b16 %v736, %v732
        %v917 = vpack.c.b16 %v737, %v733
        %v918 = vpack.c.b16 %v738, %v734
        %v919 = vpack.c.b16 %v743, %v739
        %v920 = vpack.c.b16 %v744, %v740
        %v921 = vpack.c.b16 %v745, %v741
        %v922 = vpack.c.b16 %v746, %v742
        %v923 = vpack.c.b16 %v751, %v747
        %v924 = vpack.c.b16 %v752, %v748
        %v925 = vpack.c.b16 %v753, %v749
        %v926 = vpack.c.b16 %v754, %v750
        %v927 = vpack.c.b16 %v759, %v755
        %v928 = vpack.c.b16 %v760, %v756
        %v929 = vpack.c.b16 %v761, %v757
        %v930 = vpack.c.b16 %v762, %v758
        %v931 = vpack.c.b16 %v767, %v763
        %v932 = vpack.c.b16 %v768, %v764
        %v933 = vpack.c.b16 %v769, %v765
        %v934 = vpack.c.b16 %v770, %v766
        %v935 = vpack.c.b16 %v775, %v771
        %v936 = vpack.c.b16 %v776, %v772
        %v937 = vpack.c.b16 %v777, %v773
        %v938 = vpack.c.b16 %v778, %v774
        %v939 = vpack.c.b16 %v783, %v779
        %v940 = vpack.c.b16 %v784, %v780
        %v941 = vpack.c.b16 %v785, %v781
        %v942 = vpack.c.b16 %v786, %v782
        %v943 = vpack.c.b16 %v791, %v787
        %v944 = vpack.c.b16 %v792, %v788
        %v945 = vpack.c.b16 %v793, %v789
        %v946 = vpack.c.b16 %v794, %v790
        %v947 = vpack.c.b16 %v799, %v795
        %v948 = vpack.c.b16 %v800, %v796
        %v949 = vpack.c.b16 %v801, %v797
        %v950 = vpack.c.b16 %v802, %v798
        %v951 = vpack.c.b16 %v807, %v803
        %v952 = vpack.c.b16 %v808, %v804
        %v953 = vpack.c.b16 %v809, %v805
        %v954 = vpack.c.b16 %v810, %v806
        %v955 = vpack.c.b16 %v815, %v811
        %v956 = vpack.c.b16 %v816, %v812
        %v957 = vpack.c.b16 %v817, %v813
        %v958 = vpack.c.b16 %v818, %v814
        %v959 = vpack.c.b16 %v823, %v819
        %v960 = vpack.c.b16 %v824, %v820
        %v961 = vpack.c.b16 %v825, %v821
        %v962 = vpack.c.b16 %v826, %v822
        %v963 = vpack.c.b16 %v831, %v827
        %v964 = vpack.c.b16 %v832, %v828
        %v965 = vpack.c.b16 %v833, %v829
        %v966 = vpack.c.b16 %v834, %v830
        %v967 = vpack.c.b16 %v839, %v835
        %v968 = vpack.c.b16 %v840, %v836
        %v969 = vpack.c.b16 %v841, %v837
        %v970 = vpack.c.b16 %v842, %v838
        %1099 = vmatprep.subr.bf16.mxu0 %v844
        %1100 = vmatpush1.bf16.msra.mxu0 %v843
        %1101 = vmatprep.subr.bf16.mxu0 %v848
        %1102 = vmatpush1.bf16.msra.mxu0 %v847
        %1103 = vmatprep.subr.bf16.mxu0 %v852
        %1104 = vmatpush1.bf16.msra.mxu0 %v851
        %1105 = vmatprep.subr.bf16.mxu0 %v856
        %1106 = vmatpush1.bf16.msra.mxu0 %v855
        %1107 = vmatprep.subr.bf16.mxu0 %v860
        %1108 = vmatpush1.bf16.msra.mxu0 %v859
        %1109 = vmatprep.subr.bf16.mxu0 %v864
        %1110 = vmatpush1.bf16.msra.mxu0 %v863
        %1111 = vmatprep.subr.bf16.mxu0 %v868
        %1112 = vmatpush1.bf16.msra.mxu0 %v867
        %1113 = vmatprep.subr.bf16.mxu0 %v872
        %1114 = vmatpush1.bf16.msra.mxu0 %v871
        %1115 = vmatprep.subr.bf16.mxu0 %v876
        %1116 = vmatpush1.bf16.msra.mxu0 %v875
        %1117 = vmatprep.subr.bf16.mxu0 %v880
        %1118 = vmatpush1.bf16.msra.mxu0 %v879
        %1119 = vmatprep.subr.bf16.mxu0 %v884
        %1120 = vmatpush1.bf16.msra.mxu0 %v883
        %1121 = vmatprep.subr.bf16.mxu0 %v888
        %1122 = vmatpush1.bf16.msra.mxu0 %v887
        %1123 = vmatprep.subr.bf16.mxu0 %v892
        %1124 = vmatpush1.bf16.msra.mxu0 %v891
        %1125 = vmatprep.subr.bf16.mxu0 %v896
        %1126 = vmatpush1.bf16.msra.mxu0 %v895
        %1127 = vmatprep.subr.bf16.mxu0 %v900
        %1128 = vmatpush1.bf16.msra.mxu0 %v899
        %1129 = vmatprep.subr.bf16.mxu0 %v904
        %1130 = vmatpush1.bf16.msra.mxu0 %v903
        %1131 = vmatprep.mubr.bf16.mxu0 %v452
        %1132 = vmatmul.mubr.bf16.gmra.mrb[0].mxu0 %v451
        %v1133 = vpop.f32.mrb[0].mxu0
        %v1134 = vadd.f32 %v422, %v1133
        %v1135 = vpop.f32.mrb[0].mxu0
        %v1136 = vadd.f32 %v426, %v1135
        %v1137 = vpop.f32.mrb[0].mxu0
        %v1138 = vadd.f32 %v422, %v1137
        %v1139 = vpop.f32.mrb[0].mxu0
        %v1140 = vadd.f32 %v426, %v1139
        %1141 = vdwg.mxu0
        %1142 = vmatprep.subr.bf16.mxu0 %v908
        %1143 = vmatpush1.bf16.msra.mxu0 %v907
        %1144 = vmatprep.subr.bf16.mxu0 %v912
        %1145 = vmatpush1.bf16.msra.mxu0 %v911
        %1146 = vmatprep.subr.bf16.mxu0 %v916
        %1147 = vmatpush1.bf16.msra.mxu0 %v915
        %1148 = vmatprep.subr.bf16.mxu0 %v920
        %1149 = vmatpush1.bf16.msra.mxu0 %v919
        %1150 = vmatprep.subr.bf16.mxu0 %v924
        %1151 = vmatpush1.bf16.msra.mxu0 %v923
        %1152 = vmatprep.subr.bf16.mxu0 %v928
        %1153 = vmatpush1.bf16.msra.mxu0 %v927
        %1154 = vmatprep.subr.bf16.mxu0 %v932
        %1155 = vmatpush1.bf16.msra.mxu0 %v931
        %1156 = vmatprep.subr.bf16.mxu0 %v936
        %1157 = vmatpush1.bf16.msra.mxu0 %v935
        %1158 = vmatprep.subr.bf16.mxu0 %v940
        %1159 = vmatpush1.bf16.msra.mxu0 %v939
        %1160 = vmatprep.subr.bf16.mxu0 %v944
        %1161 = vmatpush1.bf16.msra.mxu0 %v943
        %1162 = vmatprep.subr.bf16.mxu0 %v948
        %1163 = vmatpush1.bf16.msra.mxu0 %v947
        %1164 = vmatprep.subr.bf16.mxu0 %v952
        %1165 = vmatpush1.bf16.msra.mxu0 %v951
        %1166 = vmatprep.subr.bf16.mxu0 %v956
        %1167 = vmatpush1.bf16.msra.mxu0 %v955
        %1168 = vmatprep.subr.bf16.mxu0 %v960
        %1169 = vmatpush1.bf16.msra.mxu0 %v959
        %1170 = vmatprep.subr.bf16.mxu0 %v964
        %1171 = vmatpush1.bf16.msra.mxu0 %v963
        %1172 = vmatprep.subr.bf16.mxu0 %v968
        %1173 = vmatpush1.bf16.msra.mxu0 %v967
        %1174 = vmatprep.mubr.bf16.mxu0 %v454
        %1175 = vmatmul.mubr.bf16.gmra.mrb[0].mxu0 %v453
        %v1176 = vpop.f32.mrb[0].mxu0
        %v1177 = vadd.f32 %v1134, %v1176
        %v1178 = vpop.f32.mrb[0].mxu0
        %v1179 = vadd.f32 %v1136, %v1178
        %v1180 = vpop.f32.mrb[0].mxu0
        %v1181 = vadd.f32 %v1138, %v1180
        %v1182 = vpop.f32.mrb[0].mxu0
        %v1183 = vadd.f32 %v1140, %v1182
        %1184 = vdwg.mxu0
        %1185 = vmatprep.subr.bf16.mxu0 %v846
        %1186 = vmatpush1.bf16.msra.mxu0 %v845
        %1187 = vmatprep.subr.bf16.mxu0 %v850
        %1188 = vmatpush1.bf16.msra.mxu0 %v849
        %1189 = vmatprep.subr.bf16.mxu0 %v854
        %1190 = vmatpush1.bf16.msra.mxu0 %v853
        %1191 = vmatprep.subr.bf16.mxu0 %v858
        %1192 = vmatpush1.bf16.msra.mxu0 %v857
        %1193 = vmatprep.subr.bf16.mxu0 %v862
        %1194 = vmatpush1.bf16.msra.mxu0 %v861
        %1195 = vmatprep.subr.bf16.mxu0 %v866
        %1196 = vmatpush1.bf16.msra.mxu0 %v865
        %1197 = vmatprep.subr.bf16.mxu0 %v870
        %1198 = vmatpush1.bf16.msra.mxu0 %v869
        %1199 = vmatprep.subr.bf16.mxu0 %v874
        %1200 = vmatpush1.bf16.msra.mxu0 %v873
        %1201 = vmatprep.subr.bf16.mxu0 %v878
        %1202 = vmatpush1.bf16.msra.mxu0 %v877
        %1203 = vmatprep.subr.bf16.mxu0 %v882
        %1204 = vmatpush1.bf16.msra.mxu0 %v881
        %1205 = vmatprep.subr.bf16.mxu0 %v886
        %1206 = vmatpush1.bf16.msra.mxu0 %v885
        %1207 = vmatprep.subr.bf16.mxu0 %v890
        %1208 = vmatpush1.bf16.msra.mxu0 %v889
        %1209 = vmatprep.subr.bf16.mxu0 %v894
        %1210 = vmatpush1.bf16.msra.mxu0 %v893
        %1211 = vmatprep.subr.bf16.mxu0 %v898
        %1212 = vmatpush1.bf16.msra.mxu0 %v897
        %1213 = vmatprep.subr.bf16.mxu0 %v902
        %1214 = vmatpush1.bf16.msra.mxu0 %v901
        %1215 = vmatprep.subr.bf16.mxu0 %v906
        %1216 = vmatpush1.bf16.msra.mxu0 %v905
        %1217 = vmatprep.mubr.bf16.mxu0 %v452
        %1218 = vmatmul.mubr.bf16.gmra.mrb[0].mxu0 %v451
        %v1219 = vpop.f32.mrb[0].mxu0
        %v1220 = vadd.f32 %v430, %v1219
        %v1221 = vpop.f32.mrb[0].mxu0
        %v1222 = vadd.f32 %v434, %v1221
        %v1223 = vpop.f32.mrb[0].mxu0
        %v1224 = vadd.f32 %v430, %v1223
        %v1225 = vpop.f32.mrb[0].mxu0
        %v1226 = vadd.f32 %v434, %v1225
        %1227 = vdwg.mxu0
        %1228 = vmatprep.subr.bf16.mxu0 %v910
        %1229 = vmatpush1.bf16.msra.mxu0 %v909
        %1230 = vmatprep.subr.bf16.mxu0 %v914
        %1231 = vmatpush1.bf16.msra.mxu0 %v913
        %1232 = vmatprep.subr.bf16.mxu0 %v918
        %1233 = vmatpush1.bf16.msra.mxu0 %v917
        %1234 = vmatprep.subr.bf16.mxu0 %v922
        %1235 = vmatpush1.bf16.msra.mxu0 %v921
        %1236 = vmatprep.subr.bf16.mxu0 %v926
        %1237 = vmatpush1.bf16.msra.mxu0 %v925
        %1238 = vmatprep.subr.bf16.mxu0 %v930
        %1239 = vmatpush1.bf16.msra.mxu0 %v929
        %1240 = vmatprep.subr.bf16.mxu0 %v934
        %1241 = vmatpush1.bf16.msra.mxu0 %v933
        %1242 = vmatprep.subr.bf16.mxu0 %v938
        %1243 = vmatpush1.bf16.msra.mxu0 %v937
        %1244 = vmatprep.subr.bf16.mxu0 %v942
        %1245 = vmatpush1.bf16.msra.mxu0 %v941
        %1246 = vmatprep.subr.bf16.mxu0 %v946
        %1247 = vmatpush1.bf16.msra.mxu0 %v945
        %1248 = vmatprep.subr.bf16.mxu0 %v950
        %1249 = vmatpush1.bf16.msra.mxu0 %v949
        %1250 = vmatprep.subr.bf16.mxu0 %v954
        %1251 = vmatpush1.bf16.msra.mxu0 %v953
        %1252 = vmatprep.subr.bf16.mxu0 %v958
        %1253 = vmatpush1.bf16.msra.mxu0 %v957
        %1254 = vmatprep.subr.bf16.mxu0 %v962
        %1255 = vmatpush1.bf16.msra.mxu0 %v961
        %1256 = vmatprep.subr.bf16.mxu0 %v966
        %1257 = vmatpush1.bf16.msra.mxu0 %v965
        %1258 = vmatprep.subr.bf16.mxu0 %v970
        %1259 = vmatpush1.bf16.msra.mxu0 %v969
        %1260 = vmatprep.mubr.bf16.mxu0 %v454
        %1261 = vmatmul.mubr.bf16.gmra.mrb[0].mxu0 %v453
        %v1262 = vpop.f32.mrb[0].mxu0
        %v1263 = vadd.f32 %v1220, %v1262
        %v1264 = vpop.f32.mrb[0].mxu0
        %v1265 = vadd.f32 %v1222, %v1264
        %v1266 = vpop.f32.mrb[0].mxu0
        %v1267 = vadd.f32 %v1224, %v1266
        %v1268 = vpop.f32.mrb[0].mxu0
        %v1269 = vadd.f32 %v1226, %v1268
        %1270 = vdwg.mxu0
        %v1271 = vmax.f32 %v1177, 0.0
        %v1272 = vmax.f32 %v1179, 0.0
        %v1273 = vmax.f32 %v1263, 0.0
        %v1274 = vmax.f32 %v1265, 0.0
        %v1275 = vmax.f32 %v1181, 0.0
        %v1276 = vmax.f32 %v1183, 0.0
        %v1277 = vmax.f32 %v1267, 0.0
        %v1278 = vmax.f32 %v1269, 0.0
        %v1279 = vpack.c.bf16 %v1275, %v1271
        %v1280 = vpack.c.bf16 %v1276, %v1272
        %v1281 = vpack.c.bf16 %v1277, %v1273
        %v1282 = vpack.c.bf16 %v1278, %v1274
        %v1283 = vld [vmem:[%s3] sm:$0xff]
        %v1284 = vld [vmem:[%s3 + $0x8] sm:$0xff]
        %v1285 = vld [vmem:[%s3 + $0x10] sm:$0xff]
        %v1286 = vld [vmem:[%s3 + $0x18] sm:$0xff]
        %v1287 = vld [vmem:[%s3 + $0x20] sm:$0xff]
        %v1288 = vld [vmem:[%s3 + $0x28] sm:$0xff]
        %v1289 = vld [vmem:[%s3 + $0x30] sm:$0xff]
        %v1290 = vld [vmem:[%s3 + $0x38] sm:$0xff]
        %v1291 = vld [vmem:[%s3 + $0x40] sm:$0xff]
        %v1292 = vld [vmem:[%s3 + $0x48] sm:$0xff]
        %v1293 = vld [vmem:[%s3 + $0x50] sm:$0xff]
        %v1294 = vld [vmem:[%s3 + $0x58] sm:$0xff]
        %v1295 = vld [vmem:[%s3 + $0x60] sm:$0xff]
        %v1296 = vld [vmem:[%s3 + $0x68] sm:$0xff]
        %v1297 = vld [vmem:[%s3 + $0x70] sm:$0xff]
        %v1298 = vld [vmem:[%s3 + $0x78] sm:$0xff]
        %v1299 = vld [vmem:[%s3 + $0x80] sm:$0xff]
        %v1300 = vld [vmem:[%s3 + $0x88] sm:$0xff]
        %v1301 = vld [vmem:[%s3 + $0x90] sm:$0xff]
        %v1302 = vld [vmem:[%s3 + $0x98] sm:$0xff]
        %v1303 = vld [vmem:[%s3 + $0xa0] sm:$0xff]
        %v1304 = vld [vmem:[%s3 + $0xa8] sm:$0xff]
        %v1305 = vld [vmem:[%s3 + $0xb0] sm:$0xff]
        %v1306 = vld [vmem:[%s3 + $0xb8] sm:$0xff]
        %v1307 = vld [vmem:[%s3 + $0xc0] sm:$0xff]
        %v1308 = vld [vmem:[%s3 + $0xc8] sm:$0xff]
        %v1309 = vld [vmem:[%s3 + $0xd0] sm:$0xff]
        %v1310 = vld [vmem:[%s3 + $0xd8] sm:$0xff]
        %v1311 = vld [vmem:[%s3 + $0xe0] sm:$0xff]
        %v1312 = vld [vmem:[%s3 + $0xe8] sm:$0xff]
        %v1313 = vld [vmem:[%s3 + $0xf0] sm:$0xff]
        %v1314 = vld [vmem:[%s3 + $0xf8] sm:$0xff]
        %v1315 = vld [vmem:[%s3 + $0x100] sm:$0xff]
        %v1316 = vld [vmem:[%s3 + $0x108] sm:$0xff]
        %v1317 = vld [vmem:[%s3 + $0x110] sm:$0xff]
        %v1318 = vld [vmem:[%s3 + $0x118] sm:$0xff]
        %v1319 = vld [vmem:[%s3 + $0x120] sm:$0xff]
        %v1320 = vld [vmem:[%s3 + $0x128] sm:$0xff]
        %v1321 = vld [vmem:[%s3 + $0x130] sm:$0xff]
        %v1322 = vld [vmem:[%s3 + $0x138] sm:$0xff]
        %v1323 = vld [vmem:[%s3 + $0x140] sm:$0xff]
        %v1324 = vld [vmem:[%s3 + $0x148] sm:$0xff]
        %v1325 = vld [vmem:[%s3 + $0x150] sm:$0xff]
        %v1326 = vld [vmem:[%s3 + $0x158] sm:$0xff]
        %v1327 = vld [vmem:[%s3 + $0x160] sm:$0xff]
        %v1328 = vld [vmem:[%s3 + $0x168] sm:$0xff]
        %v1329 = vld [vmem:[%s3 + $0x170] sm:$0xff]
        %v1330 = vld [vmem:[%s3 + $0x178] sm:$0xff]
        %v1331 = vld [vmem:[%s3 + $0x180] sm:$0xff]
        %v1332 = vld [vmem:[%s3 + $0x188] sm:$0xff]
        %v1333 = vld [vmem:[%s3 + $0x190] sm:$0xff]
        %v1334 = vld [vmem:[%s3 + $0x198] sm:$0xff]
        %v1335 = vld [vmem:[%s3 + $0x1a0] sm:$0xff]
        %v1336 = vld [vmem:[%s3 + $0x1a8] sm:$0xff]
        %v1337 = vld [vmem:[%s3 + $0x1b0] sm:$0xff]
        %v1338 = vld [vmem:[%s3 + $0x1b8] sm:$0xff]
        %v1339 = vld [vmem:[%s3 + $0x1c0] sm:$0xff]
        %v1340 = vld [vmem:[%s3 + $0x1c8] sm:$0xff]
        %v1341 = vld [vmem:[%s3 + $0x1d0] sm:$0xff]
        %v1342 = vld [vmem:[%s3 + $0x1d8] sm:$0xff]
        %v1343 = vld [vmem:[%s3 + $0x1e0] sm:$0xff]
        %v1344 = vld [vmem:[%s3 + $0x1e8] sm:$0xff]
        %v1345 = vld [vmem:[%s3 + $0x1f0] sm:$0xff]
        %v1346 = vld [vmem:[%s3 + $0x1f8] sm:$0xff]
        %v1347 = vld [vmem:[%s3 + $0x200] sm:$0xff]
        %v1348 = vld [vmem:[%s3 + $0x208] sm:$0xff]
        %v1349 = vld [vmem:[%s3 + $0x210] sm:$0xff]
        %v1350 = vld [vmem:[%s3 + $0x218] sm:$0xff]
        %v1351 = vld [vmem:[%s3 + $0x220] sm:$0xff]
        %v1352 = vld [vmem:[%s3 + $0x228] sm:$0xff]
        %v1353 = vld [vmem:[%s3 + $0x230] sm:$0xff]
        %v1354 = vld [vmem:[%s3 + $0x238] sm:$0xff]
        %v1355 = vld [vmem:[%s3 + $0x240] sm:$0xff]
        %v1356 = vld [vmem:[%s3 + $0x248] sm:$0xff]
        %v1357 = vld [vmem:[%s3 + $0x250] sm:$0xff]
        %v1358 = vld [vmem:[%s3 + $0x258] sm:$0xff]
        %v1359 = vld [vmem:[%s3 + $0x260] sm:$0xff]
        %v1360 = vld [vmem:[%s3 + $0x268] sm:$0xff]
        %v1361 = vld [vmem:[%s3 + $0x270] sm:$0xff]
        %v1362 = vld [vmem:[%s3 + $0x278] sm:$0xff]
        %v1363 = vld [vmem:[%s3 + $0x280] sm:$0xff]
        %v1364 = vld [vmem:[%s3 + $0x288] sm:$0xff]
        %v1365 = vld [vmem:[%s3 + $0x290] sm:$0xff]
        %v1366 = vld [vmem:[%s3 + $0x298] sm:$0xff]
        %v1367 = vld [vmem:[%s3 + $0x2a0] sm:$0xff]
        %v1368 = vld [vmem:[%s3 + $0x2a8] sm:$0xff]
        %v1369 = vld [vmem:[%s3 + $0x2b0] sm:$0xff]
        %v1370 = vld [vmem:[%s3 + $0x2b8] sm:$0xff]
        %v1371 = vld [vmem:[%s3 + $0x2c0] sm:$0xff]
        %v1372 = vld [vmem:[%s3 + $0x2c8] sm:$0xff]
        %v1373 = vld [vmem:[%s3 + $0x2d0] sm:$0xff]
        %v1374 = vld [vmem:[%s3 + $0x2d8] sm:$0xff]
        %v1375 = vld [vmem:[%s3 + $0x2e0] sm:$0xff]
        %v1376 = vld [vmem:[%s3 + $0x2e8] sm:$0xff]
        %v1377 = vld [vmem:[%s3 + $0x2f0] sm:$0xff]
        %v1378 = vld [vmem:[%s3 + $0x2f8] sm:$0xff]
        %v1379 = vld [vmem:[%s3 + $0x300] sm:$0xff]
        %v1380 = vld [vmem:[%s3 + $0x308] sm:$0xff]
        %v1381 = vld [vmem:[%s3 + $0x310] sm:$0xff]
        %v1382 = vld [vmem:[%s3 + $0x318] sm:$0xff]
        %v1383 = vld [vmem:[%s3 + $0x320] sm:$0xff]
        %v1384 = vld [vmem:[%s3 + $0x328] sm:$0xff]
        %v1385 = vld [vmem:[%s3 + $0x330] sm:$0xff]
        %v1386 = vld [vmem:[%s3 + $0x338] sm:$0xff]
        %v1387 = vld [vmem:[%s3 + $0x340] sm:$0xff]
        %v1388 = vld [vmem:[%s3 + $0x348] sm:$0xff]
        %v1389 = vld [vmem:[%s3 + $0x350] sm:$0xff]
        %v1390 = vld [vmem:[%s3 + $0x358] sm:$0xff]
        %v1391 = vld [vmem:[%s3 + $0x360] sm:$0xff]
        %v1392 = vld [vmem:[%s3 + $0x368] sm:$0xff]
        %v1393 = vld [vmem:[%s3 + $0x370] sm:$0xff]
        %v1394 = vld [vmem:[%s3 + $0x378] sm:$0xff]
        %v1395 = vld [vmem:[%s3 + $0x380] sm:$0xff]
        %v1396 = vld [vmem:[%s3 + $0x388] sm:$0xff]
        %v1397 = vld [vmem:[%s3 + $0x390] sm:$0xff]
        %v1398 = vld [vmem:[%s3 + $0x398] sm:$0xff]
        %v1399 = vld [vmem:[%s3 + $0x3a0] sm:$0xff]
        %v1400 = vld [vmem:[%s3 + $0x3a8] sm:$0xff]
        %v1401 = vld [vmem:[%s3 + $0x3b0] sm:$0xff]
        %v1402 = vld [vmem:[%s3 + $0x3b8] sm:$0xff]
        %v1403 = vld [vmem:[%s3 + $0x3c0] sm:$0xff]
        %v1404 = vld [vmem:[%s3 + $0x3c8] sm:$0xff]
        %v1405 = vld [vmem:[%s3 + $0x3d0] sm:$0xff]
        %v1406 = vld [vmem:[%s3 + $0x3d8] sm:$0xff]
        %v1407 = vld [vmem:[%s3 + $0x3e0] sm:$0xff]
        %v1408 = vld [vmem:[%s3 + $0x3e8] sm:$0xff]
        %v1409 = vld [vmem:[%s3 + $0x3f0] sm:$0xff]
        %v1410 = vld [vmem:[%s3 + $0x3f8] sm:$0xff]
        %v1411 = vld [vmem:[#allocation4] sm:$0xf]
        %v1413 = vlaneseq
        %v1414 = vshrl.u32 %v1413, 7
        %v1415 = vsub.s32 0, %v1414
        %v1416 = vrot.slane %v1411, %v1415
        %v1417 = vlaneseq
        %v1418 = vshrl.u32 %v1417, 7
        %v1419 = vsub.s32 1, %v1418
        %v1420 = vrot.slane %v1411, %v1419
        %v1421 = vlaneseq
        %v1422 = vshrl.u32 %v1421, 7
        %v1423 = vsub.s32 2, %v1422
        %v1424 = vrot.slane %v1411, %v1423
        %v1425 = vlaneseq
        %v1426 = vshrl.u32 %v1425, 7
        %v1427 = vsub.s32 3, %v1426
        %v1428 = vrot.slane %v1411, %v1427
        %v1561 = vunpack.c.l.b16 %v1283
        %v1562 = vunpack.c.h.b16 %v1283
        %v1563 = vunpack.c.l.b16 %v1284
        %v1564 = vunpack.c.h.b16 %v1284
        %v1565 = vunpack.c.l.b16 %v1285
        %v1566 = vunpack.c.h.b16 %v1285
        %v1567 = vunpack.c.l.b16 %v1286
        %v1568 = vunpack.c.h.b16 %v1286
        %v1569 = vunpack.c.l.b16 %v1287
        %v1570 = vunpack.c.h.b16 %v1287
        %v1571 = vunpack.c.l.b16 %v1288
        %v1572 = vunpack.c.h.b16 %v1288
        %v1573 = vunpack.c.l.b16 %v1289
        %v1574 = vunpack.c.h.b16 %v1289
        %v1575 = vunpack.c.l.b16 %v1290
        %v1576 = vunpack.c.h.b16 %v1290
        %v1577 = vunpack.c.l.b16 %v1291
        %v1578 = vunpack.c.h.b16 %v1291
        %v1579 = vunpack.c.l.b16 %v1292
        %v1580 = vunpack.c.h.b16 %v1292
        %v1581 = vunpack.c.l.b16 %v1293
        %v1582 = vunpack.c.h.b16 %v1293
        %v1583 = vunpack.c.l.b16 %v1294
        %v1584 = vunpack.c.h.b16 %v1294
        %v1585 = vunpack.c.l.b16 %v1295
        %v1586 = vunpack.c.h.b16 %v1295
        %v1587 = vunpack.c.l.b16 %v1296
        %v1588 = vunpack.c.h.b16 %v1296
        %v1589 = vunpack.c.l.b16 %v1297
        %v1590 = vunpack.c.h.b16 %v1297
        %v1591 = vunpack.c.l.b16 %v1298
        %v1592 = vunpack.c.h.b16 %v1298
        %v1593 = vunpack.c.l.b16 %v1299
        %v1594 = vunpack.c.h.b16 %v1299
        %v1595 = vunpack.c.l.b16 %v1300
        %v1596 = vunpack.c.h.b16 %v1300
        %v1597 = vunpack.c.l.b16 %v1301
        %v1598 = vunpack.c.h.b16 %v1301
        %v1599 = vunpack.c.l.b16 %v1302
        %v1600 = vunpack.c.h.b16 %v1302
        %v1601 = vunpack.c.l.b16 %v1303
        %v1602 = vunpack.c.h.b16 %v1303
        %v1603 = vunpack.c.l.b16 %v1304
        %v1604 = vunpack.c.h.b16 %v1304
        %v1605 = vunpack.c.l.b16 %v1305
        %v1606 = vunpack.c.h.b16 %v1305
        %v1607 = vunpack.c.l.b16 %v1306
        %v1608 = vunpack.c.h.b16 %v1306
        %v1609 = vunpack.c.l.b16 %v1307
        %v1610 = vunpack.c.h.b16 %v1307
        %v1611 = vunpack.c.l.b16 %v1308
        %v1612 = vunpack.c.h.b16 %v1308
        %v1613 = vunpack.c.l.b16 %v1309
        %v1614 = vunpack.c.h.b16 %v1309
        %v1615 = vunpack.c.l.b16 %v1310
        %v1616 = vunpack.c.h.b16 %v1310
        %v1617 = vunpack.c.l.b16 %v1311
        %v1618 = vunpack.c.h.b16 %v1311
        %v1619 = vunpack.c.l.b16 %v1312
        %v1620 = vunpack.c.h.b16 %v1312
        %v1621 = vunpack.c.l.b16 %v1313
        %v1622 = vunpack.c.h.b16 %v1313
        %v1623 = vunpack.c.l.b16 %v1314
        %v1624 = vunpack.c.h.b16 %v1314
        %v1625 = vunpack.c.l.b16 %v1315
        %v1626 = vunpack.c.h.b16 %v1315
        %v1627 = vunpack.c.l.b16 %v1316
        %v1628 = vunpack.c.h.b16 %v1316
        %v1629 = vunpack.c.l.b16 %v1317
        %v1630 = vunpack.c.h.b16 %v1317
        %v1631 = vunpack.c.l.b16 %v1318
        %v1632 = vunpack.c.h.b16 %v1318
        %v1633 = vunpack.c.l.b16 %v1319
        %v1634 = vunpack.c.h.b16 %v1319
        %v1635 = vunpack.c.l.b16 %v1320
        %v1636 = vunpack.c.h.b16 %v1320
        %v1637 = vunpack.c.l.b16 %v1321
        %v1638 = vunpack.c.h.b16 %v1321
        %v1639 = vunpack.c.l.b16 %v1322
        %v1640 = vunpack.c.h.b16 %v1322
        %v1641 = vunpack.c.l.b16 %v1323
        %v1642 = vunpack.c.h.b16 %v1323
        %v1643 = vunpack.c.l.b16 %v1324
        %v1644 = vunpack.c.h.b16 %v1324
        %v1645 = vunpack.c.l.b16 %v1325
        %v1646 = vunpack.c.h.b16 %v1325
        %v1647 = vunpack.c.l.b16 %v1326
        %v1648 = vunpack.c.h.b16 %v1326
        %v1649 = vunpack.c.l.b16 %v1327
        %v1650 = vunpack.c.h.b16 %v1327
        %v1651 = vunpack.c.l.b16 %v1328
        %v1652 = vunpack.c.h.b16 %v1328
        %v1653 = vunpack.c.l.b16 %v1329
        %v1654 = vunpack.c.h.b16 %v1329
        %v1655 = vunpack.c.l.b16 %v1330
        %v1656 = vunpack.c.h.b16 %v1330
        %v1657 = vunpack.c.l.b16 %v1331
        %v1658 = vunpack.c.h.b16 %v1331
        %v1659 = vunpack.c.l.b16 %v1332
        %v1660 = vunpack.c.h.b16 %v1332
        %v1661 = vunpack.c.l.b16 %v1333
        %v1662 = vunpack.c.h.b16 %v1333
        %v1663 = vunpack.c.l.b16 %v1334
        %v1664 = vunpack.c.h.b16 %v1334
        %v1665 = vunpack.c.l.b16 %v1335
        %v1666 = vunpack.c.h.b16 %v1335
        %v1667 = vunpack.c.l.b16 %v1336
        %v1668 = vunpack.c.h.b16 %v1336
        %v1669 = vunpack.c.l.b16 %v1337
        %v1670 = vunpack.c.h.b16 %v1337
        %v1671 = vunpack.c.l.b16 %v1338
        %v1672 = vunpack.c.h.b16 %v1338
        %v1673 = vunpack.c.l.b16 %v1339
        %v1674 = vunpack.c.h.b16 %v1339
        %v1675 = vunpack.c.l.b16 %v1340
        %v1676 = vunpack.c.h.b16 %v1340
        %v1677 = vunpack.c.l.b16 %v1341
        %v1678 = vunpack.c.h.b16 %v1341
        %v1679 = vunpack.c.l.b16 %v1342
        %v1680 = vunpack.c.h.b16 %v1342
        %v1681 = vunpack.c.l.b16 %v1343
        %v1682 = vunpack.c.h.b16 %v1343
        %v1683 = vunpack.c.l.b16 %v1344
        %v1684 = vunpack.c.h.b16 %v1344
        %v1685 = vunpack.c.l.b16 %v1345
        %v1686 = vunpack.c.h.b16 %v1345
        %v1687 = vunpack.c.l.b16 %v1346
        %v1688 = vunpack.c.h.b16 %v1346
        %v1689 = vunpack.c.l.b16 %v1347
        %v1690 = vunpack.c.h.b16 %v1347
        %v1691 = vunpack.c.l.b16 %v1348
        %v1692 = vunpack.c.h.b16 %v1348
        %v1693 = vunpack.c.l.b16 %v1349
        %v1694 = vunpack.c.h.b16 %v1349
        %v1695 = vunpack.c.l.b16 %v1350
        %v1696 = vunpack.c.h.b16 %v1350
        %v1697 = vunpack.c.l.b16 %v1351
        %v1698 = vunpack.c.h.b16 %v1351
        %v1699 = vunpack.c.l.b16 %v1352
        %v1700 = vunpack.c.h.b16 %v1352
        %v1701 = vunpack.c.l.b16 %v1353
        %v1702 = vunpack.c.h.b16 %v1353
        %v1703 = vunpack.c.l.b16 %v1354
        %v1704 = vunpack.c.h.b16 %v1354
        %v1705 = vunpack.c.l.b16 %v1355
        %v1706 = vunpack.c.h.b16 %v1355
        %v1707 = vunpack.c.l.b16 %v1356
        %v1708 = vunpack.c.h.b16 %v1356
        %v1709 = vunpack.c.l.b16 %v1357
        %v1710 = vunpack.c.h.b16 %v1357
        %v1711 = vunpack.c.l.b16 %v1358
        %v1712 = vunpack.c.h.b16 %v1358
        %v1713 = vunpack.c.l.b16 %v1359
        %v1714 = vunpack.c.h.b16 %v1359
        %v1715 = vunpack.c.l.b16 %v1360
        %v1716 = vunpack.c.h.b16 %v1360
        %v1717 = vunpack.c.l.b16 %v1361
        %v1718 = vunpack.c.h.b16 %v1361
        %v1719 = vunpack.c.l.b16 %v1362
        %v1720 = vunpack.c.h.b16 %v1362
        %v1721 = vunpack.c.l.b16 %v1363
        %v1722 = vunpack.c.h.b16 %v1363
        %v1723 = vunpack.c.l.b16 %v1364
        %v1724 = vunpack.c.h.b16 %v1364
        %v1725 = vunpack.c.l.b16 %v1365
        %v1726 = vunpack.c.h.b16 %v1365
        %v1727 = vunpack.c.l.b16 %v1366
        %v1728 = vunpack.c.h.b16 %v1366
        %v1729 = vunpack.c.l.b16 %v1367
        %v1730 = vunpack.c.h.b16 %v1367
        %v1731 = vunpack.c.l.b16 %v1368
        %v1732 = vunpack.c.h.b16 %v1368
        %v1733 = vunpack.c.l.b16 %v1369
        %v1734 = vunpack.c.h.b16 %v1369
        %v1735 = vunpack.c.l.b16 %v1370
        %v1736 = vunpack.c.h.b16 %v1370
        %v1737 = vunpack.c.l.b16 %v1371
        %v1738 = vunpack.c.h.b16 %v1371
        %v1739 = vunpack.c.l.b16 %v1372
        %v1740 = vunpack.c.h.b16 %v1372
        %v1741 = vunpack.c.l.b16 %v1373
        %v1742 = vunpack.c.h.b16 %v1373
        %v1743 = vunpack.c.l.b16 %v1374
        %v1744 = vunpack.c.h.b16 %v1374
        %v1745 = vunpack.c.l.b16 %v1375
        %v1746 = vunpack.c.h.b16 %v1375
        %v1747 = vunpack.c.l.b16 %v1376
        %v1748 = vunpack.c.h.b16 %v1376
        %v1749 = vunpack.c.l.b16 %v1377
        %v1750 = vunpack.c.h.b16 %v1377
        %v1751 = vunpack.c.l.b16 %v1378
        %v1752 = vunpack.c.h.b16 %v1378
        %v1753 = vunpack.c.l.b16 %v1379
        %v1754 = vunpack.c.h.b16 %v1379
        %v1755 = vunpack.c.l.b16 %v1380
        %v1756 = vunpack.c.h.b16 %v1380
        %v1757 = vunpack.c.l.b16 %v1381
        %v1758 = vunpack.c.h.b16 %v1381
        %v1759 = vunpack.c.l.b16 %v1382
        %v1760 = vunpack.c.h.b16 %v1382
        %v1761 = vunpack.c.l.b16 %v1383
        %v1762 = vunpack.c.h.b16 %v1383
        %v1763 = vunpack.c.l.b16 %v1384
        %v1764 = vunpack.c.h.b16 %v1384
        %v1765 = vunpack.c.l.b16 %v1385
        %v1766 = vunpack.c.h.b16 %v1385
        %v1767 = vunpack.c.l.b16 %v1386
        %v1768 = vunpack.c.h.b16 %v1386
        %v1769 = vunpack.c.l.b16 %v1387
        %v1770 = vunpack.c.h.b16 %v1387
        %v1771 = vunpack.c.l.b16 %v1388
        %v1772 = vunpack.c.h.b16 %v1388
        %v1773 = vunpack.c.l.b16 %v1389
        %v1774 = vunpack.c.h.b16 %v1389
        %v1775 = vunpack.c.l.b16 %v1390
        %v1776 = vunpack.c.h.b16 %v1390
        %v1777 = vunpack.c.l.b16 %v1391
        %v1778 = vunpack.c.h.b16 %v1391
        %v1779 = vunpack.c.l.b16 %v1392
        %v1780 = vunpack.c.h.b16 %v1392
        %v1781 = vunpack.c.l.b16 %v1393
        %v1782 = vunpack.c.h.b16 %v1393
        %v1783 = vunpack.c.l.b16 %v1394
        %v1784 = vunpack.c.h.b16 %v1394
        %v1785 = vunpack.c.l.b16 %v1395
        %v1786 = vunpack.c.h.b16 %v1395
        %v1787 = vunpack.c.l.b16 %v1396
        %v1788 = vunpack.c.h.b16 %v1396
        %v1789 = vunpack.c.l.b16 %v1397
        %v1790 = vunpack.c.h.b16 %v1397
        %v1791 = vunpack.c.l.b16 %v1398
        %v1792 = vunpack.c.h.b16 %v1398
        %v1793 = vunpack.c.l.b16 %v1399
        %v1794 = vunpack.c.h.b16 %v1399
        %v1795 = vunpack.c.l.b16 %v1400
        %v1796 = vunpack.c.h.b16 %v1400
        %v1797 = vunpack.c.l.b16 %v1401
        %v1798 = vunpack.c.h.b16 %v1401
        %v1799 = vunpack.c.l.b16 %v1402
        %v1800 = vunpack.c.h.b16 %v1402
        %v1801 = vunpack.c.l.b16 %v1403
        %v1802 = vunpack.c.h.b16 %v1403
        %v1803 = vunpack.c.l.b16 %v1404
        %v1804 = vunpack.c.h.b16 %v1404
        %v1805 = vunpack.c.l.b16 %v1405
        %v1806 = vunpack.c.h.b16 %v1405
        %v1807 = vunpack.c.l.b16 %v1406
        %v1808 = vunpack.c.h.b16 %v1406
        %v1809 = vunpack.c.l.b16 %v1407
        %v1810 = vunpack.c.h.b16 %v1407
        %v1811 = vunpack.c.l.b16 %v1408
        %v1812 = vunpack.c.h.b16 %v1408
        %v1813 = vunpack.c.l.b16 %v1409
        %v1814 = vunpack.c.h.b16 %v1409
        %v1815 = vunpack.c.l.b16 %v1410
        %v1816 = vunpack.c.h.b16 %v1410
        %v1817 = vpack.c.b16 %v1565, %v1561
        %v1818 = vpack.c.b16 %v1566, %v1562
        %v1819 = vpack.c.b16 %v1567, %v1563
        %v1820 = vpack.c.b16 %v1568, %v1564
        %v1821 = vpack.c.b16 %v1573, %v1569
        %v1822 = vpack.c.b16 %v1574, %v1570
        %v1823 = vpack.c.b16 %v1575, %v1571
        %v1824 = vpack.c.b16 %v1576, %v1572
        %v1825 = vpack.c.b16 %v1581, %v1577
        %v1826 = vpack.c.b16 %v1582, %v1578
        %v1827 = vpack.c.b16 %v1583, %v1579
        %v1828 = vpack.c.b16 %v1584, %v1580
        %v1829 = vpack.c.b16 %v1589, %v1585
        %v1830 = vpack.c.b16 %v1590, %v1586
        %v1831 = vpack.c.b16 %v1591, %v1587
        %v1832 = vpack.c.b16 %v1592, %v1588
        %v1833 = vpack.c.b16 %v1597, %v1593
        %v1834 = vpack.c.b16 %v1598, %v1594
        %v1835 = vpack.c.b16 %v1599, %v1595
        %v1836 = vpack.c.b16 %v1600, %v1596
        %v1837 = vpack.c.b16 %v1605, %v1601
        %v1838 = vpack.c.b16 %v1606, %v1602
        %v1839 = vpack.c.b16 %v1607, %v1603
        %v1840 = vpack.c.b16 %v1608, %v1604
        %v1841 = vpack.c.b16 %v1613, %v1609
        %v1842 = vpack.c.b16 %v1614, %v1610
        %v1843 = vpack.c.b16 %v1615, %v1611
        %v1844 = vpack.c.b16 %v1616, %v1612
        %v1845 = vpack.c.b16 %v1621, %v1617
        %v1846 = vpack.c.b16 %v1622, %v1618
        %v1847 = vpack.c.b16 %v1623, %v1619
        %v1848 = vpack.c.b16 %v1624, %v1620
        %v1849 = vpack.c.b16 %v1629, %v1625
        %v1850 = vpack.c.b16 %v1630, %v1626
        %v1851 = vpack.c.b16 %v1631, %v1627
        %v1852 = vpack.c.b16 %v1632, %v1628
        %v1853 = vpack.c.b16 %v1637, %v1633
        %v1854 = vpack.c.b16 %v1638, %v1634
        %v1855 = vpack.c.b16 %v1639, %v1635
        %v1856 = vpack.c.b16 %v1640, %v1636
        %v1857 = vpack.c.b16 %v1645, %v1641
        %v1858 = vpack.c.b16 %v1646, %v1642
        %v1859 = vpack.c.b16 %v1647, %v1643
        %v1860 = vpack.c.b16 %v1648, %v1644
        %v1861 = vpack.c.b16 %v1653, %v1649
        %v1862 = vpack.c.b16 %v1654, %v1650
        %v1863 = vpack.c.b16 %v1655, %v1651
        %v1864 = vpack.c.b16 %v1656, %v1652
        %v1865 = vpack.c.b16 %v1661, %v1657
        %v1866 = vpack.c.b16 %v1662, %v1658
        %v1867 = vpack.c.b16 %v1663, %v1659
        %v1868 = vpack.c.b16 %v1664, %v1660
        %v1869 = vpack.c.b16 %v1669, %v1665
        %v1870 = vpack.c.b16 %v1670, %v1666
        %v1871 = vpack.c.b16 %v1671, %v1667
        %v1872 = vpack.c.b16 %v1672, %v1668
        %v1873 = vpack.c.b16 %v1677, %v1673
        %v1874 = vpack.c.b16 %v1678, %v1674
        %v1875 = vpack.c.b16 %v1679, %v1675
        %v1876 = vpack.c.b16 %v1680, %v1676
        %v1877 = vpack.c.b16 %v1685, %v1681
        %v1878 = vpack.c.b16 %v1686, %v1682
        %v1879 = vpack.c.b16 %v1687, %v1683
        %v1880 = vpack.c.b16 %v1688, %v1684
        %v1881 = vpack.c.b16 %v1693, %v1689
        %v1882 = vpack.c.b16 %v1694, %v1690
        %v1883 = vpack.c.b16 %v1695, %v1691
        %v1884 = vpack.c.b16 %v1696, %v1692
        %v1885 = vpack.c.b16 %v1701, %v1697
        %v1886 = vpack.c.b16 %v1702, %v1698
        %v1887 = vpack.c.b16 %v1703, %v1699
        %v1888 = vpack.c.b16 %v1704, %v1700
        %v1889 = vpack.c.b16 %v1709, %v1705
        %v1890 = vpack.c.b16 %v1710, %v1706
        %v1891 = vpack.c.b16 %v1711, %v1707
        %v1892 = vpack.c.b16 %v1712, %v1708
        %v1893 = vpack.c.b16 %v1717, %v1713
        %v1894 = vpack.c.b16 %v1718, %v1714
        %v1895 = vpack.c.b16 %v1719, %v1715
        %v1896 = vpack.c.b16 %v1720, %v1716
        %v1897 = vpack.c.b16 %v1725, %v1721
        %v1898 = vpack.c.b16 %v1726, %v1722
        %v1899 = vpack.c.b16 %v1727, %v1723
        %v1900 = vpack.c.b16 %v1728, %v1724
        %v1901 = vpack.c.b16 %v1733, %v1729
        %v1902 = vpack.c.b16 %v1734, %v1730
        %v1903 = vpack.c.b16 %v1735, %v1731
        %v1904 = vpack.c.b16 %v1736, %v1732
        %v1905 = vpack.c.b16 %v1741, %v1737
        %v1906 = vpack.c.b16 %v1742, %v1738
        %v1907 = vpack.c.b16 %v1743, %v1739
        %v1908 = vpack.c.b16 %v1744, %v1740
        %v1909 = vpack.c.b16 %v1749, %v1745
        %v1910 = vpack.c.b16 %v1750, %v1746
        %v1911 = vpack.c.b16 %v1751, %v1747
        %v1912 = vpack.c.b16 %v1752, %v1748
        %v1913 = vpack.c.b16 %v1757, %v1753
        %v1914 = vpack.c.b16 %v1758, %v1754
        %v1915 = vpack.c.b16 %v1759, %v1755
        %v1916 = vpack.c.b16 %v1760, %v1756
        %v1917 = vpack.c.b16 %v1765, %v1761
        %v1918 = vpack.c.b16 %v1766, %v1762
        %v1919 = vpack.c.b16 %v1767, %v1763
        %v1920 = vpack.c.b16 %v1768, %v1764
        %v1921 = vpack.c.b16 %v1773, %v1769
        %v1922 = vpack.c.b16 %v1774, %v1770
        %v1923 = vpack.c.b16 %v1775, %v1771
        %v1924 = vpack.c.b16 %v1776, %v1772
        %v1925 = vpack.c.b16 %v1781, %v1777
        %v1926 = vpack.c.b16 %v1782, %v1778
        %v1927 = vpack.c.b16 %v1783, %v1779
        %v1928 = vpack.c.b16 %v1784, %v1780
        %v1929 = vpack.c.b16 %v1789, %v1785
        %v1930 = vpack.c.b16 %v1790, %v1786
        %v1931 = vpack.c.b16 %v1791, %v1787
        %v1932 = vpack.c.b16 %v1792, %v1788
        %v1933 = vpack.c.b16 %v1797, %v1793
        %v1934 = vpack.c.b16 %v1798, %v1794
        %v1935 = vpack.c.b16 %v1799, %v1795
        %v1936 = vpack.c.b16 %v1800, %v1796
        %v1937 = vpack.c.b16 %v1805, %v1801
        %v1938 = vpack.c.b16 %v1806, %v1802
        %v1939 = vpack.c.b16 %v1807, %v1803
        %v1940 = vpack.c.b16 %v1808, %v1804
        %v1941 = vpack.c.b16 %v1813, %v1809
        %v1942 = vpack.c.b16 %v1814, %v1810
        %v1943 = vpack.c.b16 %v1815, %v1811
        %v1944 = vpack.c.b16 %v1816, %v1812
        %2073 = vmatprep.subr.bf16.mxu0 %v1818
        %2074 = vmatpush1.bf16.msra.mxu0 %v1817
        %2075 = vmatprep.subr.bf16.mxu0 %v1822
        %2076 = vmatpush1.bf16.msra.mxu0 %v1821
        %2077 = vmatprep.subr.bf16.mxu0 %v1826
        %2078 = vmatpush1.bf16.msra.mxu0 %v1825
        %2079 = vmatprep.subr.bf16.mxu0 %v1830
        %2080 = vmatpush1.bf16.msra.mxu0 %v1829
        %2081 = vmatprep.subr.bf16.mxu0 %v1834
        %2082 = vmatpush1.bf16.msra.mxu0 %v1833
        %2083 = vmatprep.subr.bf16.mxu0 %v1838
        %2084 = vmatpush1.bf16.msra.mxu0 %v1837
        %2085 = vmatprep.subr.bf16.mxu0 %v1842
        %2086 = vmatpush1.bf16.msra.mxu0 %v1841
        %2087 = vmatprep.subr.bf16.mxu0 %v1846
        %2088 = vmatpush1.bf16.msra.mxu0 %v1845
        %2089 = vmatprep.subr.bf16.mxu0 %v1850
        %2090 = vmatpush1.bf16.msra.mxu0 %v1849
        %2091 = vmatprep.subr.bf16.mxu0 %v1854
        %2092 = vmatpush1.bf16.msra.mxu0 %v1853
        %2093 = vmatprep.subr.bf16.mxu0 %v1858
        %2094 = vmatpush1.bf16.msra.mxu0 %v1857
        %2095 = vmatprep.subr.bf16.mxu0 %v1862
        %2096 = vmatpush1.bf16.msra.mxu0 %v1861
        %2097 = vmatprep.subr.bf16.mxu0 %v1866
        %2098 = vmatpush1.bf16.msra.mxu0 %v1865
        %2099 = vmatprep.subr.bf16.mxu0 %v1870
        %2100 = vmatpush1.bf16.msra.mxu0 %v1869
        %2101 = vmatprep.subr.bf16.mxu0 %v1874
        %2102 = vmatpush1.bf16.msra.mxu0 %v1873
        %2103 = vmatprep.subr.bf16.mxu0 %v1878
        %2104 = vmatpush1.bf16.msra.mxu0 %v1877
        %2105 = vmatprep.mubr.bf16.mxu0 %v1280
        %2106 = vmatmul.mubr.bf16.gmra.mrb[0].mxu0 %v1279
        %v2107 = vpop.f32.mrb[0].mxu0
        %v2108 = vadd.f32 %v1416, %v2107
        %v2109 = vpop.f32.mrb[0].mxu0
        %v2110 = vadd.f32 %v1420, %v2109
        %v2111 = vpop.f32.mrb[0].mxu0
        %v2112 = vadd.f32 %v1416, %v2111
        %v2113 = vpop.f32.mrb[0].mxu0
        %v2114 = vadd.f32 %v1420, %v2113
        %2115 = vdwg.mxu0
        %2116 = vmatprep.subr.bf16.mxu0 %v1882
        %2117 = vmatpush1.bf16.msra.mxu0 %v1881
        %2118 = vmatprep.subr.bf16.mxu0 %v1886
        %2119 = vmatpush1.bf16.msra.mxu0 %v1885
        %2120 = vmatprep.subr.bf16.mxu0 %v1890
        %2121 = vmatpush1.bf16.msra.mxu0 %v1889
        %2122 = vmatprep.subr.bf16.mxu0 %v1894
        %2123 = vmatpush1.bf16.msra.mxu0 %v1893
        %2124 = vmatprep.subr.bf16.mxu0 %v1898
        %2125 = vmatpush1.bf16.msra.mxu0 %v1897
        %2126 = vmatprep.subr.bf16.mxu0 %v1902
        %2127 = vmatpush1.bf16.msra.mxu0 %v1901
        %2128 = vmatprep.subr.bf16.mxu0 %v1906
        %2129 = vmatpush1.bf16.msra.mxu0 %v1905
        %2130 = vmatprep.subr.bf16.mxu0 %v1910
        %2131 = vmatpush1.bf16.msra.mxu0 %v1909
        %2132 = vmatprep.subr.bf16.mxu0 %v1914
        %2133 = vmatpush1.bf16.msra.mxu0 %v1913
        %2134 = vmatprep.subr.bf16.mxu0 %v1918
        %2135 = vmatpush1.bf16.msra.mxu0 %v1917
        %2136 = vmatprep.subr.bf16.mxu0 %v1922
        %2137 = vmatpush1.bf16.msra.mxu0 %v1921
        %2138 = vmatprep.subr.bf16.mxu0 %v1926
        %2139 = vmatpush1.bf16.msra.mxu0 %v1925
        %2140 = vmatprep.subr.bf16.mxu0 %v1930
        %2141 = vmatpush1.bf16.msra.mxu0 %v1929
        %2142 = vmatprep.subr.bf16.mxu0 %v1934
        %2143 = vmatpush1.bf16.msra.mxu0 %v1933
        %2144 = vmatprep.subr.bf16.mxu0 %v1938
        %2145 = vmatpush1.bf16.msra.mxu0 %v1937
        %2146 = vmatprep.subr.bf16.mxu0 %v1942
        %2147 = vmatpush1.bf16.msra.mxu0 %v1941
        %2148 = vmatprep.mubr.bf16.mxu0 %v1282
        %2149 = vmatmul.mubr.bf16.gmra.mrb[0].mxu0 %v1281
        %v2150 = vpop.f32.mrb[0].mxu0
        %v2151 = vadd.f32 %v2108, %v2150
        %v2152 = vpop.f32.mrb[0].mxu0
        %v2153 = vadd.f32 %v2110, %v2152
        %v2154 = vpop.f32.mrb[0].mxu0
        %v2155 = vadd.f32 %v2112, %v2154
        %v2156 = vpop.f32.mrb[0].mxu0
        %v2157 = vadd.f32 %v2114, %v2156
        %2158 = vdwg.mxu0
        %2159 = vmatprep.subr.bf16.mxu0 %v1820
        %2160 = vmatpush1.bf16.msra.mxu0 %v1819
        %2161 = vmatprep.subr.bf16.mxu0 %v1824
        %2162 = vmatpush1.bf16.msra.mxu0 %v1823
        %2163 = vmatprep.subr.bf16.mxu0 %v1828
        %2164 = vmatpush1.bf16.msra.mxu0 %v1827
        %2165 = vmatprep.subr.bf16.mxu0 %v1832
        %2166 = vmatpush1.bf16.msra.mxu0 %v1831
        %2167 = vmatprep.subr.bf16.mxu0 %v1836
        %2168 = vmatpush1.bf16.msra.mxu0 %v1835
        %2169 = vmatprep.subr.bf16.mxu0 %v1840
        %2170 = vmatpush1.bf16.msra.mxu0 %v1839
        %2171 = vmatprep.subr.bf16.mxu0 %v1844
        %2172 = vmatpush1.bf16.msra.mxu0 %v1843
        %2173 = vmatprep.subr.bf16.mxu0 %v1848
        %2174 = vmatpush1.bf16.msra.mxu0 %v1847
        %2175 = vmatprep.subr.bf16.mxu0 %v1852
        %2176 = vmatpush1.bf16.msra.mxu0 %v1851
        %2177 = vmatprep.subr.bf16.mxu0 %v1856
        %2178 = vmatpush1.bf16.msra.mxu0 %v1855
        %2179 = vmatprep.subr.bf16.mxu0 %v1860
        %2180 = vmatpush1.bf16.msra.mxu0 %v1859
        %2181 = vmatprep.subr.bf16.mxu0 %v1864
        %2182 = vmatpush1.bf16.msra.mxu0 %v1863
        %2183 = vmatprep.subr.bf16.mxu0 %v1868
        %2184 = vmatpush1.bf16.msra.mxu0 %v1867
        %2185 = vmatprep.subr.bf16.mxu0 %v1872
        %2186 = vmatpush1.bf16.msra.mxu0 %v1871
        %2187 = vmatprep.subr.bf16.mxu0 %v1876
        %2188 = vmatpush1.bf16.msra.mxu0 %v1875
        %2189 = vmatprep.subr.bf16.mxu0 %v1880
        %2190 = vmatpush1.bf16.msra.mxu0 %v1879
        %2191 = vmatprep.mubr.bf16.mxu0 %v1280
        %2192 = vmatmul.mubr.bf16.gmra.mrb[0].mxu0 %v1279
        %v2193 = vpop.f32.mrb[0].mxu0
        %v2194 = vadd.f32 %v1424, %v2193
        %v2195 = vpop.f32.mrb[0].mxu0
        %v2196 = vadd.f32 %v1428, %v2195
        %v2197 = vpop.f32.mrb[0].mxu0
        %v2198 = vadd.f32 %v1424, %v2197
        %v2199 = vpop.f32.mrb[0].mxu0
        %v2200 = vadd.f32 %v1428, %v2199
        %2201 = vdwg.mxu0
        %2202 = vmatprep.subr.bf16.mxu0 %v1884
        %2203 = vmatpush1.bf16.msra.mxu0 %v1883
        %2204 = vmatprep.subr.bf16.mxu0 %v1888
        %2205 = vmatpush1.bf16.msra.mxu0 %v1887
        %2206 = vmatprep.subr.bf16.mxu0 %v1892
        %2207 = vmatpush1.bf16.msra.mxu0 %v1891
        %2208 = vmatprep.subr.bf16.mxu0 %v1896
        %2209 = vmatpush1.bf16.msra.mxu0 %v1895
        %2210 = vmatprep.subr.bf16.mxu0 %v1900
        %2211 = vmatpush1.bf16.msra.mxu0 %v1899
        %2212 = vmatprep.subr.bf16.mxu0 %v1904
        %2213 = vmatpush1.bf16.msra.mxu0 %v1903
        %2214 = vmatprep.subr.bf16.mxu0 %v1908
        %2215 = vmatpush1.bf16.msra.mxu0 %v1907
        %2216 = vmatprep.subr.bf16.mxu0 %v1912
        %2217 = vmatpush1.bf16.msra.mxu0 %v1911
        %2218 = vmatprep.subr.bf16.mxu0 %v1916
        %2219 = vmatpush1.bf16.msra.mxu0 %v1915
        %2220 = vmatprep.subr.bf16.mxu0 %v1920
        %2221 = vmatpush1.bf16.msra.mxu0 %v1919
        %2222 = vmatprep.subr.bf16.mxu0 %v1924
        %2223 = vmatpush1.bf16.msra.mxu0 %v1923
        %2224 = vmatprep.subr.bf16.mxu0 %v1928
        %2225 = vmatpush1.bf16.msra.mxu0 %v1927
        %2226 = vmatprep.subr.bf16.mxu0 %v1932
        %2227 = vmatpush1.bf16.msra.mxu0 %v1931
        %2228 = vmatprep.subr.bf16.mxu0 %v1936
        %2229 = vmatpush1.bf16.msra.mxu0 %v1935
        %2230 = vmatprep.subr.bf16.mxu0 %v1940
        %2231 = vmatpush1.bf16.msra.mxu0 %v1939
        %2232 = vmatprep.subr.bf16.mxu0 %v1944
        %2233 = vmatpush1.bf16.msra.mxu0 %v1943
        %2234 = vmatprep.mubr.bf16.mxu0 %v1282
        %2235 = vmatmul.mubr.bf16.gmra.mrb[0].mxu0 %v1281
        %v2236 = vpop.f32.mrb[0].mxu0
        %v2237 = vadd.f32 %v2194, %v2236
        %v2238 = vpop.f32.mrb[0].mxu0
        %v2239 = vadd.f32 %v2196, %v2238
        %v2240 = vpop.f32.mrb[0].mxu0
        %v2241 = vadd.f32 %v2198, %v2240
        %v2242 = vpop.f32.mrb[0].mxu0
        %v2243 = vadd.f32 %v2200, %v2242
        %2244 = vdwg.mxu0
        %v2245 = vmax.f32 %v2151, 0.0
        %v2246 = vmax.f32 %v2153, 0.0
        %v2247 = vmax.f32 %v2237, 0.0
        %v2248 = vmax.f32 %v2239, 0.0
        %v2249 = vmax.f32 %v2155, 0.0
        %v2250 = vmax.f32 %v2157, 0.0
        %v2251 = vmax.f32 %v2241, 0.0
        %v2252 = vmax.f32 %v2243, 0.0
        %v2253 = vpack.c.bf16 %v2249, %v2245
        %v2254 = vpack.c.bf16 %v2250, %v2246
        %v2255 = vpack.c.bf16 %v2251, %v2247
        %v2256 = vpack.c.bf16 %v2252, %v2248
        %v2257 = vld [vmem:[%s5] sm:$0xf]
        %v2258 = vld [vmem:[%s5 + $0x4] sm:$0xf]
        %v2259 = vld [vmem:[%s5 + $0x8] sm:$0xf]
        %v2260 = vld [vmem:[%s5 + $0xc] sm:$0xf]
        %v2261 = vld [vmem:[%s5 + $0x10] sm:$0xf]
        %v2262 = vld [vmem:[%s5 + $0x14] sm:$0xf]
        %v2263 = vld [vmem:[%s5 + $0x18] sm:$0xf]
        %v2264 = vld [vmem:[%s5 + $0x1c] sm:$0xf]
        %v2265 = vld [vmem:[%s5 + $0x20] sm:$0xf]
        %v2266 = vld [vmem:[%s5 + $0x24] sm:$0xf]
        %v2267 = vld [vmem:[%s5 + $0x28] sm:$0xf]
        %v2268 = vld [vmem:[%s5 + $0x2c] sm:$0xf]
        %v2269 = vld [vmem:[%s5 + $0x30] sm:$0xf]
        %v2270 = vld [vmem:[%s5 + $0x34] sm:$0xf]
        %v2271 = vld [vmem:[%s5 + $0x38] sm:$0xf]
        %v2272 = vld [vmem:[%s5 + $0x3c] sm:$0xf]
        %v2273 = vld [vmem:[%s5 + $0x40] sm:$0xf]
        %v2274 = vld [vmem:[%s5 + $0x44] sm:$0xf]
        %v2275 = vld [vmem:[%s5 + $0x48] sm:$0xf]
        %v2276 = vld [vmem:[%s5 + $0x4c] sm:$0xf]
        %v2277 = vld [vmem:[%s5 + $0x50] sm:$0xf]
        %v2278 = vld [vmem:[%s5 + $0x54] sm:$0xf]
        %v2279 = vld [vmem:[%s5 + $0x58] sm:$0xf]
        %v2280 = vld [vmem:[%s5 + $0x5c] sm:$0xf]
        %v2281 = vld [vmem:[%s5 + $0x60] sm:$0xf]
        %v2282 = vld [vmem:[%s5 + $0x64] sm:$0xf]
        %v2283 = vld [vmem:[%s5 + $0x68] sm:$0xf]
        %v2284 = vld [vmem:[%s5 + $0x6c] sm:$0xf]
        %v2285 = vld [vmem:[%s5 + $0x70] sm:$0xf]
        %v2286 = vld [vmem:[%s5 + $0x74] sm:$0xf]
        %v2287 = vld [vmem:[%s5 + $0x78] sm:$0xf]
        %v2288 = vld [vmem:[%s5 + $0x7c] sm:$0xf]
        %v2289 = vld [vmem:[%s5 + $0x80] sm:$0xf]
        %v2290 = vld [vmem:[%s5 + $0x84] sm:$0xf]
        %v2291 = vld [vmem:[%s5 + $0x88] sm:$0xf]
        %v2292 = vld [vmem:[%s5 + $0x8c] sm:$0xf]
        %v2293 = vld [vmem:[%s5 + $0x90] sm:$0xf]
        %v2294 = vld [vmem:[%s5 + $0x94] sm:$0xf]
        %v2295 = vld [vmem:[%s5 + $0x98] sm:$0xf]
        %v2296 = vld [vmem:[%s5 + $0x9c] sm:$0xf]
        %v2297 = vld [vmem:[%s5 + $0xa0] sm:$0xf]
        %v2298 = vld [vmem:[%s5 + $0xa4] sm:$0xf]
        %v2299 = vld [vmem:[%s5 + $0xa8] sm:$0xf]
        %v2300 = vld [vmem:[%s5 + $0xac] sm:$0xf]
        %v2301 = vld [vmem:[%s5 + $0xb0] sm:$0xf]
        %v2302 = vld [vmem:[%s5 + $0xb4] sm:$0xf]
        %v2303 = vld [vmem:[%s5 + $0xb8] sm:$0xf]
        %v2304 = vld [vmem:[%s5 + $0xbc] sm:$0xf]
        %v2305 = vld [vmem:[%s5 + $0xc0] sm:$0xf]
        %v2306 = vld [vmem:[%s5 + $0xc4] sm:$0xf]
        %v2307 = vld [vmem:[%s5 + $0xc8] sm:$0xf]
        %v2308 = vld [vmem:[%s5 + $0xcc] sm:$0xf]
        %v2309 = vld [vmem:[%s5 + $0xd0] sm:$0xf]
        %v2310 = vld [vmem:[%s5 + $0xd4] sm:$0xf]
        %v2311 = vld [vmem:[%s5 + $0xd8] sm:$0xf]
        %v2312 = vld [vmem:[%s5 + $0xdc] sm:$0xf]
        %v2313 = vld [vmem:[%s5 + $0xe0] sm:$0xf]
        %v2314 = vld [vmem:[%s5 + $0xe4] sm:$0xf]
        %v2315 = vld [vmem:[%s5 + $0xe8] sm:$0xf]
        %v2316 = vld [vmem:[%s5 + $0xec] sm:$0xf]
        %v2317 = vld [vmem:[%s5 + $0xf0] sm:$0xf]
        %v2318 = vld [vmem:[%s5 + $0xf4] sm:$0xf]
        %v2319 = vld [vmem:[%s5 + $0xf8] sm:$0xf]
        %v2320 = vld [vmem:[%s5 + $0xfc] sm:$0xf]
        %v2385 = vunpack.c.l.b16 %v2257
        %v2386 = vunpack.c.l.b16 %v2258
        %v2387 = vunpack.c.l.b16 %v2259
        %v2388 = vunpack.c.l.b16 %v2260
        %v2389 = vunpack.c.l.b16 %v2261
        %v2390 = vunpack.c.l.b16 %v2262
        %v2391 = vunpack.c.l.b16 %v2263
        %v2392 = vunpack.c.l.b16 %v2264
        %v2393 = vunpack.c.l.b16 %v2265
        %v2394 = vunpack.c.l.b16 %v2266
        %v2395 = vunpack.c.l.b16 %v2267
        %v2396 = vunpack.c.l.b16 %v2268
        %v2397 = vunpack.c.l.b16 %v2269
        %v2398 = vunpack.c.l.b16 %v2270
        %v2399 = vunpack.c.l.b16 %v2271
        %v2400 = vunpack.c.l.b16 %v2272
        %v2401 = vunpack.c.l.b16 %v2273
        %v2402 = vunpack.c.l.b16 %v2274
        %v2403 = vunpack.c.l.b16 %v2275
        %v2404 = vunpack.c.l.b16 %v2276
        %v2405 = vunpack.c.l.b16 %v2277
        %v2406 = vunpack.c.l.b16 %v2278
        %v2407 = vunpack.c.l.b16 %v2279
        %v2408 = vunpack.c.l.b16 %v2280
        %v2409 = vunpack.c.l.b16 %v2281
        %v2410 = vunpack.c.l.b16 %v2282
        %v2411 = vunpack.c.l.b16 %v2283
        %v2412 = vunpack.c.l.b16 %v2284
        %v2413 = vunpack.c.l.b16 %v2285
        %v2414 = vunpack.c.l.b16 %v2286
        %v2415 = vunpack.c.l.b16 %v2287
        %v2416 = vunpack.c.l.b16 %v2288
        %v2417 = vunpack.c.l.b16 %v2289
        %v2418 = vunpack.c.l.b16 %v2290
        %v2419 = vunpack.c.l.b16 %v2291
        %v2420 = vunpack.c.l.b16 %v2292
        %v2421 = vunpack.c.l.b16 %v2293
        %v2422 = vunpack.c.l.b16 %v2294
        %v2423 = vunpack.c.l.b16 %v2295
        %v2424 = vunpack.c.l.b16 %v2296
        %v2425 = vunpack.c.l.b16 %v2297
        %v2426 = vunpack.c.l.b16 %v2298
        %v2427 = vunpack.c.l.b16 %v2299
        %v2428 = vunpack.c.l.b16 %v2300
        %v2429 = vunpack.c.l.b16 %v2301
        %v2430 = vunpack.c.l.b16 %v2302
        %v2431 = vunpack.c.l.b16 %v2303
        %v2432 = vunpack.c.l.b16 %v2304
        %v2433 = vunpack.c.l.b16 %v2305
        %v2434 = vunpack.c.l.b16 %v2306
        %v2435 = vunpack.c.l.b16 %v2307
        %v2436 = vunpack.c.l.b16 %v2308
        %v2437 = vunpack.c.l.b16 %v2309
        %v2438 = vunpack.c.l.b16 %v2310
        %v2439 = vunpack.c.l.b16 %v2311
        %v2440 = vunpack.c.l.b16 %v2312
        %v2441 = vunpack.c.l.b16 %v2313
        %v2442 = vunpack.c.l.b16 %v2314
        %v2443 = vunpack.c.l.b16 %v2315
        %v2444 = vunpack.c.l.b16 %v2316
        %v2445 = vunpack.c.l.b16 %v2317
        %v2446 = vunpack.c.l.b16 %v2318
        %v2447 = vunpack.c.l.b16 %v2319
        %v2448 = vunpack.c.l.b16 %v2320
        %v2449 = vpack.c.b16 %v2386, %v2385
        %v2450 = vpack.c.b16 %v2388, %v2387
        %v2451 = vpack.c.b16 %v2390, %v2389
        %v2452 = vpack.c.b16 %v2392, %v2391
        %v2453 = vpack.c.b16 %v2394, %v2393
        %v2454 = vpack.c.b16 %v2396, %v2395
        %v2455 = vpack.c.b16 %v2398, %v2397
        %v2456 = vpack.c.b16 %v2400, %v2399
        %v2457 = vpack.c.b16 %v2402, %v2401
        %v2458 = vpack.c.b16 %v2404, %v2403
        %v2459 = vpack.c.b16 %v2406, %v2405
        %v2460 = vpack.c.b16 %v2408, %v2407
        %v2461 = vpack.c.b16 %v2410, %v2409
        %v2462 = vpack.c.b16 %v2412, %v2411
        %v2463 = vpack.c.b16 %v2414, %v2413
        %v2464 = vpack.c.b16 %v2416, %v2415
        %v2465 = vpack.c.b16 %v2418, %v2417
        %v2466 = vpack.c.b16 %v2420, %v2419
        %v2467 = vpack.c.b16 %v2422, %v2421
        %v2468 = vpack.c.b16 %v2424, %v2423
        %v2469 = vpack.c.b16 %v2426, %v2425
        %v2470 = vpack.c.b16 %v2428, %v2427
        %v2471 = vpack.c.b16 %v2430, %v2429
        %v2472 = vpack.c.b16 %v2432, %v2431
        %v2473 = vpack.c.b16 %v2434, %v2433
        %v2474 = vpack.c.b16 %v2436, %v2435
        %v2475 = vpack.c.b16 %v2438, %v2437
        %v2476 = vpack.c.b16 %v2440, %v2439
        %v2477 = vpack.c.b16 %v2442, %v2441
        %v2478 = vpack.c.b16 %v2444, %v2443
        %v2479 = vpack.c.b16 %v2446, %v2445
        %v2480 = vpack.c.b16 %v2448, %v2447
        %2513 = vmatprep.subr.bf16.mxu0 0
        %2514 = vmatpush1.bf16.msra.mxu0 %v2449
        %2515 = vmatprep.subr.bf16.mxu0 0
        %2516 = vmatpush1.bf16.msra.mxu0 %v2450
        %2517 = vmatprep.subr.bf16.mxu0 0
        %2518 = vmatpush1.bf16.msra.mxu0 %v2451
        %2519 = vmatprep.subr.bf16.mxu0 0
        %2520 = vmatpush1.bf16.msra.mxu0 %v2452
        %2521 = vmatprep.subr.bf16.mxu0 0
        %2522 = vmatpush1.bf16.msra.mxu0 %v2453
        %2523 = vmatprep.subr.bf16.mxu0 0
        %2524 = vmatpush1.bf16.msra.mxu0 %v2454
        %2525 = vmatprep.subr.bf16.mxu0 0
        %2526 = vmatpush1.bf16.msra.mxu0 %v2455
        %2527 = vmatprep.subr.bf16.mxu0 0
        %2528 = vmatpush1.bf16.msra.mxu0 %v2456
        %2529 = vmatprep.subr.bf16.mxu0 0
        %2530 = vmatpush1.bf16.msra.mxu0 %v2457
        %2531 = vmatprep.subr.bf16.mxu0 0
        %2532 = vmatpush1.bf16.msra.mxu0 %v2458
        %2533 = vmatprep.subr.bf16.mxu0 0
        %2534 = vmatpush1.bf16.msra.mxu0 %v2459
        %2535 = vmatprep.subr.bf16.mxu0 0
        %2536 = vmatpush1.bf16.msra.mxu0 %v2460
        %2537 = vmatprep.subr.bf16.mxu0 0
        %2538 = vmatpush1.bf16.msra.mxu0 %v2461
        %2539 = vmatprep.subr.bf16.mxu0 0
        %2540 = vmatpush1.bf16.msra.mxu0 %v2462
        %2541 = vmatprep.subr.bf16.mxu0 0
        %2542 = vmatpush1.bf16.msra.mxu0 %v2463
        %2543 = vmatprep.subr.bf16.mxu0 0
        %2544 = vmatpush1.bf16.msra.mxu0 %v2464
        %2545 = vmatprep.mubr.bf16.mxu0 %v2254
        %2546 = vmatmul.mubr.bf16.gmra.mrb[0].mxu0 %v2253
        %v2547 = vpop.f32.mrb[0].mxu0
        %v2548 = vadd.f32 0.0, %v2547
        %v2549 = vpop.f32.mrb[0].mxu0
        %v2550 = vpop.f32.mrb[0].mxu0
        %v2551 = vadd.f32 0.0, %v2550
        %v2552 = vpop.f32.mrb[0].mxu0
        %2553 = vdwg.mxu0
        %2554 = vmatprep.subr.bf16.mxu0 0
        %2555 = vmatpush1.bf16.msra.mxu0 %v2465
        %2556 = vmatprep.subr.bf16.mxu0 0
        %2557 = vmatpush1.bf16.msra.mxu0 %v2466
        %2558 = vmatprep.subr.bf16.mxu0 0
        %2559 = vmatpush1.bf16.msra.mxu0 %v2467
        %2560 = vmatprep.subr.bf16.mxu0 0
        %2561 = vmatpush1.bf16.msra.mxu0 %v2468
        %2562 = vmatprep.subr.bf16.mxu0 0
        %2563 = vmatpush1.bf16.msra.mxu0 %v2469
        %2564 = vmatprep.subr.bf16.mxu0 0
        %2565 = vmatpush1.bf16.msra.mxu0 %v2470
        %2566 = vmatprep.subr.bf16.mxu0 0
        %2567 = vmatpush1.bf16.msra.mxu0 %v2471
        %2568 = vmatprep.subr.bf16.mxu0 0
        %2569 = vmatpush1.bf16.msra.mxu0 %v2472
        %2570 = vmatprep.subr.bf16.mxu0 0
        %2571 = vmatpush1.bf16.msra.mxu0 %v2473
        %2572 = vmatprep.subr.bf16.mxu0 0
        %2573 = vmatpush1.bf16.msra.mxu0 %v2474
        %2574 = vmatprep.subr.bf16.mxu0 0
        %2575 = vmatpush1.bf16.msra.mxu0 %v2475
        %2576 = vmatprep.subr.bf16.mxu0 0
        %2577 = vmatpush1.bf16.msra.mxu0 %v2476
        %2578 = vmatprep.subr.bf16.mxu0 0
        %2579 = vmatpush1.bf16.msra.mxu0 %v2477
        %2580 = vmatprep.subr.bf16.mxu0 0
        %2581 = vmatpush1.bf16.msra.mxu0 %v2478
        %2582 = vmatprep.subr.bf16.mxu0 0
        %2583 = vmatpush1.bf16.msra.mxu0 %v2479
        %2584 = vmatprep.subr.bf16.mxu0 0
        %2585 = vmatpush1.bf16.msra.mxu0 %v2480
        %2586 = vmatprep.mubr.bf16.mxu0 %v2256
        %2587 = vmatmul.mubr.bf16.gmra.mrb[0].mxu0 %v2255
        %v2588 = vpop.f32.mrb[0].mxu0
        %v2589 = vadd.f32 %v2548, %v2588
        %v2590 = vpop.f32.mrb[0].mxu0
        %v2591 = vpop.f32.mrb[0].mxu0
        %v2592 = vadd.f32 %v2551, %v2591
        %v2593 = vpop.f32.mrb[0].mxu0
        %2594 = vdwg.mxu0
        %v2595 = vpack.c.bf16 %v2592, %v2589
        %v2597 = vunpack.c.l.b16 %v2595
        %v2598 = vunpack.c.h.b16 %v2595
        %v2599 = vpack.c.b16 %v2597, %v2597
        %v2600 = vpack.c.b16 %v2598, %v2598
        %vm2603 = vcmask 60416
        %2604 = vst.msk [vmem:[%s282] sm:$0xf] %vm2603, %v2599
        %2605 = vst.msk [vmem:[%s282 + $0x4] sm:$0xf] %vm2603, %v2600
        %s2606 = smul.u32 2, %s19
        %p2607 = scmp.lt.s32.totalorder %s2606, 3
        %s2608 = scalar_select %p2607, %s2606, 3
        %s2609 = smul.addr %s2608, 4
        %s2610 = scalar_lea.vmem %s6, %s2609
        // Predicated region
        $region53: #{column_decoder_forward.3} parent=43 // pred_check
          %p2611 = pneg %p168
        $region54: #{column_decoder_forward.3} parent=43 // pred_check_branch
          %2613 = sbr.rel (%p2611) target = $region56
        $region55: #{column_decoder_forward.3} parent=43 // pred_region
          %s2614 = smul.u32 2, %s19
        $region56: #{column_decoder_forward.3} parent=43 // pred_fallthru
          _
      $region44: #{column_decoder_forward.3} parent=5 // pred_fallthru
        _
      %p2615 = scmp.le.s32.totalorder 2, %s14
      // Predicated region
      $region57: #{column_decoder_forward.3} parent=5 // pred_check
        %p2616 = pneg %p2615
      $region58: #{column_decoder_forward.3} parent=5 // pred_check_branch
        %2618 = sbr.rel (%p2616) target = $region60
      $region59: #{column_decoder_forward.3} parent=5 // pred_region
        %s2619 = ssub.s32 %s14, 2
        // Predicated region
        $region61: #{column_decoder_forward.3} parent=59 // pred_check
          %p2620 = pneg %p174
        $region62: #{column_decoder_forward.3} parent=59 // pred_check_branch
          %2622 = sbr.rel (%p2620) target = $region64
        $region63: #{column_decoder_forward.3} parent=59 // pred_region
          %s2623 = smul.u32 2, %s20
          %p2624 = scmp.lt.s32.totalorder %s2623, 3
          %s2625 = scalar_select %p2624, %s2623, 3
          %s2626 = smul.addr %s2625, 4
          %s2627 = scalar_lea.vmem %s6, %s2626
        $region64: #{column_decoder_forward.3} parent=59 // pred_fallthru
          _
      $region60: #{column_decoder_forward.3} parent=5 // pred_fallthru
        _
    $region6: #{column_decoder_forward.3} parent=1 // loop_footer
      %s18 = sadd.s32 1, %s14
    $region7: #{column_decoder_forward.3} parent=1 // loop_footer_branch
      %13 = sbr.rel target = $region3
    $region8: #{column_decoder_forward.3} parent=1 // loop_exit
      _
    %2628 = vsyncpa [#allocation3], 1
    %s2629 = scalar_lea.sflag [#allocation3], 1
    %2630 = vsyncpa %s2629, 1
    %2631 = vsyncpa [#allocation5], 1

</llo_original>
